<compile_context>
chip_gen: v7x
topology: tpu7x:2x2x1
jax: 0.10.0
libtpu: 0.0.40
codegen_flags: <defaults>
</compile_context>

<pallas_src>
import math
import functools

import jax
import jax.numpy as jnp
from jax.experimental import pallas as pl
from jax.experimental.pallas import tpu as pltpu


def _layer_norm(x, gamma, beta, eps=1e-5):
    mu = jnp.mean(x, axis=-1, keepdims=True)
    xc = x - mu
    var = jnp.mean(xc * xc, axis=-1, keepdims=True)
    return xc * jax.lax.rsqrt(var + eps) * gamma + beta


def _softmax_last(x):
    x = x - jnp.max(x, axis=-1, keepdims=True)
    e = jnp.exp(x)
    # EUP reciprocal instead of a VALU divide.
    return e * pl.reciprocal(jnp.sum(e, axis=-1, keepdims=True), approx=True)


def decoder_layer_kernel(
    tgt_ref,        # (bb*N, C)  f32
    mem_ref,        # (bb*M, C)  f32
    wcc_ref,        # (3, C, C)  f32: [W_sa (composed local attn), W_q, W_o]
    w_kv_ref,       # (C, 2C)    f32: [W_k | W_v]
    vec_ref,        # (10, C)    f32 packed biases / layernorm params
    b_kv_ref,       # (1, 2C)    f32: [b_k | b_v]
    w1_ref,         # (C, F)     f32
    b1_ref,         # (1, F)     f32
    w2_ref,         # (F, C)     f32
    out_ref,        # (bb*N, C)  f32
    *, nhead, seq_n, seq_m,
):
    x = tgt_ref[...]
    mem = mem_ref[...]
    C = x.shape[-1]
    N, M, H = seq_n, seq_m, nhead
    Dh = C // H
    bb = x.shape[0] // N

    vecs = vec_ref[...]                       # loaded once, sliced statically
    b_sa, b_q, b_o = vecs[0:1], vecs[1:2], vecs[2:3]
    g1, be1 = vecs[3:4], vecs[4:5]
    g2, be2 = vecs[5:6], vecs[6:7]
    g3, be3 = vecs[7:8], vecs[8:9]
    b2 = vecs[9:10]

    # ---- LocalSelfAttention: identity window mask => attn == I; the composed
    #      out_proj(v_proj(.)) is a single matmul + bias. ----------------------
    sa = jnp.dot(x, wcc_ref[0], preferred_element_type=jnp.float32) + b_sa
    h1 = _layer_norm(x + sa, g1, be1)             # tgt + dropout1(tgt2); norm1

    # ---- cross multi-head attention, all heads batched -----------------------
    qc = jnp.dot(h1, wcc_ref[1], preferred_element_type=jnp.float32) + b_q          # (bb*N, C)
    kv = (jnp.dot(mem, w_kv_ref[...], preferred_element_type=jnp.float32)
          + b_kv_ref[...])                                                          # (bb*M, 2C)

    def split_heads(x2d, rows):
        # (bb*rows, H*Dh) head-major lanes -> (bb*H, rows, Dh) head-batched rows
        return x2d.reshape(bb, rows, H, Dh).transpose(0, 2, 1, 3).reshape(bb * H, rows, Dh)

    q = split_heads(qc, N)
    k = split_heads(kv[:, :C], M)
    v = split_heads(kv[:, C:], M)

    s = jnp.einsum('bnd,bmd->bnm', q, k,
                   preferred_element_type=jnp.float32) * (1.0 / math.sqrt(Dh))
    a = _softmax_last(s)                           # one fp32 softmax, all heads
    ctx = jnp.einsum('bnm,bmd->bnd', a, v,
                     preferred_element_type=jnp.float32)            # (bb*H, N, Dh)
    # merge heads back to head-major lanes: (bb*H, N, Dh) -> (bb*N, C)
    ctx = ctx.reshape(bb, H, N, Dh).transpose(0, 2, 1, 3).reshape(bb * N, C)

    # Fused output projection: head-major ctx @ W_o (W_o rows are already
    # head-major, so this equals einsum('bnhd,hdc->bnc') with W_o.reshape(H,Dh,C)).
    ca = jnp.dot(ctx, wcc_ref[2], preferred_element_type=jnp.float32) + b_o
    h2 = _layer_norm(h1 + ca, g2, be2)             # tgt + dropout2(tgt2); norm2

    # ---- feed-forward (ReLU) --------------------------------------------------
    f = jnp.dot(h2, w1_ref[...], preferred_element_type=jnp.float32) + b1_ref[...]
    f = jnp.maximum(f, 0.0)
    f = jnp.dot(f, w2_ref[...], preferred_element_type=jnp.float32) + b2
    h3 = _layer_norm(h2 + f, g3, be3)              # tgt + dropout(tgt2); norm3

    out_ref[...] = h3


def _batch_block(B, N, M, min_rows_per_core=256):
    """Batches per grid step.  Default: fold the whole batch into one step
    (amortizes per-step overhead and weight DMA).  Only on v7x, and only when
    each TensorCore would still get >= `min_rows_per_core` activation rows, do
    we split the batch across the two cores."""
    kind = ""
    try:
        kind = jax.devices()[0].device_kind.lower()
    except Exception:
        pass
    if "v7" in kind and B % 2 == 0:
        bb = B // 2
        if (bb * N >= min_rows_per_core and (bb * N) % 8 == 0 and (bb * M) % 8 == 0):
            return bb
    return B


def local_self_attention_decoder_layer(tgt, memory, params, *, nhead):
    B, N, C = tgt.shape
    _, M, _ = memory.shape
    assert C % nhead == 0
    assert N == params["window_size"], "LocalSelfAttention mask requires N == window_size"

    bb = _batch_block(B, N, M)
    steps = B // bb

    x2 = tgt.reshape(B * N, C).astype(jnp.float32)
    m2 = memory.reshape(B * M, C).astype(jnp.float32)

    wcc = params["wcc"]
    w_kv = params["w_kv"]
    vecs = params["vecs"]
    b_kv = params["b_kv"]
    w1, b1, w2 = params["w1"], params["b1"], params["w2"]

    kernel = functools.partial(decoder_layer_kernel,
                               nhead=nhead, seq_n=N, seq_m=M)

    in_specs = [
        pl.BlockSpec((bb * N, C), lambda i: (i, 0)),          # tgt rows
        pl.BlockSpec((bb * M, C), lambda i: (i, 0)),          # memory rows
        pl.BlockSpec(wcc.shape, lambda i: (0, 0, 0)),         # stacked CxC weights
        pl.BlockSpec(w_kv.shape, lambda i: (0, 0)),           # fused [Wk|Wv]
        pl.BlockSpec(vecs.shape, lambda i: (0, 0)),           # packed (1,C) vectors
        pl.BlockSpec(b_kv.shape, lambda i: (0, 0)),           # fused [bk|bv]
        pl.BlockSpec(w1.shape, lambda i: (0, 0)),
        pl.BlockSpec(b1.shape, lambda i: (0, 0)),
        pl.BlockSpec(w2.shape, lambda i: (0, 0)),
    ]

    out2 = pl.pallas_call(
        kernel,
        out_shape=jax.ShapeDtypeStruct((B * N, C), jnp.float32),
        grid_spec=pltpu.PrefetchScalarGridSpec(
            num_scalar_prefetch=0,
            grid=(steps,),
            in_specs=in_specs,
            out_specs=pl.BlockSpec((bb * N, C), lambda i: (i, 0)),
        ),
        compiler_params=pltpu.CompilerParams(
            dimension_semantics=("parallel",)),
    )(x2, m2, wcc, w_kv, vecs, b_kv, w1, b1, w2)

    return out2.reshape(B, N, C)


def init_params(key, d_model, nhead, dim_feedforward, window_size):
    C, F = d_model, dim_feedforward
    ks = jax.random.split(key, 8)

    def lin(k, fan_in, fan_out):
        kw, kb = jax.random.split(k)
        bound = 1.0 / math.sqrt(fan_in)
        W = jax.random.uniform(kw, (fan_in, fan_out), jnp.float32, -bound, bound)
        b = jax.random.uniform(kb, (1, fan_out), jnp.float32, -bound, bound)
        return W, b

    w_qkv, b_qkv = lin(ks[0], C, 3 * C)     # LocalSelfAttention qkv_proj
    w_so, b_so = lin(ks[1], C, C)           # LocalSelfAttention out_proj
    w_q, b_q = lin(ks[2], C, C)             # cross-attn projections
    w_k, b_k = lin(ks[3], C, C)
    w_v, b_v = lin(ks[4], C, C)
    w_o, b_o = lin(ks[5], C, C)
    w1, b1 = lin(ks[6], C, F)               # feed-forward
    w2, b2 = lin(ks[7], F, C)

    # Identity window mask => attn == I => local self-attn is out_proj(v_proj(x)).
    # Compose the two linears offline (exact): x @ (Wv@Wo) + (bv@Wo + bo).
    w_vl = w_qkv[:, 2 * C:]
    b_vl = b_qkv[:, 2 * C:]
    w_sa = w_vl @ w_so
    b_sa = b_vl @ w_so + b_so

    ones = jnp.ones((1, C), jnp.float32)
    zeros = jnp.zeros((1, C), jnp.float32)

    wcc = jnp.stack([w_sa, w_q, w_o]).astype(jnp.float32)       # (3,C,C)
    w_kv = jnp.concatenate([w_k, w_v], axis=1)                  # (C,2C)
    b_kv = jnp.concatenate([b_k, b_v], axis=1)                  # (1,2C)
    vecs = jnp.concatenate(
        [b_sa, b_q, b_o,
         ones, zeros,      # norm1 gamma/beta
         ones, zeros,      # norm2
         ones, zeros,      # norm3
         b2], axis=0).astype(jnp.float32)

    return {
        "wcc": wcc,
        "w_kv": w_kv,
        "b_kv": b_kv,
        "vecs": vecs,
        "w1": w1,
        "b1": b1,
        "w2": w2,
        "window_size": window_size,
    }


if __name__ == "__main__":
    B = 2
    d_model = 32
    nhead = 4
    window_size = 8          # == target sequence length N (required by the mask)
    dim_feedforward = 64
    N = window_size
    M = 8                    # memory sequence length

    key = jax.random.PRNGKey(0)
    k_tgt, k_mem, k_par = jax.random.split(key, 3)
    tgt = jax.random.normal(k_tgt, (B, N, d_model), jnp.float32)
    memory = jax.random.normal(k_mem, (B, M, d_model), jnp.float32)
    params = init_params(k_par, d_model, nhead, dim_feedforward, window_size)

    out = local_self_attention_decoder_layer(tgt, memory, params, nhead=nhead)
    out = jax.block_until_ready(out)
    assert out.shape == (B, N, d_model)
    assert bool(jnp.all(jnp.isfinite(out)))
    print("KERNEL_OK")
</pallas_src>

<mosaic_0001>
module attributes {stable_mosaic.version = 11 : i64} {
  func.func @decoder_layer_kernel(%arg0: i32, %arg1: memref<16x32xf32, #tpu.memory_space<vmem>>, %arg2: memref<16x32xf32, #tpu.memory_space<vmem>>, %arg3: memref<3x32x32xf32, #tpu.memory_space<vmem>>, %arg4: memref<32x64xf32, #tpu.memory_space<vmem>>, %arg5: memref<10x32xf32, #tpu.memory_space<vmem>>, %arg6: memref<1x64xf32, #tpu.memory_space<vmem>>, %arg7: memref<32x64xf32, #tpu.memory_space<vmem>>, %arg8: memref<1x64xf32, #tpu.memory_space<vmem>>, %arg9: memref<64x32xf32, #tpu.memory_space<vmem>>, %arg10: memref<16x32xf32, #tpu.memory_space<vmem>>) attributes {dimension_semantics = [#tpu.dimension_semantics<parallel>], iteration_bounds = array<i64: 1>, scalar_prefetch = 0 : i64, scratch_operands = 0 : i64, tpu.core_type = #tpu.core_type<tc>, window_params = [{transform_indices = @transform_0, window_bounds = array<i64: 16, 32>}, {transform_indices = @transform_1, window_bounds = array<i64: 16, 32>}, {pipeline_mode = #tpu.pipeline_mode<synchronous>, transform_indices = @transform_2, window_bounds = array<i64: 3, 32, 32>}, {pipeline_mode = #tpu.pipeline_mode<synchronous>, transform_indices = @transform_3, window_bounds = array<i64: 32, 64>}, {pipeline_mode = #tpu.pipeline_mode<synchronous>, transform_indices = @transform_4, window_bounds = array<i64: 10, 32>}, {pipeline_mode = #tpu.pipeline_mode<synchronous>, transform_indices = @transform_5, window_bounds = array<i64: 1, 64>}, {pipeline_mode = #tpu.pipeline_mode<synchronous>, transform_indices = @transform_6, window_bounds = array<i64: 32, 64>}, {pipeline_mode = #tpu.pipeline_mode<synchronous>, transform_indices = @transform_7, window_bounds = array<i64: 1, 64>}, {pipeline_mode = #tpu.pipeline_mode<synchronous>, transform_indices = @transform_8, window_bounds = array<i64: 64, 32>}, {transform_indices = @transform_9, window_bounds = array<i64: 16, 32>}]} {
    %c0 = arith.constant 0 : index
    %c0_0 = arith.constant 0 : index
    %0 = vector.load %arg1[%c0, %c0_0] : memref<16x32xf32, #tpu.memory_space<vmem>>, vector<16x32xf32>
    %c0_1 = arith.constant 0 : index
    %c0_2 = arith.constant 0 : index
    %1 = vector.load %arg2[%c0_1, %c0_2] : memref<16x32xf32, #tpu.memory_space<vmem>>, vector<16x32xf32>
    %c0_3 = arith.constant 0 : index
    %c0_4 = arith.constant 0 : index
    %2 = vector.load %arg5[%c0_3, %c0_4] : memref<10x32xf32, #tpu.memory_space<vmem>>, vector<10x32xf32>
    %3 = vector.extract_strided_slice %2 {offsets = [0, 0], sizes = [1, 32], strides = [1, 1]} : vector<10x32xf32> to vector<1x32xf32>
    %4 = vector.extract_strided_slice %2 {offsets = [1, 0], sizes = [1, 32], strides = [1, 1]} : vector<10x32xf32> to vector<1x32xf32>
    %5 = vector.extract_strided_slice %2 {offsets = [2, 0], sizes = [1, 32], strides = [1, 1]} : vector<10x32xf32> to vector<1x32xf32>
    %6 = vector.extract_strided_slice %2 {offsets = [3, 0], sizes = [1, 32], strides = [1, 1]} : vector<10x32xf32> to vector<1x32xf32>
    %7 = vector.extract_strided_slice %2 {offsets = [4, 0], sizes = [1, 32], strides = [1, 1]} : vector<10x32xf32> to vector<1x32xf32>
    %8 = vector.extract_strided_slice %2 {offsets = [5, 0], sizes = [1, 32], strides = [1, 1]} : vector<10x32xf32> to vector<1x32xf32>
    %9 = vector.extract_strided_slice %2 {offsets = [6, 0], sizes = [1, 32], strides = [1, 1]} : vector<10x32xf32> to vector<1x32xf32>
    %10 = vector.extract_strided_slice %2 {offsets = [7, 0], sizes = [1, 32], strides = [1, 1]} : vector<10x32xf32> to vector<1x32xf32>
    %11 = vector.extract_strided_slice %2 {offsets = [8, 0], sizes = [1, 32], strides = [1, 1]} : vector<10x32xf32> to vector<1x32xf32>
    %12 = vector.extract_strided_slice %2 {offsets = [9, 0], sizes = [1, 32], strides = [1, 1]} : vector<10x32xf32> to vector<1x32xf32>
    %c0_5 = arith.constant 0 : index
    %c0_6 = arith.constant 0 : index
    %c0_7 = arith.constant 0 : index
    %13 = vector.load %arg3[%c0_5, %c0_6, %c0_7] : memref<3x32x32xf32, #tpu.memory_space<vmem>>, vector<1x32x32xf32>
    %14 = vector.shape_cast %13 : vector<1x32x32xf32> to vector<32x32xf32>
    %cst = arith.constant dense<0.000000e+00> : vector<16x32xf32>
    %15 = tpu.matmul %0, %14, %cst {dimension_numbers = #tpu.dot_dimension_numbers<[1], [0], [0], [1], [0, 0, 1, 1], [], []>} : vector<16x32xf32>, vector<32x32xf32>, vector<16x32xf32> -> vector<16x32xf32>
    %16 = vector.broadcast %3 : vector<1x32xf32> to vector<16x32xf32>
    %17 = arith.addf %15, %16 : vector<16x32xf32>
    %18 = arith.addf %0, %17 : vector<16x32xf32>
    %cst_8 = arith.constant dense<0.000000e+00> : vector<16xf32>
    %19 = vector.multi_reduction <add>, %18, %cst_8 [1] : vector<16x32xf32> to vector<16xf32>
    %20 = vector.shape_cast %19 : vector<16xf32> to vector<16x1xf32>
    %cst_9 = arith.constant 3.200000e+01 : f32
    %21 = vector.broadcast %cst_9 : f32 to vector<16x1xf32>
    %22 = arith.divf %20, %21 : vector<16x1xf32>
    %23 = vector.broadcast %22 : vector<16x1xf32> to vector<16x32xf32>
    %24 = arith.subf %18, %23 : vector<16x32xf32>
    %25 = arith.mulf %24, %24 : vector<16x32xf32>
    %cst_10 = arith.constant dense<0.000000e+00> : vector<16xf32>
    %26 = vector.multi_reduction <add>, %25, %cst_10 [1] : vector<16x32xf32> to vector<16xf32>
    %27 = vector.shape_cast %26 : vector<16xf32> to vector<16x1xf32>
    %cst_11 = arith.constant 3.200000e+01 : f32
    %28 = vector.broadcast %cst_11 : f32 to vector<16x1xf32>
    %29 = arith.divf %27, %28 : vector<16x1xf32>
    %cst_12 = arith.constant 9.99999974E-6 : f32
    %30 = vector.broadcast %cst_12 : f32 to vector<16x1xf32>
    %31 = arith.addf %29, %30 : vector<16x1xf32>
    %32 = math.rsqrt %31 : vector<16x1xf32>
    %33 = vector.broadcast %32 : vector<16x1xf32> to vector<16x32xf32>
    %34 = arith.mulf %24, %33 : vector<16x32xf32>
    %35 = vector.broadcast %6 : vector<1x32xf32> to vector<16x32xf32>
    %36 = arith.mulf %34, %35 : vector<16x32xf32>
    %37 = vector.broadcast %7 : vector<1x32xf32> to vector<16x32xf32>
    %38 = arith.addf %36, %37 : vector<16x32xf32>
    %c1 = arith.constant 1 : index
    %c0_13 = arith.constant 0 : index
    %c0_14 = arith.constant 0 : index
    %39 = vector.load %arg3[%c1, %c0_13, %c0_14] : memref<3x32x32xf32, #tpu.memory_space<vmem>>, vector<1x32x32xf32>
    %40 = vector.shape_cast %39 : vector<1x32x32xf32> to vector<32x32xf32>
    %cst_15 = arith.constant dense<0.000000e+00> : vector<16x32xf32>
    %41 = tpu.matmul %38, %40, %cst_15 {dimension_numbers = #tpu.dot_dimension_numbers<[1], [0], [0], [1], [0, 0, 1, 1], [], []>} : vector<16x32xf32>, vector<32x32xf32>, vector<16x32xf32> -> vector<16x32xf32>
    %42 = vector.broadcast %4 : vector<1x32xf32> to vector<16x32xf32>
    %43 = arith.addf %41, %42 : vector<16x32xf32>
    %c0_16 = arith.constant 0 : index
    %c0_17 = arith.constant 0 : index
    %44 = vector.load %arg4[%c0_16, %c0_17] : memref<32x64xf32, #tpu.memory_space<vmem>>, vector<32x64xf32>
    %cst_18 = arith.constant dense<0.000000e+00> : vector<16x64xf32>
    %45 = tpu.matmul %1, %44, %cst_18 {dimension_numbers = #tpu.dot_dimension_numbers<[1], [0], [0], [1], [0, 0, 1, 1], [], []>} : vector<16x32xf32>, vector<32x64xf32>, vector<16x64xf32> -> vector<16x64xf32>
    %c0_19 = arith.constant 0 : index
    %c0_20 = arith.constant 0 : index
    %46 = vector.load %arg6[%c0_19, %c0_20] : memref<1x64xf32, #tpu.memory_space<vmem>>, vector<1x64xf32>
    %47 = vector.broadcast %46 : vector<1x64xf32> to vector<16x64xf32>
    %48 = arith.addf %45, %47 : vector<16x64xf32>
    %49 = vector.shape_cast %43 : vector<16x32xf32> to vector<2x8x4x8xf32>
    %50 = tpu.transpose %49, [0, 2, 1, 3] : vector<2x8x4x8xf32> -> vector<2x4x8x8xf32>
    %51 = vector.shape_cast %50 : vector<2x4x8x8xf32> to vector<8x8x8xf32>
    %52 = vector.extract_strided_slice %48 {offsets = [0, 0], sizes = [16, 32], strides = [1, 1]} : vector<16x64xf32> to vector<16x32xf32>
    %53 = vector.shape_cast %52 : vector<16x32xf32> to vector<2x8x4x8xf32>
    %54 = tpu.transpose %53, [0, 2, 1, 3] : vector<2x8x4x8xf32> -> vector<2x4x8x8xf32>
    %55 = vector.shape_cast %54 : vector<2x4x8x8xf32> to vector<8x8x8xf32>
    %56 = vector.extract_strided_slice %48 {offsets = [0, 32], sizes = [16, 32], strides = [1, 1]} : vector<16x64xf32> to vector<16x32xf32>
    %57 = vector.shape_cast %56 : vector<16x32xf32> to vector<2x8x4x8xf32>
    %58 = tpu.transpose %57, [0, 2, 1, 3] : vector<2x8x4x8xf32> -> vector<2x4x8x8xf32>
    %59 = vector.shape_cast %58 : vector<2x4x8x8xf32> to vector<8x8x8xf32>
    "tpu.trace_start"() <{level = 10 : i32, message = "bnd,bmd->bnm"}> : () -> ()
    %cst_21 = arith.constant dense<0.000000e+00> : vector<8x8x8xf32>
    %60 = tpu.matmul %51, %55, %cst_21 {dimension_numbers = #tpu.dot_dimension_numbers<[2], [2], [1], [1], [0, 0, 0, 1, 1, 1], [0], [0]>} : vector<8x8x8xf32>, vector<8x8x8xf32>, vector<8x8x8xf32> -> vector<8x8x8xf32>
    "tpu.trace_stop"() : () -> ()
    %cst_22 = arith.constant 0.353553385 : f32
    %61 = vector.broadcast %cst_22 : f32 to vector<8x8x8xf32>
    %62 = arith.mulf %60, %61 : vector<8x8x8xf32>
    %cst_23 = arith.constant dense<0xFF800000> : vector<8x8xf32>
    %63 = vector.multi_reduction <maximumf>, %62, %cst_23 [2] : vector<8x8x8xf32> to vector<8x8xf32>
    %64 = vector.shape_cast %63 : vector<8x8xf32> to vector<8x8x1xf32>
    %65 = vector.broadcast %64 : vector<8x8x1xf32> to vector<8x8x8xf32>
    %66 = arith.subf %62, %65 : vector<8x8x8xf32>
    %67 = math.exp %66 : vector<8x8x8xf32>
    %cst_24 = arith.constant dense<0.000000e+00> : vector<8x8xf32>
    %68 = vector.multi_reduction <add>, %67, %cst_24 [2] : vector<8x8x8xf32> to vector<8x8xf32>
    %69 = vector.shape_cast %68 : vector<8x8xf32> to vector<8x8x1xf32>
    %70 = tpu.reciprocal %69 {approx = true} : vector<8x8x1xf32> -> vector<8x8x1xf32>
    %71 = vector.broadcast %70 : vector<8x8x1xf32> to vector<8x8x8xf32>
    %72 = arith.mulf %67, %71 : vector<8x8x8xf32>
    "tpu.trace_start"() <{level = 10 : i32, message = "bnm,bmd->bnd"}> : () -> ()
    %cst_25 = arith.constant dense<0.000000e+00> : vector<8x8x8xf32>
    %73 = tpu.matmul %72, %59, %cst_25 {dimension_numbers = #tpu.dot_dimension_numbers<[2], [1], [1], [2], [0, 0, 0, 1, 1, 2], [0], [0]>} : vector<8x8x8xf32>, vector<8x8x8xf32>, vector<8x8x8xf32> -> vector<8x8x8xf32>
    "tpu.trace_stop"() : () -> ()
    %74 = vector.shape_cast %73 : vector<8x8x8xf32> to vector<2x4x8x8xf32>
    %75 = tpu.transpose %74, [0, 2, 1, 3] : vector<2x4x8x8xf32> -> vector<2x8x4x8xf32>
    %76 = vector.shape_cast %75 : vector<2x8x4x8xf32> to vector<16x32xf32>
    %c2 = arith.constant 2 : index
    %c0_26 = arith.constant 0 : index
    %c0_27 = arith.constant 0 : index
    %77 = vector.load %arg3[%c2, %c0_26, %c0_27] : memref<3x32x32xf32, #tpu.memory_space<vmem>>, vector<1x32x32xf32>
    %78 = vector.shape_cast %77 : vector<1x32x32xf32> to vector<32x32xf32>
    %cst_28 = arith.constant dense<0.000000e+00> : vector<16x32xf32>
    %79 = tpu.matmul %76, %78, %cst_28 {dimension_numbers = #tpu.dot_dimension_numbers<[1], [0], [0], [1], [0, 0, 1, 1], [], []>} : vector<16x32xf32>, vector<32x32xf32>, vector<16x32xf32> -> vector<16x32xf32>
    %80 = vector.broadcast %5 : vector<1x32xf32> to vector<16x32xf32>
    %81 = arith.addf %79, %80 : vector<16x32xf32>
    %82 = arith.addf %38, %81 : vector<16x32xf32>
    %cst_29 = arith.constant dense<0.000000e+00> : vector<16xf32>
    %83 = vector.multi_reduction <add>, %82, %cst_29 [1] : vector<16x32xf32> to vector<16xf32>
    %84 = vector.shape_cast %83 : vector<16xf32> to vector<16x1xf32>
    %cst_30 = arith.constant 3.200000e+01 : f32
    %85 = vector.broadcast %cst_30 : f32 to vector<16x1xf32>
    %86 = arith.divf %84, %85 : vector<16x1xf32>
    %87 = vector.broadcast %86 : vector<16x1xf32> to vector<16x32xf32>
    %88 = arith.subf %82, %87 : vector<16x32xf32>
    %89 = arith.mulf %88, %88 : vector<16x32xf32>
    %cst_31 = arith.constant dense<0.000000e+00> : vector<16xf32>
    %90 = vector.multi_reduction <add>, %89, %cst_31 [1] : vector<16x32xf32> to vector<16xf32>
    %91 = vector.shape_cast %90 : vector<16xf32> to vector<16x1xf32>
    %cst_32 = arith.constant 3.200000e+01 : f32
    %92 = vector.broadcast %cst_32 : f32 to vector<16x1xf32>
    %93 = arith.divf %91, %92 : vector<16x1xf32>
    %cst_33 = arith.constant 9.99999974E-6 : f32
    %94 = vector.broadcast %cst_33 : f32 to vector<16x1xf32>
    %95 = arith.addf %93, %94 : vector<16x1xf32>
    %96 = math.rsqrt %95 : vector<16x1xf32>
    %97 = vector.broadcast %96 : vector<16x1xf32> to vector<16x32xf32>
    %98 = arith.mulf %88, %97 : vector<16x32xf32>
    %99 = vector.broadcast %8 : vector<1x32xf32> to vector<16x32xf32>
    %100 = arith.mulf %98, %99 : vector<16x32xf32>
    %101 = vector.broadcast %9 : vector<1x32xf32> to vector<16x32xf32>
    %102 = arith.addf %100, %101 : vector<16x32xf32>
    %c0_34 = arith.constant 0 : index
    %c0_35 = arith.constant 0 : index
    %103 = vector.load %arg7[%c0_34, %c0_35] : memref<32x64xf32, #tpu.memory_space<vmem>>, vector<32x64xf32>
    %cst_36 = arith.constant dense<0.000000e+00> : vector<16x64xf32>
    %104 = tpu.matmul %102, %103, %cst_36 {dimension_numbers = #tpu.dot_dimension_numbers<[1], [0], [0], [1], [0, 0, 1, 1], [], []>} : vector<16x32xf32>, vector<32x64xf32>, vector<16x64xf32> -> vector<16x64xf32>
    %c0_37 = arith.constant 0 : index
    %c0_38 = arith.constant 0 : index
    %105 = vector.load %arg8[%c0_37, %c0_38] : memref<1x64xf32, #tpu.memory_space<vmem>>, vector<1x64xf32>
    %106 = vector.broadcast %105 : vector<1x64xf32> to vector<16x64xf32>
    %107 = arith.addf %104, %106 : vector<16x64xf32>
    %cst_39 = arith.constant 0.000000e+00 : f32
    %108 = vector.broadcast %cst_39 : f32 to vector<16x64xf32>
    %109 = arith.maximumf %107, %108 : vector<16x64xf32>
    %c0_40 = arith.constant 0 : index
    %c0_41 = arith.constant 0 : index
    %110 = vector.load %arg9[%c0_40, %c0_41] : memref<64x32xf32, #tpu.memory_space<vmem>>, vector<64x32xf32>
    %cst_42 = arith.constant dense<0.000000e+00> : vector<16x32xf32>
    %111 = tpu.matmul %109, %110, %cst_42 {dimension_numbers = #tpu.dot_dimension_numbers<[1], [0], [0], [1], [0, 0, 1, 1], [], []>} : vector<16x64xf32>, vector<64x32xf32>, vector<16x32xf32> -> vector<16x32xf32>
    %112 = vector.broadcast %12 : vector<1x32xf32> to vector<16x32xf32>
    %113 = arith.addf %111, %112 : vector<16x32xf32>
    %114 = arith.addf %102, %113 : vector<16x32xf32>
    %cst_43 = arith.constant dense<0.000000e+00> : vector<16xf32>
    %115 = vector.multi_reduction <add>, %114, %cst_43 [1] : vector<16x32xf32> to vector<16xf32>
    %116 = vector.shape_cast %115 : vector<16xf32> to vector<16x1xf32>
    %cst_44 = arith.constant 3.200000e+01 : f32
    %117 = vector.broadcast %cst_44 : f32 to vector<16x1xf32>
    %118 = arith.divf %116, %117 : vector<16x1xf32>
    %119 = vector.broadcast %118 : vector<16x1xf32> to vector<16x32xf32>
    %120 = arith.subf %114, %119 : vector<16x32xf32>
    %121 = arith.mulf %120, %120 : vector<16x32xf32>
    %cst_45 = arith.constant dense<0.000000e+00> : vector<16xf32>
    %122 = vector.multi_reduction <add>, %121, %cst_45 [1] : vector<16x32xf32> to vector<16xf32>
    %123 = vector.shape_cast %122 : vector<16xf32> to vector<16x1xf32>
    %cst_46 = arith.constant 3.200000e+01 : f32
    %124 = vector.broadcast %cst_46 : f32 to vector<16x1xf32>
    %125 = arith.divf %123, %124 : vector<16x1xf32>
    %cst_47 = arith.constant 9.99999974E-6 : f32
    %126 = vector.broadcast %cst_47 : f32 to vector<16x1xf32>
    %127 = arith.addf %125, %126 : vector<16x1xf32>
    %128 = math.rsqrt %127 : vector<16x1xf32>
    %129 = vector.broadcast %128 : vector<16x1xf32> to vector<16x32xf32>
    %130 = arith.mulf %120, %129 : vector<16x32xf32>
    %131 = vector.broadcast %10 : vector<1x32xf32> to vector<16x32xf32>
    %132 = arith.mulf %130, %131 : vector<16x32xf32>
    %133 = vector.broadcast %11 : vector<1x32xf32> to vector<16x32xf32>
    %134 = arith.addf %132, %133 : vector<16x32xf32>
    %c0_48 = arith.constant 0 : index
    %c0_49 = arith.constant 0 : index
    %135 = vector.load %arg10[%c0_48, %c0_49] : memref<16x32xf32, #tpu.memory_space<vmem>>, vector<16x32xf32>
    tpu.vector_store %arg10[%c0_48, %c0_49], %134 {strides = array<i32>} : memref<16x32xf32, #tpu.memory_space<vmem>>, vector<16x32xf32>,
    return
  }
  func.func @transform_0(%arg0: i32) -> (i32, i32) {
    %c0_i32 = arith.constant 0 : i32
    %c0_i32_0 = arith.constant 0 : i32
    return %arg0, %c0_i32 : i32, i32
  }
  func.func @transform_1(%arg0: i32) -> (i32, i32) {
    %c0_i32 = arith.constant 0 : i32
    %c0_i32_0 = arith.constant 0 : i32
    return %arg0, %c0_i32 : i32, i32
  }
  func.func @transform_2(%arg0: i32) -> (i32, i32, i32) {
    %c0_i32 = arith.constant 0 : i32
    %c0_i32_0 = arith.constant 0 : i32
    %c0_i32_1 = arith.constant 0 : i32
    %c0_i32_2 = arith.constant 0 : i32
    return %c0_i32, %c0_i32_0, %c0_i32_1 : i32, i32, i32
  }
  func.func @transform_3(%arg0: i32) -> (i32, i32) {
    %c0_i32 = arith.constant 0 : i32
    %c0_i32_0 = arith.constant 0 : i32
    %c0_i32_1 = arith.constant 0 : i32
    return %c0_i32, %c0_i32_0 : i32, i32
  }
  func.func @transform_4(%arg0: i32) -> (i32, i32) {
    %c0_i32 = arith.constant 0 : i32
    %c0_i32_0 = arith.constant 0 : i32
    %c0_i32_1 = arith.constant 0 : i32
    return %c0_i32, %c0_i32_0 : i32, i32
  }
  func.func @transform_5(%arg0: i32) -> (i32, i32) {
    %c0_i32 = arith.constant 0 : i32
    %c0_i32_0 = arith.constant 0 : i32
    %c0_i32_1 = arith.constant 0 : i32
    return %c0_i32, %c0_i32_0 : i32, i32
  }
  func.func @transform_6(%arg0: i32) -> (i32, i32) {
    %c0_i32 = arith.constant 0 : i32
    %c0_i32_0 = arith.constant 0 : i32
    %c0_i32_1 = arith.constant 0 : i32
    return %c0_i32, %c0_i32_0 : i32, i32
  }
  func.func @transform_7(%arg0: i32) -> (i32, i32) {
    %c0_i32 = arith.constant 0 : i32
    %c0_i32_0 = arith.constant 0 : i32
    %c0_i32_1 = arith.constant 0 : i32
    return %c0_i32, %c0_i32_0 : i32, i32
  }
  func.func @transform_8(%arg0: i32) -> (i32, i32) {
    %c0_i32 = arith.constant 0 : i32
    %c0_i32_0 = arith.constant 0 : i32
    %c0_i32_1 = arith.constant 0 : i32
    return %c0_i32, %c0_i32_0 : i32, i32
  }
  func.func @transform_9(%arg0: i32) -> (i32, i32) {
    %c0_i32 = arith.constant 0 : i32
    %c0_i32_0 = arith.constant 0 : i32
    return %arg0, %c0_i32 : i32, i32
  }
}

</mosaic_0001>

<llo_original>
// kernel: tpu_custom_call.1
$region0: #{tpu_custom_call.1}
  #allocation0 [shape = 'u32[]', space=smem, size = 0x4, offset = 0x4, fixed_abs, tag = 'smem constant byte address 0x4 - core index']
  #allocation1 [shape = 'u32[144,128]{1,0:T(1,128)}', space=vmem, size = 0x12000, scoped, tag = 'internal scratch']
  %s0 = inlined_call_operand.hbm [shape: f32[16,32], index: 0, kind: input, shape index: {}]
  %s1 = inlined_call_operand.hbm [shape: f32[16,32], index: 1, kind: input, shape index: {}]
  %s2 = inlined_call_operand.vmem [shape: f32[3,32,32], index: 2, kind: input, shape index: {}]
  %s3 = inlined_call_operand.hbm [shape: f32[32,64], index: 3, kind: input, shape index: {}]
  %s4 = inlined_call_operand.hbm [shape: f32[10,32], index: 4, kind: input, shape index: {}]
  %s5 = inlined_call_operand.vmem [shape: f32[1,64], index: 5, kind: input, shape index: {}]
  %s6 = inlined_call_operand.hbm [shape: f32[32,64], index: 6, kind: input, shape index: {}]
  %s7 = inlined_call_operand.vmem [shape: f32[1,64], index: 7, kind: input, shape index: {}]
  %s8 = inlined_call_operand.vmem [shape: f32[64,32], index: 8, kind: input, shape index: {}]
  %s9 = inlined_call_operand.hbm [shape: f32[16,32], index: 9, kind: output, shape index: {}]
  %s10 = sld [smem:[#allocation0]]
  $region66: #{tpu_custom_call.1} parent=0
    _
  %s12 = ssub.s32 1, %s10
  %s13 = scalar_select 0, %s12, %s10
  $region1: #{tpu_custom_call.1} parent=0
    #allocation2 [shape = 'u8[8192]{0}', space=vmem, size = 0x2000, scoped, tag = 'input window, operand 0, single buffered']
    #allocation3 [shape = 's32[1]{0}', space=sflag, size = 0x4, scoped, tag = 'scoped memory for tpu_custom_call.1']
    #allocation4 [shape = 's32[1]{0}', space=sflag, size = 0x4, scoped, tag = 'scoped memory for tpu_custom_call.1']
    #allocation5 [shape = 'u8[8192]{0}', space=vmem, size = 0x2000, scoped, tag = 'input window, operand 1, single buffered']
    #allocation6 [shape = 's32[1]{0}', space=sflag, size = 0x4, scoped, tag = 'scoped memory for tpu_custom_call.1']
    #allocation7 [shape = 'u8[16384]{0}', space=vmem, size = 0x4000, scoped, tag = 'input window, operand 3, single buffered']
    #allocation8 [shape = 'u8[8192]{0}', space=vmem, size = 0x2000, scoped, tag = 'input window, operand 4, single buffered']
    #allocation9 [shape = 's32[1]{0}', space=sflag, size = 0x4, scoped, tag = 'scoped memory for tpu_custom_call.1']
    #allocation10 [shape = 'u8[16384]{0}', space=vmem, size = 0x4000, scoped, tag = 'input window, operand 6, single buffered']
    #allocation11 [shape = 'u8[8192]{0}', space=vmem, size = 0x2000, scoped, tag = 'output window, operand 0, single buffered']
    %14 = vsyncpa [#allocation3], 0
    %15 = vsyncpa [#allocation6], 0
    %16 = vsyncpa [#allocation9], 0
    %17 = vsyncpa [#allocation4], 0
    // Predicated region
    $region2: #{tpu_custom_call.1} parent=1 // pred_check
      _
    $region3: #{tpu_custom_call.1} parent=1 // pred_check_branch
      %19 = sbr.rel (0) target = $region5
    $region4: #{tpu_custom_call.1} parent=1 // pred_region
      %s21 = ssub.s32 256, 256
      %22 = vsyncadd [#allocation3], %s21
      %s23 = sshll.u32 [#allocation2], 4
      %s24 = int_to_ptr.vmem [resolvable:$true] %s23
      %29 = dma.hbm_to_vmem [thread:$0]  %s0, 256, %s24, [#allocation3], 128, 128, 8
    $region5: #{tpu_custom_call.1} parent=1 // pred_fallthru
      _
    // Predicated region
    $region6: #{tpu_custom_call.1} parent=1 // pred_check
      _
    $region7: #{tpu_custom_call.1} parent=1 // pred_check_branch
      %31 = sbr.rel (0) target = $region9
    $region8: #{tpu_custom_call.1} parent=1 // pred_region
      %s33 = ssub.s32 256, 256
      %34 = vsyncadd [#allocation6], %s33
      %s35 = sshll.u32 [#allocation5], 4
      %s36 = int_to_ptr.vmem [resolvable:$true] %s35
      %41 = dma.hbm_to_vmem [thread:$0]  %s1, 256, %s36, [#allocation6], 128, 128, 8
    $region9: #{tpu_custom_call.1} parent=1 // pred_fallthru
      _
    // Predicated region
    $region10: #{tpu_custom_call.1} parent=1 // pred_check
      _
    $region11: #{tpu_custom_call.1} parent=1 // pred_check_branch
      %43 = sbr.rel (0) target = $region13
    $region12: #{tpu_custom_call.1} parent=1 // pred_region
      _
    $region13: #{tpu_custom_call.1} parent=1 // pred_fallthru
      _
    // Predicated region
    $region14: #{tpu_custom_call.1} parent=1 // pred_check
      _
    $region15: #{tpu_custom_call.1} parent=1 // pred_check_branch
      %45 = sbr.rel (0) target = $region17
    $region16: #{tpu_custom_call.1} parent=1 // pred_region
      %s47 = ssub.s32 512, 512
      %48 = vsyncadd [#allocation6], %s47
      %s49 = sshll.u32 [#allocation7], 4
      %s50 = int_to_ptr.vmem [resolvable:$true] %s49
      %55 = dma.hbm_to_vmem [thread:$0]  %s3, 512, %s50, [#allocation6], 128, 128, 8
    $region17: #{tpu_custom_call.1} parent=1 // pred_fallthru
      _
    // Predicated region
    $region18: #{tpu_custom_call.1} parent=1 // pred_check
      _
    $region19: #{tpu_custom_call.1} parent=1 // pred_check_branch
      %57 = sbr.rel (0) target = $region21
    $region20: #{tpu_custom_call.1} parent=1 // pred_region
      %s59 = ssub.s32 256, 256
      %60 = vsyncadd [#allocation9], %s59
      %s61 = sshll.u32 [#allocation8], 4
      %s62 = int_to_ptr.vmem [resolvable:$true] %s61
      %67 = dma.hbm_to_vmem [thread:$0]  %s4, 256, %s62, [#allocation9], 128, 128, 8
    $region21: #{tpu_custom_call.1} parent=1 // pred_fallthru
      _
    // Predicated region
    $region22: #{tpu_custom_call.1} parent=1 // pred_check
      _
    $region23: #{tpu_custom_call.1} parent=1 // pred_check_branch
      %69 = sbr.rel (0) target = $region25
    $region24: #{tpu_custom_call.1} parent=1 // pred_region
      _
    $region25: #{tpu_custom_call.1} parent=1 // pred_fallthru
      _
    // Predicated region
    $region26: #{tpu_custom_call.1} parent=1 // pred_check
      _
    $region27: #{tpu_custom_call.1} parent=1 // pred_check_branch
      %71 = sbr.rel (0) target = $region29
    $region28: #{tpu_custom_call.1} parent=1 // pred_region
      %s73 = ssub.s32 512, 512
      %74 = vsyncadd [#allocation9], %s73
      %s75 = sshll.u32 [#allocation10], 4
      %s76 = int_to_ptr.vmem [resolvable:$true] %s75
      %81 = dma.hbm_to_vmem [thread:$0]  %s6, 512, %s76, [#allocation9], 128, 128, 8
    $region29: #{tpu_custom_call.1} parent=1 // pred_fallthru
      _
    // Predicated region
    $region30: #{tpu_custom_call.1} parent=1 // pred_check
      _
    $region31: #{tpu_custom_call.1} parent=1 // pred_check_branch
      %83 = sbr.rel (0) target = $region33
    $region32: #{tpu_custom_call.1} parent=1 // pred_region
      _
    $region33: #{tpu_custom_call.1} parent=1 // pred_fallthru
      _
    // Predicated region
    $region34: #{tpu_custom_call.1} parent=1 // pred_check
      _
    $region35: #{tpu_custom_call.1} parent=1 // pred_check_branch
      %85 = sbr.rel (0) target = $region37
    $region36: #{tpu_custom_call.1} parent=1 // pred_region
      _
    $region37: #{tpu_custom_call.1} parent=1 // pred_fallthru
      _
    // Predicated region
    $region38: #{tpu_custom_call.1} parent=1 // pred_check
      _
    $region39: #{tpu_custom_call.1} parent=1 // pred_check_branch
      %87 = sbr.rel (0) target = $region41
    $region40: #{tpu_custom_call.1} parent=1 // pred_region
      %88 = dma.done [#allocation3], 256
    $region41: #{tpu_custom_call.1} parent=1 // pred_fallthru
      _
    // Predicated region
    $region42: #{tpu_custom_call.1} parent=1 // pred_check
      _
    $region43: #{tpu_custom_call.1} parent=1 // pred_check_branch
      %90 = sbr.rel (0) target = $region45
    $region44: #{tpu_custom_call.1} parent=1 // pred_region
      %91 = dma.done [#allocation6], 256
    $region45: #{tpu_custom_call.1} parent=1 // pred_fallthru
      _
    // Predicated region
    $region46: #{tpu_custom_call.1} parent=1 // pred_check
      _
    $region47: #{tpu_custom_call.1} parent=1 // pred_check_branch
      %93 = sbr.rel (0) target = $region49
    $region48: #{tpu_custom_call.1} parent=1 // pred_region
      %94 = dma.done [#allocation6], 512
    $region49: #{tpu_custom_call.1} parent=1 // pred_fallthru
      _
    // Predicated region
    $region50: #{tpu_custom_call.1} parent=1 // pred_check
      _
    $region51: #{tpu_custom_call.1} parent=1 // pred_check_branch
      %96 = sbr.rel (0) target = $region53
    $region52: #{tpu_custom_call.1} parent=1 // pred_region
      %97 = dma.done [#allocation9], 256
    $region53: #{tpu_custom_call.1} parent=1 // pred_fallthru
      _
    // Predicated region
    $region54: #{tpu_custom_call.1} parent=1 // pred_check
      _
    $region55: #{tpu_custom_call.1} parent=1 // pred_check_branch
      %99 = sbr.rel (0) target = $region57
    $region56: #{tpu_custom_call.1} parent=1 // pred_region
      %100 = dma.done [#allocation9], 512
    $region57: #{tpu_custom_call.1} parent=1 // pred_fallthru
      _
    %v101 = vld [vmem:[#allocation2] sm:$0xff]
    %v102 = vld [vmem:[#allocation2 + $0x8] sm:$0xff]
    %v103 = vld [vmem:[#allocation5] sm:$0xff]
    %v104 = vld [vmem:[#allocation5 + $0x8] sm:$0xff]
    %v105 = vld [vmem:[#allocation8] sm:$0xff]
    %v106 = vld [vmem:[#allocation8 + $0x8] sm:$0x3]
    %v107 = vld [vmem:[%s2] sm:$0xff]
    %v108 = vld [vmem:[%s2 + $0x8] sm:$0xff]
    %v109 = vld [vmem:[%s2 + $0x10] sm:$0xff]
    %v110 = vld [vmem:[%s2 + $0x18] sm:$0xff]
    %v111 = vlaneseq
    %v112 = vshrl.u32 %v111, 7
    %v113 = vsub.s32 0, %v112
    %v114 = vrot.slane %v105, %v113
    %vm115 = vcmask 261120
    %v117 = vsel %vm115, %v101, 0
    %v120 = vsel %vm115, %v102, 0
    %122 = vmatprep.subr.mxu0 0.0
    %123 = vmatpush1.msra.mxu0 %v107
    %124 = vmatprep.subr.mxu0 0.0
    %125 = vmatpush1.msra.mxu0 %v108
    %126 = vmatprep.subr.mxu0 0.0
    %127 = vmatpush1.msra.mxu0 %v109
    %128 = vmatprep.subr.mxu0 0.0
    %129 = vmatpush1.msra.mxu0 %v110
    %130 = vmatprep.subr.mxu0 0.0
    %131 = vmatpush1.msra.mxu0 0.0
    %132 = vmatprep.subr.mxu0 0.0
    %133 = vmatpush1.msra.mxu0 0.0
    %134 = vmatprep.subr.mxu0 0.0
    %135 = vmatpush1.msra.mxu0 0.0
    %136 = vmatprep.subr.mxu0 0.0
    %137 = vmatpush1.msra.mxu0 0.0
    %138 = vmatprep.subr.mxu0 0.0
    %139 = vmatpush1.msra.mxu0 0.0
    %140 = vmatprep.subr.mxu0 0.0
    %141 = vmatpush1.msra.mxu0 0.0
    %142 = vmatprep.subr.mxu0 0.0
    %143 = vmatpush1.msra.mxu0 0.0
    %144 = vmatprep.subr.mxu0 0.0
    %145 = vmatpush1.msra.mxu0 0.0
    %146 = vmatprep.subr.mxu0 0.0
    %147 = vmatpush1.msra.mxu0 0.0
    %148 = vmatprep.subr.mxu0 0.0
    %149 = vmatpush1.msra.mxu0 0.0
    %150 = vmatprep.subr.mxu0 0.0
    %151 = vmatpush1.msra.mxu0 0.0
    %152 = vmatprep.subr.mxu0 0.0
    %153 = vmatpush1.msra.mxu0 0.0
    %154 = vmatprep.subr.mxu0 0.0
    %155 = vmatpush1.msra.mxu0 0.0
    %156 = vmatprep.subr.mxu0 0.0
    %157 = vmatpush1.msra.mxu0 0.0
    %158 = vmatprep.subr.mxu0 0.0
    %159 = vmatpush1.msra.mxu0 0.0
    %160 = vmatprep.subr.mxu0 0.0
    %161 = vmatpush1.msra.mxu0 0.0
    %162 = vmatprep.subr.mxu0 0.0
    %163 = vmatpush1.msra.mxu0 0.0
    %164 = vmatprep.subr.mxu0 0.0
    %165 = vmatpush1.msra.mxu0 0.0
    %166 = vmatprep.subr.mxu0 0.0
    %167 = vmatpush1.msra.mxu0 0.0
    %168 = vmatprep.subr.mxu0 0.0
    %169 = vmatpush1.msra.mxu0 0.0
    %170 = vmatprep.subr.mxu0 0.0
    %171 = vmatpush1.msra.mxu0 0.0
    %172 = vmatprep.subr.mxu0 0.0
    %173 = vmatpush1.msra.mxu0 0.0
    %174 = vmatprep.subr.mxu0 0.0
    %175 = vmatpush1.msra.mxu0 0.0
    %176 = vmatprep.subr.mxu0 0.0
    %177 = vmatpush1.msra.mxu0 0.0
    %178 = vmatprep.subr.mxu0 0.0
    %179 = vmatpush1.msra.mxu0 0.0
    %180 = vmatprep.subr.mxu0 0.0
    %181 = vmatpush1.msra.mxu0 0.0
    %182 = vmatprep.subr.mxu0 0.0
    %183 = vmatpush1.msra.mxu0 0.0
    %184 = vmatprep.subr.mxu0 0.0
    %185 = vmatpush1.msra.mxu0 0.0
    %186 = vmatprep.mubr.f32.mxu0 0.0
    %187 = vmatmul.mubr.f32.gmra.mrb[0].mxu0 %v117
    %v188 = vpop.f32.mrb[0].mxu0
    %v189 = vadd.f32 %v114, %v188
    %v190 = vpop.f32.mrb[0].mxu0
    %191 = vmatprep.mubr.f32.mxu0 0.0
    %192 = vmatmul.mubr.f32.gmra.mrb[0].mxu0 %v120
    %v193 = vpop.f32.mrb[0].mxu0
    %v194 = vadd.f32 %v114, %v193
    %v195 = vpop.f32.mrb[0].mxu0
    %196 = vdwg.mxu0
    %v197 = vadd.f32 %v101, %v189
    %v198 = vadd.f32 %v102, %v194
    %v199 = vsel %vm115, %v197, 0.0
    %200 = vadd.xlane.f32.xlu0 %v199
    %v201 = vpop.xlane.xlu0 %200
    %v202 = vsel %vm115, %v198, 0.0
    %203 = vadd.xlane.f32.xlu0 %v202
    %v204 = vpop.xlane.xlu0 %203
    %v205 = vrcp.pop 32.0
    %v206 = vmul.f32 %v201, %v205
    %v207 = vmul.f32 %v204, %v205
    %v208 = vsub.f32 %v197, %v206
    %v209 = vsub.f32 %v198, %v207
    %v210 = vmul.f32 %v208, %v208
    %v211 = vmul.f32 %v209, %v209
    %v212 = vsel %vm115, %v210, 0.0
    %213 = vadd.xlane.f32.xlu0 %v212
    %v214 = vpop.xlane.xlu0 %213
    %v215 = vsel %vm115, %v211, 0.0
    %216 = vadd.xlane.f32.xlu0 %v215
    %v217 = vpop.xlane.xlu0 %216
    %v218 = vmul.f32 %v214, %v205
    %v219 = vmul.f32 %v217, %v205
    %v220 = vadd.f32 %v218, 1e-05
    %v221 = vadd.f32 %v219, 1e-05
    %v222 = vrsqrt.pop %v220
    %v223 = vrsqrt.pop %v221
    %v224 = vmul.f32 %v208, %v222
    %v225 = vmul.f32 %v209, %v223
    %v226 = vlaneseq
    %v227 = vshrl.u32 %v226, 7
    %v228 = vsub.s32 3, %v227
    %v229 = vrot.slane %v105, %v228
    %v230 = vmul.f32 %v224, %v229
    %v231 = vmul.f32 %v225, %v229
    %v232 = vlaneseq
    %v233 = vshrl.u32 %v232, 7
    %v234 = vsub.s32 4, %v233
    %v235 = vrot.slane %v105, %v234
    %v236 = vadd.f32 %v230, %v235
    %v237 = vadd.f32 %v231, %v235
    %s238 = scalar_lea.vmem %s2, 32
    %v239 = vld [vmem:[%s238] sm:$0xff]
    %v240 = vld [vmem:[%s238 + $0x8] sm:$0xff]
    %v241 = vld [vmem:[%s238 + $0x10] sm:$0xff]
    %v242 = vld [vmem:[%s238 + $0x18] sm:$0xff]
    %v243 = vlaneseq
    %v244 = vshrl.u32 %v243, 7
    %v245 = vsub.s32 1, %v244
    %v246 = vrot.slane %v105, %v245
    %v248 = vsel %vm115, %v236, 0
    %v251 = vsel %vm115, %v237, 0
    %253 = vmatprep.subr.mxu0 0.0
    %254 = vmatpush1.msra.mxu0 %v239
    %255 = vmatprep.subr.mxu0 0.0
    %256 = vmatpush1.msra.mxu0 %v240
    %257 = vmatprep.subr.mxu0 0.0
    %258 = vmatpush1.msra.mxu0 %v241
    %259 = vmatprep.subr.mxu0 0.0
    %260 = vmatpush1.msra.mxu0 %v242
    %261 = vmatprep.subr.mxu0 0.0
    %262 = vmatpush1.msra.mxu0 0.0
    %263 = vmatprep.subr.mxu0 0.0
    %264 = vmatpush1.msra.mxu0 0.0
    %265 = vmatprep.subr.mxu0 0.0
    %266 = vmatpush1.msra.mxu0 0.0
    %267 = vmatprep.subr.mxu0 0.0
    %268 = vmatpush1.msra.mxu0 0.0
    %269 = vmatprep.subr.mxu0 0.0
    %270 = vmatpush1.msra.mxu0 0.0
    %271 = vmatprep.subr.mxu0 0.0
    %272 = vmatpush1.msra.mxu0 0.0
    %273 = vmatprep.subr.mxu0 0.0
    %274 = vmatpush1.msra.mxu0 0.0
    %275 = vmatprep.subr.mxu0 0.0
    %276 = vmatpush1.msra.mxu0 0.0
    %277 = vmatprep.subr.mxu0 0.0
    %278 = vmatpush1.msra.mxu0 0.0
    %279 = vmatprep.subr.mxu0 0.0
    %280 = vmatpush1.msra.mxu0 0.0
    %281 = vmatprep.subr.mxu0 0.0
    %282 = vmatpush1.msra.mxu0 0.0
    %283 = vmatprep.subr.mxu0 0.0
    %284 = vmatpush1.msra.mxu0 0.0
    %285 = vmatprep.subr.mxu0 0.0
    %286 = vmatpush1.msra.mxu0 0.0
    %287 = vmatprep.subr.mxu0 0.0
    %288 = vmatpush1.msra.mxu0 0.0
    %289 = vmatprep.subr.mxu0 0.0
    %290 = vmatpush1.msra.mxu0 0.0
    %291 = vmatprep.subr.mxu0 0.0
    %292 = vmatpush1.msra.mxu0 0.0
    %293 = vmatprep.subr.mxu0 0.0
    %294 = vmatpush1.msra.mxu0 0.0
    %295 = vmatprep.subr.mxu0 0.0
    %296 = vmatpush1.msra.mxu0 0.0
    %297 = vmatprep.subr.mxu0 0.0
    %298 = vmatpush1.msra.mxu0 0.0
    %299 = vmatprep.subr.mxu0 0.0
    %300 = vmatpush1.msra.mxu0 0.0
    %301 = vmatprep.subr.mxu0 0.0
    %302 = vmatpush1.msra.mxu0 0.0
    %303 = vmatprep.subr.mxu0 0.0
    %304 = vmatpush1.msra.mxu0 0.0
    %305 = vmatprep.subr.mxu0 0.0
    %306 = vmatpush1.msra.mxu0 0.0
    %307 = vmatprep.subr.mxu0 0.0
    %308 = vmatpush1.msra.mxu0 0.0
    %309 = vmatprep.subr.mxu0 0.0
    %310 = vmatpush1.msra.mxu0 0.0
    %311 = vmatprep.subr.mxu0 0.0
    %312 = vmatpush1.msra.mxu0 0.0
    %313 = vmatprep.subr.mxu0 0.0
    %314 = vmatpush1.msra.mxu0 0.0
    %315 = vmatprep.subr.mxu0 0.0
    %316 = vmatpush1.msra.mxu0 0.0
    %317 = vmatprep.mubr.f32.mxu0 0.0
    %318 = vmatmul.mubr.f32.gmra.mrb[0].mxu0 %v248
    %v319 = vpop.f32.mrb[0].mxu0
    %v320 = vadd.f32 %v246, %v319
    %v321 = vpop.f32.mrb[0].mxu0
    %322 = vmatprep.mubr.f32.mxu0 0.0
    %323 = vmatmul.mubr.f32.gmra.mrb[0].mxu0 %v251
    %v324 = vpop.f32.mrb[0].mxu0
    %v325 = vadd.f32 %v246, %v324
    %v326 = vpop.f32.mrb[0].mxu0
    %327 = vdwg.mxu0
    %v328 = vld [vmem:[#allocation7] sm:$0xff]
    %v329 = vld [vmem:[#allocation7 + $0x8] sm:$0xff]
    %v330 = vld [vmem:[#allocation7 + $0x10] sm:$0xff]
    %v331 = vld [vmem:[#allocation7 + $0x18] sm:$0xff]
    %v332 = vld [vmem:[%s5] sm:$0x1]
    %v334 = vlaneseq
    %v335 = vshrl.u32 %v334, 7
    %v336 = vsub.s32 0, %v335
    %v337 = vrot.slane %v332, %v336
    %v340 = vsel %vm115, %v103, 0
    %v343 = vsel %vm115, %v104, 0
    %345 = vmatprep.subr.mxu0 0.0
    %346 = vmatpush1.msra.mxu0 %v328
    %347 = vmatprep.subr.mxu0 0.0
    %348 = vmatpush1.msra.mxu0 %v329
    %349 = vmatprep.subr.mxu0 0.0
    %350 = vmatpush1.msra.mxu0 %v330
    %351 = vmatprep.subr.mxu0 0.0
    %352 = vmatpush1.msra.mxu0 %v331
    %353 = vmatprep.subr.mxu0 0.0
    %354 = vmatpush1.msra.mxu0 0.0
    %355 = vmatprep.subr.mxu0 0.0
    %356 = vmatpush1.msra.mxu0 0.0
    %357 = vmatprep.subr.mxu0 0.0
    %358 = vmatpush1.msra.mxu0 0.0
    %359 = vmatprep.subr.mxu0 0.0
    %360 = vmatpush1.msra.mxu0 0.0
    %361 = vmatprep.subr.mxu0 0.0
    %362 = vmatpush1.msra.mxu0 0.0
    %363 = vmatprep.subr.mxu0 0.0
    %364 = vmatpush1.msra.mxu0 0.0
    %365 = vmatprep.subr.mxu0 0.0
    %366 = vmatpush1.msra.mxu0 0.0
    %367 = vmatprep.subr.mxu0 0.0
    %368 = vmatpush1.msra.mxu0 0.0
    %369 = vmatprep.subr.mxu0 0.0
    %370 = vmatpush1.msra.mxu0 0.0
    %371 = vmatprep.subr.mxu0 0.0
    %372 = vmatpush1.msra.mxu0 0.0
    %373 = vmatprep.subr.mxu0 0.0
    %374 = vmatpush1.msra.mxu0 0.0
    %375 = vmatprep.subr.mxu0 0.0
    %376 = vmatpush1.msra.mxu0 0.0
    %377 = vmatprep.subr.mxu0 0.0
    %378 = vmatpush1.msra.mxu0 0.0
    %379 = vmatprep.subr.mxu0 0.0
    %380 = vmatpush1.msra.mxu0 0.0
    %381 = vmatprep.subr.mxu0 0.0
    %382 = vmatpush1.msra.mxu0 0.0
    %383 = vmatprep.subr.mxu0 0.0
    %384 = vmatpush1.msra.mxu0 0.0
    %385 = vmatprep.subr.mxu0 0.0
    %386 = vmatpush1.msra.mxu0 0.0
    %387 = vmatprep.subr.mxu0 0.0
    %388 = vmatpush1.msra.mxu0 0.0
    %389 = vmatprep.subr.mxu0 0.0
    %390 = vmatpush1.msra.mxu0 0.0
    %391 = vmatprep.subr.mxu0 0.0
    %392 = vmatpush1.msra.mxu0 0.0
    %393 = vmatprep.subr.mxu0 0.0
    %394 = vmatpush1.msra.mxu0 0.0
    %395 = vmatprep.subr.mxu0 0.0
    %396 = vmatpush1.msra.mxu0 0.0
    %397 = vmatprep.subr.mxu0 0.0
    %398 = vmatpush1.msra.mxu0 0.0
    %399 = vmatprep.subr.mxu0 0.0
    %400 = vmatpush1.msra.mxu0 0.0
    %401 = vmatprep.subr.mxu0 0.0
    %402 = vmatpush1.msra.mxu0 0.0
    %403 = vmatprep.subr.mxu0 0.0
    %404 = vmatpush1.msra.mxu0 0.0
    %405 = vmatprep.subr.mxu0 0.0
    %406 = vmatpush1.msra.mxu0 0.0
    %407 = vmatprep.subr.mxu0 0.0
    %408 = vmatpush1.msra.mxu0 0.0
    %409 = vmatprep.mubr.f32.mxu0 0.0
    %410 = vmatmul.mubr.f32.gmra.mrb[0].mxu0 %v340
    %v411 = vpop.f32.mrb[0].mxu0
    %v412 = vadd.f32 %v337, %v411
    %v413 = vpop.f32.mrb[0].mxu0
    %414 = vmatprep.mubr.f32.mxu0 0.0
    %415 = vmatmul.mubr.f32.gmra.mrb[0].mxu0 %v343
    %v416 = vpop.f32.mrb[0].mxu0
    %v417 = vadd.f32 %v337, %v416
    %v418 = vpop.f32.mrb[0].mxu0
    %419 = vdwg.mxu0
    %422 = vrot.lane.b32.xlu0 %v320, 120
    %v423 = vpop.permute.xlu0 %422
    %424 = vrot.lane.b32.xlu0 %v325, 120
    %v425 = vpop.permute.xlu0 %424
    %428 = vrot.lane.b32.xlu0 %v320, 112
    %v429 = vpop.permute.xlu0 %428
    %430 = vrot.lane.b32.xlu0 %v325, 112
    %v431 = vpop.permute.xlu0 %430
    %434 = vrot.lane.b32.xlu0 %v320, 104
    %v435 = vpop.permute.xlu0 %434
    %436 = vrot.lane.b32.xlu0 %v325, 104
    %v437 = vpop.permute.xlu0 %436
    %v440 = vcombine.low %v320, %v429
    %v441 = vcombine.high %v320, %v429
    %v443 = vunpack.c.l.s4 1983009808
    %v444 = vunpack.c.0.s8 %v443
    %v445 = vlaneseq
    %v446 = vshrl.u32 %v445, 7
    %v447 = vsub.s32 %v444, %v446
    %v448 = vrot.slane %v440, %v447
    %v450 = vunpack.c.l.s4 1983009808
    %v451 = vunpack.c.0.s8 %v450
    %v452 = vlaneseq
    %v453 = vshrl.u32 %v452, 7
    %v454 = vsub.s32 %v451, %v453
    %v455 = vrot.slane %v441, %v454
    %v456 = vcombine.low %v423, %v435
    %v457 = vcombine.high %v423, %v435
    %v459 = vunpack.c.l.s4 1983009808
    %v460 = vunpack.c.0.s8 %v459
    %v461 = vlaneseq
    %v462 = vshrl.u32 %v461, 7
    %v463 = vsub.s32 %v460, %v462
    %v464 = vrot.slane %v456, %v463
    %v466 = vunpack.c.l.s4 1983009808
    %v467 = vunpack.c.0.s8 %v466
    %v468 = vlaneseq
    %v469 = vshrl.u32 %v468, 7
    %v470 = vsub.s32 %v467, %v469
    %v471 = vrot.slane %v457, %v470
    %v472 = vcombine.low %v448, %v464
    %v473 = vcombine.high %v448, %v464
    %v475 = vunpack.c.l.s4 1934713408
    %v476 = vunpack.c.0.s8 %v475
    %v477 = vlaneseq
    %v478 = vshrl.u32 %v477, 7
    %v479 = vsub.s32 %v476, %v478
    %v480 = vrot.slane %v472, %v479
    %v482 = vunpack.c.l.s4 1934713408
    %v483 = vunpack.c.0.s8 %v482
    %v484 = vlaneseq
    %v485 = vshrl.u32 %v484, 7
    %v486 = vsub.s32 %v483, %v485
    %v487 = vrot.slane %v473, %v486
    %v488 = vcombine.low %v455, %v471
    %v489 = vcombine.high %v455, %v471
    %v491 = vunpack.c.l.s4 1934713408
    %v492 = vunpack.c.0.s8 %v491
    %v493 = vlaneseq
    %v494 = vshrl.u32 %v493, 7
    %v495 = vsub.s32 %v492, %v494
    %v496 = vrot.slane %v488, %v495
    %v498 = vunpack.c.l.s4 1934713408
    %v499 = vunpack.c.0.s8 %v498
    %v500 = vlaneseq
    %v501 = vshrl.u32 %v500, 7
    %v502 = vsub.s32 %v499, %v501
    %v503 = vrot.slane %v489, %v502
    %v504 = vcombine.high %v480, 0.0
    %v505 = vcombine.high %v487, 0.0
    %v506 = vcombine.high %v496, 0.0
    %v507 = vcombine.high %v503, 0.0
    %v508 = vcombine.low %v325, %v431
    %v509 = vcombine.high %v325, %v431
    %v511 = vunpack.c.l.s4 1983009808
    %v512 = vunpack.c.0.s8 %v511
    %v513 = vlaneseq
    %v514 = vshrl.u32 %v513, 7
    %v515 = vsub.s32 %v512, %v514
    %v516 = vrot.slane %v508, %v515
    %v518 = vunpack.c.l.s4 1983009808
    %v519 = vunpack.c.0.s8 %v518
    %v520 = vlaneseq
    %v521 = vshrl.u32 %v520, 7
    %v522 = vsub.s32 %v519, %v521
    %v523 = vrot.slane %v509, %v522
    %v524 = vcombine.low %v425, %v437
    %v525 = vcombine.high %v425, %v437
    %v527 = vunpack.c.l.s4 1983009808
    %v528 = vunpack.c.0.s8 %v527
    %v529 = vlaneseq
    %v530 = vshrl.u32 %v529, 7
    %v531 = vsub.s32 %v528, %v530
    %v532 = vrot.slane %v524, %v531
    %v534 = vunpack.c.l.s4 1983009808
    %v535 = vunpack.c.0.s8 %v534
    %v536 = vlaneseq
    %v537 = vshrl.u32 %v536, 7
    %v538 = vsub.s32 %v535, %v537
    %v539 = vrot.slane %v525, %v538
    %v540 = vcombine.low %v516, %v532
    %v541 = vcombine.high %v516, %v532
    %v543 = vunpack.c.l.s4 1934713408
    %v544 = vunpack.c.0.s8 %v543
    %v545 = vlaneseq
    %v546 = vshrl.u32 %v545, 7
    %v547 = vsub.s32 %v544, %v546
    %v548 = vrot.slane %v540, %v547
    %v550 = vunpack.c.l.s4 1934713408
    %v551 = vunpack.c.0.s8 %v550
    %v552 = vlaneseq
    %v553 = vshrl.u32 %v552, 7
    %v554 = vsub.s32 %v551, %v553
    %v555 = vrot.slane %v541, %v554
    %v556 = vcombine.low %v523, %v539
    %v557 = vcombine.high %v523, %v539
    %v559 = vunpack.c.l.s4 1934713408
    %v560 = vunpack.c.0.s8 %v559
    %v561 = vlaneseq
    %v562 = vshrl.u32 %v561, 7
    %v563 = vsub.s32 %v560, %v562
    %v564 = vrot.slane %v556, %v563
    %v566 = vunpack.c.l.s4 1934713408
    %v567 = vunpack.c.0.s8 %v566
    %v568 = vlaneseq
    %v569 = vshrl.u32 %v568, 7
    %v570 = vsub.s32 %v567, %v569
    %v571 = vrot.slane %v557, %v570
    %v572 = vcombine.high %v548, 0.0
    %v573 = vcombine.high %v555, 0.0
    %v574 = vcombine.high %v564, 0.0
    %v575 = vcombine.high %v571, 0.0
    %v576 = vcombine.low %v480, %v487
    %v578 = vunpack.c.l.s4 1983009808
    %v579 = vunpack.c.0.s8 %v578
    %v580 = vlaneseq
    %v581 = vshrl.u32 %v580, 7
    %v582 = vsub.s32 %v579, %v581
    %v583 = vrot.slane %v576, %v582
    %v584 = vcombine.low %v504, %v505
    %v586 = vunpack.c.l.s4 1983009808
    %v587 = vunpack.c.0.s8 %v586
    %v588 = vlaneseq
    %v589 = vshrl.u32 %v588, 7
    %v590 = vsub.s32 %v587, %v589
    %v591 = vrot.slane %v584, %v590
    %v592 = vcombine.low %v496, %v503
    %v594 = vunpack.c.l.s4 1983009808
    %v595 = vunpack.c.0.s8 %v594
    %v596 = vlaneseq
    %v597 = vshrl.u32 %v596, 7
    %v598 = vsub.s32 %v595, %v597
    %v599 = vrot.slane %v592, %v598
    %v600 = vcombine.low %v506, %v507
    %v602 = vunpack.c.l.s4 1983009808
    %v603 = vunpack.c.0.s8 %v602
    %v604 = vlaneseq
    %v605 = vshrl.u32 %v604, 7
    %v606 = vsub.s32 %v603, %v605
    %v607 = vrot.slane %v600, %v606
    %v608 = vcombine.low %v583, %v591
    %v609 = vcombine.high %v583, %v591
    %v611 = vunpack.c.l.s4 1934713408
    %v612 = vunpack.c.0.s8 %v611
    %v613 = vlaneseq
    %v614 = vshrl.u32 %v613, 7
    %v615 = vsub.s32 %v612, %v614
    %v616 = vrot.slane %v608, %v615
    %v618 = vunpack.c.l.s4 1934713408
    %v619 = vunpack.c.0.s8 %v618
    %v620 = vlaneseq
    %v621 = vshrl.u32 %v620, 7
    %v622 = vsub.s32 %v619, %v621
    %v623 = vrot.slane %v609, %v622
    %v624 = vcombine.low %v599, %v607
    %v625 = vcombine.high %v599, %v607
    %v627 = vunpack.c.l.s4 1934713408
    %v628 = vunpack.c.0.s8 %v627
    %v629 = vlaneseq
    %v630 = vshrl.u32 %v629, 7
    %v631 = vsub.s32 %v628, %v630
    %v632 = vrot.slane %v624, %v631
    %v634 = vunpack.c.l.s4 1934713408
    %v635 = vunpack.c.0.s8 %v634
    %v636 = vlaneseq
    %v637 = vshrl.u32 %v636, 7
    %v638 = vsub.s32 %v635, %v637
    %v639 = vrot.slane %v625, %v638
    %v640 = vcombine.low %v616, %v632
    %v641 = vcombine.high %v616, %v632
    %v642 = vcombine.low %v623, %v639
    %v643 = vcombine.high %v623, %v639
    %v644 = vcombine.low %v548, %v555
    %v646 = vunpack.c.l.s4 1983009808
    %v647 = vunpack.c.0.s8 %v646
    %v648 = vlaneseq
    %v649 = vshrl.u32 %v648, 7
    %v650 = vsub.s32 %v647, %v649
    %v651 = vrot.slane %v644, %v650
    %v652 = vcombine.low %v572, %v573
    %v654 = vunpack.c.l.s4 1983009808
    %v655 = vunpack.c.0.s8 %v654
    %v656 = vlaneseq
    %v657 = vshrl.u32 %v656, 7
    %v658 = vsub.s32 %v655, %v657
    %v659 = vrot.slane %v652, %v658
    %v660 = vcombine.low %v564, %v571
    %v662 = vunpack.c.l.s4 1983009808
    %v663 = vunpack.c.0.s8 %v662
    %v664 = vlaneseq
    %v665 = vshrl.u32 %v664, 7
    %v666 = vsub.s32 %v663, %v665
    %v667 = vrot.slane %v660, %v666
    %v668 = vcombine.low %v574, %v575
    %v670 = vunpack.c.l.s4 1983009808
    %v671 = vunpack.c.0.s8 %v670
    %v672 = vlaneseq
    %v673 = vshrl.u32 %v672, 7
    %v674 = vsub.s32 %v671, %v673
    %v675 = vrot.slane %v668, %v674
    %v676 = vcombine.low %v651, %v659
    %v677 = vcombine.high %v651, %v659
    %v679 = vunpack.c.l.s4 1934713408
    %v680 = vunpack.c.0.s8 %v679
    %v681 = vlaneseq
    %v682 = vshrl.u32 %v681, 7
    %v683 = vsub.s32 %v680, %v682
    %v684 = vrot.slane %v676, %v683
    %v686 = vunpack.c.l.s4 1934713408
    %v687 = vunpack.c.0.s8 %v686
    %v688 = vlaneseq
    %v689 = vshrl.u32 %v688, 7
    %v690 = vsub.s32 %v687, %v689
    %v691 = vrot.slane %v677, %v690
    %v692 = vcombine.low %v667, %v675
    %v693 = vcombine.high %v667, %v675
    %v695 = vunpack.c.l.s4 1934713408
    %v696 = vunpack.c.0.s8 %v695
    %v697 = vlaneseq
    %v698 = vshrl.u32 %v697, 7
    %v699 = vsub.s32 %v696, %v698
    %v700 = vrot.slane %v692, %v699
    %v702 = vunpack.c.l.s4 1934713408
    %v703 = vunpack.c.0.s8 %v702
    %v704 = vlaneseq
    %v705 = vshrl.u32 %v704, 7
    %v706 = vsub.s32 %v703, %v705
    %v707 = vrot.slane %v693, %v706
    %v708 = vcombine.low %v684, %v700
    %v709 = vcombine.high %v684, %v700
    %v710 = vcombine.low %v691, %v707
    %v711 = vcombine.high %v691, %v707
    %714 = vrot.lane.b32.xlu0 %v412, 120
    %v715 = vpop.permute.xlu0 %714
    %716 = vrot.lane.b32.xlu0 %v417, 120
    %v717 = vpop.permute.xlu0 %716
    %720 = vrot.lane.b32.xlu0 %v412, 112
    %v721 = vpop.permute.xlu0 %720
    %722 = vrot.lane.b32.xlu0 %v417, 112
    %v723 = vpop.permute.xlu0 %722
    %726 = vrot.lane.b32.xlu0 %v412, 104
    %v727 = vpop.permute.xlu0 %726
    %728 = vrot.lane.b32.xlu0 %v417, 104
    %v729 = vpop.permute.xlu0 %728
    %v732 = vcombine.low %v412, %v721
    %v733 = vcombine.high %v412, %v721
    %v735 = vunpack.c.l.s4 1983009808
    %v736 = vunpack.c.0.s8 %v735
    %v737 = vlaneseq
    %v738 = vshrl.u32 %v737, 7
    %v739 = vsub.s32 %v736, %v738
    %v740 = vrot.slane %v732, %v739
    %v742 = vunpack.c.l.s4 1983009808
    %v743 = vunpack.c.0.s8 %v742
    %v744 = vlaneseq
    %v745 = vshrl.u32 %v744, 7
    %v746 = vsub.s32 %v743, %v745
    %v747 = vrot.slane %v733, %v746
    %v748 = vcombine.low %v715, %v727
    %v749 = vcombine.high %v715, %v727
    %v751 = vunpack.c.l.s4 1983009808
    %v752 = vunpack.c.0.s8 %v751
    %v753 = vlaneseq
    %v754 = vshrl.u32 %v753, 7
    %v755 = vsub.s32 %v752, %v754
    %v756 = vrot.slane %v748, %v755
    %v758 = vunpack.c.l.s4 1983009808
    %v759 = vunpack.c.0.s8 %v758
    %v760 = vlaneseq
    %v761 = vshrl.u32 %v760, 7
    %v762 = vsub.s32 %v759, %v761
    %v763 = vrot.slane %v749, %v762
    %v764 = vcombine.low %v740, %v756
    %v765 = vcombine.high %v740, %v756
    %v767 = vunpack.c.l.s4 1934713408
    %v768 = vunpack.c.0.s8 %v767
    %v769 = vlaneseq
    %v770 = vshrl.u32 %v769, 7
    %v771 = vsub.s32 %v768, %v770
    %v772 = vrot.slane %v764, %v771
    %v774 = vunpack.c.l.s4 1934713408
    %v775 = vunpack.c.0.s8 %v774
    %v776 = vlaneseq
    %v777 = vshrl.u32 %v776, 7
    %v778 = vsub.s32 %v775, %v777
    %v779 = vrot.slane %v765, %v778
    %v780 = vcombine.low %v747, %v763
    %v781 = vcombine.high %v747, %v763
    %v783 = vunpack.c.l.s4 1934713408
    %v784 = vunpack.c.0.s8 %v783
    %v785 = vlaneseq
    %v786 = vshrl.u32 %v785, 7
    %v787 = vsub.s32 %v784, %v786
    %v788 = vrot.slane %v780, %v787
    %v790 = vunpack.c.l.s4 1934713408
    %v791 = vunpack.c.0.s8 %v790
    %v792 = vlaneseq
    %v793 = vshrl.u32 %v792, 7
    %v794 = vsub.s32 %v791, %v793
    %v795 = vrot.slane %v781, %v794
    %v796 = vcombine.high %v772, 0.0
    %v797 = vcombine.high %v779, 0.0
    %v798 = vcombine.high %v788, 0.0
    %v799 = vcombine.high %v795, 0.0
    %v800 = vcombine.low %v417, %v723
    %v801 = vcombine.high %v417, %v723
    %v803 = vunpack.c.l.s4 1983009808
    %v804 = vunpack.c.0.s8 %v803
    %v805 = vlaneseq
    %v806 = vshrl.u32 %v805, 7
    %v807 = vsub.s32 %v804, %v806
    %v808 = vrot.slane %v800, %v807
    %v810 = vunpack.c.l.s4 1983009808
    %v811 = vunpack.c.0.s8 %v810
    %v812 = vlaneseq
    %v813 = vshrl.u32 %v812, 7
    %v814 = vsub.s32 %v811, %v813
    %v815 = vrot.slane %v801, %v814
    %v816 = vcombine.low %v717, %v729
    %v817 = vcombine.high %v717, %v729
    %v819 = vunpack.c.l.s4 1983009808
    %v820 = vunpack.c.0.s8 %v819
    %v821 = vlaneseq
    %v822 = vshrl.u32 %v821, 7
    %v823 = vsub.s32 %v820, %v822
    %v824 = vrot.slane %v816, %v823
    %v826 = vunpack.c.l.s4 1983009808
    %v827 = vunpack.c.0.s8 %v826
    %v828 = vlaneseq
    %v829 = vshrl.u32 %v828, 7
    %v830 = vsub.s32 %v827, %v829
    %v831 = vrot.slane %v817, %v830
    %v832 = vcombine.low %v808, %v824
    %v833 = vcombine.high %v808, %v824
    %v835 = vunpack.c.l.s4 1934713408
    %v836 = vunpack.c.0.s8 %v835
    %v837 = vlaneseq
    %v838 = vshrl.u32 %v837, 7
    %v839 = vsub.s32 %v836, %v838
    %v840 = vrot.slane %v832, %v839
    %v842 = vunpack.c.l.s4 1934713408
    %v843 = vunpack.c.0.s8 %v842
    %v844 = vlaneseq
    %v845 = vshrl.u32 %v844, 7
    %v846 = vsub.s32 %v843, %v845
    %v847 = vrot.slane %v833, %v846
    %v848 = vcombine.low %v815, %v831
    %v849 = vcombine.high %v815, %v831
    %v851 = vunpack.c.l.s4 1934713408
    %v852 = vunpack.c.0.s8 %v851
    %v853 = vlaneseq
    %v854 = vshrl.u32 %v853, 7
    %v855 = vsub.s32 %v852, %v854
    %v856 = vrot.slane %v848, %v855
    %v858 = vunpack.c.l.s4 1934713408
    %v859 = vunpack.c.0.s8 %v858
    %v860 = vlaneseq
    %v861 = vshrl.u32 %v860, 7
    %v862 = vsub.s32 %v859, %v861
    %v863 = vrot.slane %v849, %v862
    %v864 = vcombine.high %v840, 0.0
    %v865 = vcombine.high %v847, 0.0
    %v866 = vcombine.high %v856, 0.0
    %v867 = vcombine.high %v863, 0.0
    %v868 = vcombine.low %v772, %v779
    %v870 = vunpack.c.l.s4 1983009808
    %v871 = vunpack.c.0.s8 %v870
    %v872 = vlaneseq
    %v873 = vshrl.u32 %v872, 7
    %v874 = vsub.s32 %v871, %v873
    %v875 = vrot.slane %v868, %v874
    %v876 = vcombine.low %v796, %v797
    %v878 = vunpack.c.l.s4 1983009808
    %v879 = vunpack.c.0.s8 %v878
    %v880 = vlaneseq
    %v881 = vshrl.u32 %v880, 7
    %v882 = vsub.s32 %v879, %v881
    %v883 = vrot.slane %v876, %v882
    %v884 = vcombine.low %v788, %v795
    %v886 = vunpack.c.l.s4 1983009808
    %v887 = vunpack.c.0.s8 %v886
    %v888 = vlaneseq
    %v889 = vshrl.u32 %v888, 7
    %v890 = vsub.s32 %v887, %v889
    %v891 = vrot.slane %v884, %v890
    %v892 = vcombine.low %v798, %v799
    %v894 = vunpack.c.l.s4 1983009808
    %v895 = vunpack.c.0.s8 %v894
    %v896 = vlaneseq
    %v897 = vshrl.u32 %v896, 7
    %v898 = vsub.s32 %v895, %v897
    %v899 = vrot.slane %v892, %v898
    %v900 = vcombine.low %v875, %v883
    %v901 = vcombine.high %v875, %v883
    %v903 = vunpack.c.l.s4 1934713408
    %v904 = vunpack.c.0.s8 %v903
    %v905 = vlaneseq
    %v906 = vshrl.u32 %v905, 7
    %v907 = vsub.s32 %v904, %v906
    %v908 = vrot.slane %v900, %v907
    %v910 = vunpack.c.l.s4 1934713408
    %v911 = vunpack.c.0.s8 %v910
    %v912 = vlaneseq
    %v913 = vshrl.u32 %v912, 7
    %v914 = vsub.s32 %v911, %v913
    %v915 = vrot.slane %v901, %v914
    %v916 = vcombine.low %v891, %v899
    %v917 = vcombine.high %v891, %v899
    %v919 = vunpack.c.l.s4 1934713408
    %v920 = vunpack.c.0.s8 %v919
    %v921 = vlaneseq
    %v922 = vshrl.u32 %v921, 7
    %v923 = vsub.s32 %v920, %v922
    %v924 = vrot.slane %v916, %v923
    %v926 = vunpack.c.l.s4 1934713408
    %v927 = vunpack.c.0.s8 %v926
    %v928 = vlaneseq
    %v929 = vshrl.u32 %v928, 7
    %v930 = vsub.s32 %v927, %v929
    %v931 = vrot.slane %v917, %v930
    %v932 = vcombine.low %v908, %v924
    %v933 = vcombine.high %v908, %v924
    %v934 = vcombine.low %v915, %v931
    %v935 = vcombine.high %v915, %v931
    %v936 = vcombine.low %v840, %v847
    %v938 = vunpack.c.l.s4 1983009808
    %v939 = vunpack.c.0.s8 %v938
    %v940 = vlaneseq
    %v941 = vshrl.u32 %v940, 7
    %v942 = vsub.s32 %v939, %v941
    %v943 = vrot.slane %v936, %v942
    %v944 = vcombine.low %v864, %v865
    %v946 = vunpack.c.l.s4 1983009808
    %v947 = vunpack.c.0.s8 %v946
    %v948 = vlaneseq
    %v949 = vshrl.u32 %v948, 7
    %v950 = vsub.s32 %v947, %v949
    %v951 = vrot.slane %v944, %v950
    %v952 = vcombine.low %v856, %v863
    %v954 = vunpack.c.l.s4 1983009808
    %v955 = vunpack.c.0.s8 %v954
    %v956 = vlaneseq
    %v957 = vshrl.u32 %v956, 7
    %v958 = vsub.s32 %v955, %v957
    %v959 = vrot.slane %v952, %v958
    %v960 = vcombine.low %v866, %v867
    %v962 = vunpack.c.l.s4 1983009808
    %v963 = vunpack.c.0.s8 %v962
    %v964 = vlaneseq
    %v965 = vshrl.u32 %v964, 7
    %v966 = vsub.s32 %v963, %v965
    %v967 = vrot.slane %v960, %v966
    %v968 = vcombine.low %v943, %v951
    %v969 = vcombine.high %v943, %v951
    %v971 = vunpack.c.l.s4 1934713408
    %v972 = vunpack.c.0.s8 %v971
    %v973 = vlaneseq
    %v974 = vshrl.u32 %v973, 7
    %v975 = vsub.s32 %v972, %v974
    %v976 = vrot.slane %v968, %v975
    %v978 = vunpack.c.l.s4 1934713408
    %v979 = vunpack.c.0.s8 %v978
    %v980 = vlaneseq
    %v981 = vshrl.u32 %v980, 7
    %v982 = vsub.s32 %v979, %v981
    %v983 = vrot.slane %v969, %v982
    %v984 = vcombine.low %v959, %v967
    %v985 = vcombine.high %v959, %v967
    %v987 = vunpack.c.l.s4 1934713408
    %v988 = vunpack.c.0.s8 %v987
    %v989 = vlaneseq
    %v990 = vshrl.u32 %v989, 7
    %v991 = vsub.s32 %v988, %v990
    %v992 = vrot.slane %v984, %v991
    %v994 = vunpack.c.l.s4 1934713408
    %v995 = vunpack.c.0.s8 %v994
    %v996 = vlaneseq
    %v997 = vshrl.u32 %v996, 7
    %v998 = vsub.s32 %v995, %v997
    %v999 = vrot.slane %v985, %v998
    %v1000 = vcombine.low %v976, %v992
    %v1001 = vcombine.high %v976, %v992
    %v1002 = vcombine.low %v983, %v999
    %v1003 = vcombine.high %v983, %v999
    %1004 = vrot.lane.b32.xlu0 %v412, 96
    %v1005 = vpop.permute.xlu0 %1004
    %1006 = vrot.lane.b32.xlu0 %v417, 96
    %v1007 = vpop.permute.xlu0 %1006
    %1008 = vrot.lane.b32.xlu0 %v715, 96
    %v1009 = vpop.permute.xlu0 %1008
    %1010 = vrot.lane.b32.xlu0 %v717, 96
    %v1011 = vpop.permute.xlu0 %1010
    %1012 = vrot.lane.b32.xlu0 %v721, 96
    %v1013 = vpop.permute.xlu0 %1012
    %1014 = vrot.lane.b32.xlu0 %v723, 96
    %v1015 = vpop.permute.xlu0 %1014
    %1016 = vrot.lane.b32.xlu0 %v727, 96
    %v1017 = vpop.permute.xlu0 %1016
    %1018 = vrot.lane.b32.xlu0 %v729, 96
    %v1019 = vpop.permute.xlu0 %1018
    %v1028 = vcombine.low %v1005, %v1013
    %v1029 = vcombine.high %v1005, %v1013
    %v1031 = vunpack.c.l.s4 1983009808
    %v1032 = vunpack.c.0.s8 %v1031
    %v1033 = vlaneseq
    %v1034 = vshrl.u32 %v1033, 7
    %v1035 = vsub.s32 %v1032, %v1034
    %v1036 = vrot.slane %v1028, %v1035
    %v1038 = vunpack.c.l.s4 1983009808
    %v1039 = vunpack.c.0.s8 %v1038
    %v1040 = vlaneseq
    %v1041 = vshrl.u32 %v1040, 7
    %v1042 = vsub.s32 %v1039, %v1041
    %v1043 = vrot.slane %v1029, %v1042
    %v1044 = vcombine.low %v1009, %v1017
    %v1045 = vcombine.high %v1009, %v1017
    %v1047 = vunpack.c.l.s4 1983009808
    %v1048 = vunpack.c.0.s8 %v1047
    %v1049 = vlaneseq
    %v1050 = vshrl.u32 %v1049, 7
    %v1051 = vsub.s32 %v1048, %v1050
    %v1052 = vrot.slane %v1044, %v1051
    %v1054 = vunpack.c.l.s4 1983009808
    %v1055 = vunpack.c.0.s8 %v1054
    %v1056 = vlaneseq
    %v1057 = vshrl.u32 %v1056, 7
    %v1058 = vsub.s32 %v1055, %v1057
    %v1059 = vrot.slane %v1045, %v1058
    %v1060 = vcombine.low %v1036, %v1052
    %v1061 = vcombine.high %v1036, %v1052
    %v1063 = vunpack.c.l.s4 1934713408
    %v1064 = vunpack.c.0.s8 %v1063
    %v1065 = vlaneseq
    %v1066 = vshrl.u32 %v1065, 7
    %v1067 = vsub.s32 %v1064, %v1066
    %v1068 = vrot.slane %v1060, %v1067
    %v1070 = vunpack.c.l.s4 1934713408
    %v1071 = vunpack.c.0.s8 %v1070
    %v1072 = vlaneseq
    %v1073 = vshrl.u32 %v1072, 7
    %v1074 = vsub.s32 %v1071, %v1073
    %v1075 = vrot.slane %v1061, %v1074
    %v1076 = vcombine.low %v1043, %v1059
    %v1077 = vcombine.high %v1043, %v1059
    %v1079 = vunpack.c.l.s4 1934713408
    %v1080 = vunpack.c.0.s8 %v1079
    %v1081 = vlaneseq
    %v1082 = vshrl.u32 %v1081, 7
    %v1083 = vsub.s32 %v1080, %v1082
    %v1084 = vrot.slane %v1076, %v1083
    %v1086 = vunpack.c.l.s4 1934713408
    %v1087 = vunpack.c.0.s8 %v1086
    %v1088 = vlaneseq
    %v1089 = vshrl.u32 %v1088, 7
    %v1090 = vsub.s32 %v1087, %v1089
    %v1091 = vrot.slane %v1077, %v1090
    %v1092 = vcombine.high %v1068, 0.0
    %v1093 = vcombine.high %v1075, 0.0
    %v1094 = vcombine.high %v1084, 0.0
    %v1095 = vcombine.high %v1091, 0.0
    %v1096 = vcombine.low %v1007, %v1015
    %v1097 = vcombine.high %v1007, %v1015
    %v1099 = vunpack.c.l.s4 1983009808
    %v1100 = vunpack.c.0.s8 %v1099
    %v1101 = vlaneseq
    %v1102 = vshrl.u32 %v1101, 7
    %v1103 = vsub.s32 %v1100, %v1102
    %v1104 = vrot.slane %v1096, %v1103
    %v1106 = vunpack.c.l.s4 1983009808
    %v1107 = vunpack.c.0.s8 %v1106
    %v1108 = vlaneseq
    %v1109 = vshrl.u32 %v1108, 7
    %v1110 = vsub.s32 %v1107, %v1109
    %v1111 = vrot.slane %v1097, %v1110
    %v1112 = vcombine.low %v1011, %v1019
    %v1113 = vcombine.high %v1011, %v1019
    %v1115 = vunpack.c.l.s4 1983009808
    %v1116 = vunpack.c.0.s8 %v1115
    %v1117 = vlaneseq
    %v1118 = vshrl.u32 %v1117, 7
    %v1119 = vsub.s32 %v1116, %v1118
    %v1120 = vrot.slane %v1112, %v1119
    %v1122 = vunpack.c.l.s4 1983009808
    %v1123 = vunpack.c.0.s8 %v1122
    %v1124 = vlaneseq
    %v1125 = vshrl.u32 %v1124, 7
    %v1126 = vsub.s32 %v1123, %v1125
    %v1127 = vrot.slane %v1113, %v1126
    %v1128 = vcombine.low %v1104, %v1120
    %v1129 = vcombine.high %v1104, %v1120
    %v1131 = vunpack.c.l.s4 1934713408
    %v1132 = vunpack.c.0.s8 %v1131
    %v1133 = vlaneseq
    %v1134 = vshrl.u32 %v1133, 7
    %v1135 = vsub.s32 %v1132, %v1134
    %v1136 = vrot.slane %v1128, %v1135
    %v1138 = vunpack.c.l.s4 1934713408
    %v1139 = vunpack.c.0.s8 %v1138
    %v1140 = vlaneseq
    %v1141 = vshrl.u32 %v1140, 7
    %v1142 = vsub.s32 %v1139, %v1141
    %v1143 = vrot.slane %v1129, %v1142
    %v1144 = vcombine.low %v1111, %v1127
    %v1145 = vcombine.high %v1111, %v1127
    %v1147 = vunpack.c.l.s4 1934713408
    %v1148 = vunpack.c.0.s8 %v1147
    %v1149 = vlaneseq
    %v1150 = vshrl.u32 %v1149, 7
    %v1151 = vsub.s32 %v1148, %v1150
    %v1152 = vrot.slane %v1144, %v1151
    %v1154 = vunpack.c.l.s4 1934713408
    %v1155 = vunpack.c.0.s8 %v1154
    %v1156 = vlaneseq
    %v1157 = vshrl.u32 %v1156, 7
    %v1158 = vsub.s32 %v1155, %v1157
    %v1159 = vrot.slane %v1145, %v1158
    %v1160 = vcombine.high %v1136, 0.0
    %v1161 = vcombine.high %v1143, 0.0
    %v1162 = vcombine.high %v1152, 0.0
    %v1163 = vcombine.high %v1159, 0.0
    %v1164 = vcombine.low %v1068, %v1075
    %v1166 = vunpack.c.l.s4 1983009808
    %v1167 = vunpack.c.0.s8 %v1166
    %v1168 = vlaneseq
    %v1169 = vshrl.u32 %v1168, 7
    %v1170 = vsub.s32 %v1167, %v1169
    %v1171 = vrot.slane %v1164, %v1170
    %v1172 = vcombine.low %v1092, %v1093
    %v1174 = vunpack.c.l.s4 1983009808
    %v1175 = vunpack.c.0.s8 %v1174
    %v1176 = vlaneseq
    %v1177 = vshrl.u32 %v1176, 7
    %v1178 = vsub.s32 %v1175, %v1177
    %v1179 = vrot.slane %v1172, %v1178
    %v1180 = vcombine.low %v1084, %v1091
    %v1182 = vunpack.c.l.s4 1983009808
    %v1183 = vunpack.c.0.s8 %v1182
    %v1184 = vlaneseq
    %v1185 = vshrl.u32 %v1184, 7
    %v1186 = vsub.s32 %v1183, %v1185
    %v1187 = vrot.slane %v1180, %v1186
    %v1188 = vcombine.low %v1094, %v1095
    %v1190 = vunpack.c.l.s4 1983009808
    %v1191 = vunpack.c.0.s8 %v1190
    %v1192 = vlaneseq
    %v1193 = vshrl.u32 %v1192, 7
    %v1194 = vsub.s32 %v1191, %v1193
    %v1195 = vrot.slane %v1188, %v1194
    %v1196 = vcombine.low %v1171, %v1179
    %v1197 = vcombine.high %v1171, %v1179
    %v1199 = vunpack.c.l.s4 1934713408
    %v1200 = vunpack.c.0.s8 %v1199
    %v1201 = vlaneseq
    %v1202 = vshrl.u32 %v1201, 7
    %v1203 = vsub.s32 %v1200, %v1202
    %v1204 = vrot.slane %v1196, %v1203
    %v1206 = vunpack.c.l.s4 1934713408
    %v1207 = vunpack.c.0.s8 %v1206
    %v1208 = vlaneseq
    %v1209 = vshrl.u32 %v1208, 7
    %v1210 = vsub.s32 %v1207, %v1209
    %v1211 = vrot.slane %v1197, %v1210
    %v1212 = vcombine.low %v1187, %v1195
    %v1213 = vcombine.high %v1187, %v1195
    %v1215 = vunpack.c.l.s4 1934713408
    %v1216 = vunpack.c.0.s8 %v1215
    %v1217 = vlaneseq
    %v1218 = vshrl.u32 %v1217, 7
    %v1219 = vsub.s32 %v1216, %v1218
    %v1220 = vrot.slane %v1212, %v1219
    %v1222 = vunpack.c.l.s4 1934713408
    %v1223 = vunpack.c.0.s8 %v1222
    %v1224 = vlaneseq
    %v1225 = vshrl.u32 %v1224, 7
    %v1226 = vsub.s32 %v1223, %v1225
    %v1227 = vrot.slane %v1213, %v1226
    %v1228 = vcombine.low %v1204, %v1220
    %v1229 = vcombine.high %v1204, %v1220
    %v1230 = vcombine.low %v1211, %v1227
    %v1231 = vcombine.high %v1211, %v1227
    %v1232 = vcombine.low %v1136, %v1143
    %v1234 = vunpack.c.l.s4 1983009808
    %v1235 = vunpack.c.0.s8 %v1234
    %v1236 = vlaneseq
    %v1237 = vshrl.u32 %v1236, 7
    %v1238 = vsub.s32 %v1235, %v1237
    %v1239 = vrot.slane %v1232, %v1238
    %v1240 = vcombine.low %v1160, %v1161
    %v1242 = vunpack.c.l.s4 1983009808
    %v1243 = vunpack.c.0.s8 %v1242
    %v1244 = vlaneseq
    %v1245 = vshrl.u32 %v1244, 7
    %v1246 = vsub.s32 %v1243, %v1245
    %v1247 = vrot.slane %v1240, %v1246
    %v1248 = vcombine.low %v1152, %v1159
    %v1250 = vunpack.c.l.s4 1983009808
    %v1251 = vunpack.c.0.s8 %v1250
    %v1252 = vlaneseq
    %v1253 = vshrl.u32 %v1252, 7
    %v1254 = vsub.s32 %v1251, %v1253
    %v1255 = vrot.slane %v1248, %v1254
    %v1256 = vcombine.low %v1162, %v1163
    %v1258 = vunpack.c.l.s4 1983009808
    %v1259 = vunpack.c.0.s8 %v1258
    %v1260 = vlaneseq
    %v1261 = vshrl.u32 %v1260, 7
    %v1262 = vsub.s32 %v1259, %v1261
    %v1263 = vrot.slane %v1256, %v1262
    %v1264 = vcombine.low %v1239, %v1247
    %v1265 = vcombine.high %v1239, %v1247
    %v1267 = vunpack.c.l.s4 1934713408
    %v1268 = vunpack.c.0.s8 %v1267
    %v1269 = vlaneseq
    %v1270 = vshrl.u32 %v1269, 7
    %v1271 = vsub.s32 %v1268, %v1270
    %v1272 = vrot.slane %v1264, %v1271
    %v1274 = vunpack.c.l.s4 1934713408
    %v1275 = vunpack.c.0.s8 %v1274
    %v1276 = vlaneseq
    %v1277 = vshrl.u32 %v1276, 7
    %v1278 = vsub.s32 %v1275, %v1277
    %v1279 = vrot.slane %v1265, %v1278
    %v1280 = vcombine.low %v1255, %v1263
    %v1281 = vcombine.high %v1255, %v1263
    %v1283 = vunpack.c.l.s4 1934713408
    %v1284 = vunpack.c.0.s8 %v1283
    %v1285 = vlaneseq
    %v1286 = vshrl.u32 %v1285, 7
    %v1287 = vsub.s32 %v1284, %v1286
    %v1288 = vrot.slane %v1280, %v1287
    %v1290 = vunpack.c.l.s4 1934713408
    %v1291 = vunpack.c.0.s8 %v1290
    %v1292 = vlaneseq
    %v1293 = vshrl.u32 %v1292, 7
    %v1294 = vsub.s32 %v1291, %v1293
    %v1295 = vrot.slane %v1281, %v1294
    %v1296 = vcombine.low %v1272, %v1288
    %v1297 = vcombine.high %v1272, %v1288
    %v1298 = vcombine.low %v1279, %v1295
    %v1299 = vcombine.high %v1279, %v1295
    %vm1300 = vcmask 64512
    %v1302 = vsel %vm1300, %v640, 0
    %v1305 = vsel %vm1300, %v932, 0
    %1307 = vmatprep.subr.mxu0 0.0
    %1308 = vmatpush1.xpose.msra.mxu0 %v1305
    %1309 = vmatprep.subr.mxu0 0.0
    %1310 = vmatpush1.xpose.msra.mxu0 0.0
    %1311 = vmatprep.subr.mxu0 0.0
    %1312 = vmatpush1.xpose.msra.mxu0 0.0
    %1313 = vmatprep.subr.mxu0 0.0
    %1314 = vmatpush1.xpose.msra.mxu0 0.0
    %1315 = vmatprep.subr.mxu0 0.0
    %1316 = vmatpush1.xpose.msra.mxu0 0.0
    %1317 = vmatprep.subr.mxu0 0.0
    %1318 = vmatpush1.xpose.msra.mxu0 0.0
    %1319 = vmatprep.subr.mxu0 0.0
    %1320 = vmatpush1.xpose.msra.mxu0 0.0
    %1321 = vmatprep.subr.mxu0 0.0
    %1322 = vmatpush1.xpose.msra.mxu0 0.0
    %1323 = vmatprep.subr.mxu0 0.0
    %1324 = vmatpush1.xpose.msra.mxu0 0.0
    %1325 = vmatprep.subr.mxu0 0.0
    %1326 = vmatpush1.xpose.msra.mxu0 0.0
    %1327 = vmatprep.subr.mxu0 0.0
    %1328 = vmatpush1.xpose.msra.mxu0 0.0
    %1329 = vmatprep.subr.mxu0 0.0
    %1330 = vmatpush1.xpose.msra.mxu0 0.0
    %1331 = vmatprep.subr.mxu0 0.0
    %1332 = vmatpush1.xpose.msra.mxu0 0.0
    %1333 = vmatprep.subr.mxu0 0.0
    %1334 = vmatpush1.xpose.msra.mxu0 0.0
    %1335 = vmatprep.subr.mxu0 0.0
    %1336 = vmatpush1.xpose.msra.mxu0 0.0
    %1337 = vmatprep.subr.mxu0 0.0
    %1338 = vmatpush1.xpose.msra.mxu0 0.0
    %1339 = vmatprep.subr.mxu0 0.0
    %1340 = vmatpush1.xpose.msra.mxu0 0.0
    %1341 = vmatprep.subr.mxu0 0.0
    %1342 = vmatpush1.xpose.msra.mxu0 0.0
    %1343 = vmatprep.subr.mxu0 0.0
    %1344 = vmatpush1.xpose.msra.mxu0 0.0
    %1345 = vmatprep.subr.mxu0 0.0
    %1346 = vmatpush1.xpose.msra.mxu0 0.0
    %1347 = vmatprep.subr.mxu0 0.0
    %1348 = vmatpush1.xpose.msra.mxu0 0.0
    %1349 = vmatprep.subr.mxu0 0.0
    %1350 = vmatpush1.xpose.msra.mxu0 0.0
    %1351 = vmatprep.subr.mxu0 0.0
    %1352 = vmatpush1.xpose.msra.mxu0 0.0
    %1353 = vmatprep.subr.mxu0 0.0
    %1354 = vmatpush1.xpose.msra.mxu0 0.0
    %1355 = vmatprep.subr.mxu0 0.0
    %1356 = vmatpush1.xpose.msra.mxu0 0.0
    %1357 = vmatprep.subr.mxu0 0.0
    %1358 = vmatpush1.xpose.msra.mxu0 0.0
    %1359 = vmatprep.subr.mxu0 0.0
    %1360 = vmatpush1.xpose.msra.mxu0 0.0
    %1361 = vmatprep.subr.mxu0 0.0
    %1362 = vmatpush1.xpose.msra.mxu0 0.0
    %1363 = vmatprep.subr.mxu0 0.0
    %1364 = vmatpush1.xpose.msra.mxu0 0.0
    %1365 = vmatprep.subr.mxu0 0.0
    %1366 = vmatpush1.xpose.msra.mxu0 0.0
    %1367 = vmatprep.subr.mxu0 0.0
    %1368 = vmatpush1.xpose.msra.mxu0 0.0
    %1369 = vmatprep.subr.mxu0 0.0
    %1370 = vmatpush1.xpose.msra.mxu0 0.0
    %1371 = vmatprep.mubr.f32.mxu0 0.0
    %1372 = vmatmul.mubr.f32.gmra.mrb[0].mxu0 %v1302
    %v1373 = vpop.f32.mrb[0].mxu0
    %v1374 = vadd.f32 0.0, %v1373
    %v1375 = vpop.f32.mrb[0].mxu0
    %1376 = vdwg.mxu0
    %v1378 = vsel %vm1300, %v641, 0
    %v1381 = vsel %vm1300, %v933, 0
    %1383 = vmatprep.subr.mxu0 0.0
    %1384 = vmatpush1.xpose.msra.mxu0 %v1381
    %1385 = vmatprep.subr.mxu0 0.0
    %1386 = vmatpush1.xpose.msra.mxu0 0.0
    %1387 = vmatprep.subr.mxu0 0.0
    %1388 = vmatpush1.xpose.msra.mxu0 0.0
    %1389 = vmatprep.subr.mxu0 0.0
    %1390 = vmatpush1.xpose.msra.mxu0 0.0
    %1391 = vmatprep.subr.mxu0 0.0
    %1392 = vmatpush1.xpose.msra.mxu0 0.0
    %1393 = vmatprep.subr.mxu0 0.0
    %1394 = vmatpush1.xpose.msra.mxu0 0.0
    %1395 = vmatprep.subr.mxu0 0.0
    %1396 = vmatpush1.xpose.msra.mxu0 0.0
    %1397 = vmatprep.subr.mxu0 0.0
    %1398 = vmatpush1.xpose.msra.mxu0 0.0
    %1399 = vmatprep.subr.mxu0 0.0
    %1400 = vmatpush1.xpose.msra.mxu0 0.0
    %1401 = vmatprep.subr.mxu0 0.0
    %1402 = vmatpush1.xpose.msra.mxu0 0.0
    %1403 = vmatprep.subr.mxu0 0.0
    %1404 = vmatpush1.xpose.msra.mxu0 0.0
    %1405 = vmatprep.subr.mxu0 0.0
    %1406 = vmatpush1.xpose.msra.mxu0 0.0
    %1407 = vmatprep.subr.mxu0 0.0
    %1408 = vmatpush1.xpose.msra.mxu0 0.0
    %1409 = vmatprep.subr.mxu0 0.0
    %1410 = vmatpush1.xpose.msra.mxu0 0.0
    %1411 = vmatprep.subr.mxu0 0.0
    %1412 = vmatpush1.xpose.msra.mxu0 0.0
    %1413 = vmatprep.subr.mxu0 0.0
    %1414 = vmatpush1.xpose.msra.mxu0 0.0
    %1415 = vmatprep.subr.mxu0 0.0
    %1416 = vmatpush1.xpose.msra.mxu0 0.0
    %1417 = vmatprep.subr.mxu0 0.0
    %1418 = vmatpush1.xpose.msra.mxu0 0.0
    %1419 = vmatprep.subr.mxu0 0.0
    %1420 = vmatpush1.xpose.msra.mxu0 0.0
    %1421 = vmatprep.subr.mxu0 0.0
    %1422 = vmatpush1.xpose.msra.mxu0 0.0
    %1423 = vmatprep.subr.mxu0 0.0
    %1424 = vmatpush1.xpose.msra.mxu0 0.0
    %1425 = vmatprep.subr.mxu0 0.0
    %1426 = vmatpush1.xpose.msra.mxu0 0.0
    %1427 = vmatprep.subr.mxu0 0.0
    %1428 = vmatpush1.xpose.msra.mxu0 0.0
    %1429 = vmatprep.subr.mxu0 0.0
    %1430 = vmatpush1.xpose.msra.mxu0 0.0
    %1431 = vmatprep.subr.mxu0 0.0
    %1432 = vmatpush1.xpose.msra.mxu0 0.0
    %1433 = vmatprep.subr.mxu0 0.0
    %1434 = vmatpush1.xpose.msra.mxu0 0.0
    %1435 = vmatprep.subr.mxu0 0.0
    %1436 = vmatpush1.xpose.msra.mxu0 0.0
    %1437 = vmatprep.subr.mxu0 0.0
    %1438 = vmatpush1.xpose.msra.mxu0 0.0
    %1439 = vmatprep.subr.mxu0 0.0
    %1440 = vmatpush1.xpose.msra.mxu0 0.0
    %1441 = vmatprep.subr.mxu0 0.0
    %1442 = vmatpush1.xpose.msra.mxu0 0.0
    %1443 = vmatprep.subr.mxu0 0.0
    %1444 = vmatpush1.xpose.msra.mxu0 0.0
    %1445 = vmatprep.subr.mxu0 0.0
    %1446 = vmatpush1.xpose.msra.mxu0 0.0
    %1447 = vmatprep.mubr.f32.mxu0 0.0
    %1448 = vmatmul.mubr.f32.gmra.mrb[0].mxu0 %v1378
    %v1449 = vpop.f32.mrb[0].mxu0
    %v1450 = vadd.f32 0.0, %v1449
    %v1451 = vpop.f32.mrb[0].mxu0
    %1452 = vdwg.mxu0
    %v1454 = vsel %vm1300, %v642, 0
    %v1457 = vsel %vm1300, %v934, 0
    %1459 = vmatprep.subr.mxu0 0.0
    %1460 = vmatpush1.xpose.msra.mxu0 %v1457
    %1461 = vmatprep.subr.mxu0 0.0
    %1462 = vmatpush1.xpose.msra.mxu0 0.0
    %1463 = vmatprep.subr.mxu0 0.0
    %1464 = vmatpush1.xpose.msra.mxu0 0.0
    %1465 = vmatprep.subr.mxu0 0.0
    %1466 = vmatpush1.xpose.msra.mxu0 0.0
    %1467 = vmatprep.subr.mxu0 0.0
    %1468 = vmatpush1.xpose.msra.mxu0 0.0
    %1469 = vmatprep.subr.mxu0 0.0
    %1470 = vmatpush1.xpose.msra.mxu0 0.0
    %1471 = vmatprep.subr.mxu0 0.0
    %1472 = vmatpush1.xpose.msra.mxu0 0.0
    %1473 = vmatprep.subr.mxu0 0.0
    %1474 = vmatpush1.xpose.msra.mxu0 0.0
    %1475 = vmatprep.subr.mxu0 0.0
    %1476 = vmatpush1.xpose.msra.mxu0 0.0
    %1477 = vmatprep.subr.mxu0 0.0
    %1478 = vmatpush1.xpose.msra.mxu0 0.0
    %1479 = vmatprep.subr.mxu0 0.0
    %1480 = vmatpush1.xpose.msra.mxu0 0.0
    %1481 = vmatprep.subr.mxu0 0.0
    %1482 = vmatpush1.xpose.msra.mxu0 0.0
    %1483 = vmatprep.subr.mxu0 0.0
    %1484 = vmatpush1.xpose.msra.mxu0 0.0
    %1485 = vmatprep.subr.mxu0 0.0
    %1486 = vmatpush1.xpose.msra.mxu0 0.0
    %1487 = vmatprep.subr.mxu0 0.0
    %1488 = vmatpush1.xpose.msra.mxu0 0.0
    %1489 = vmatprep.subr.mxu0 0.0
    %1490 = vmatpush1.xpose.msra.mxu0 0.0
    %1491 = vmatprep.subr.mxu0 0.0
    %1492 = vmatpush1.xpose.msra.mxu0 0.0
    %1493 = vmatprep.subr.mxu0 0.0
    %1494 = vmatpush1.xpose.msra.mxu0 0.0
    %1495 = vmatprep.subr.mxu0 0.0
    %1496 = vmatpush1.xpose.msra.mxu0 0.0
    %1497 = vmatprep.subr.mxu0 0.0
    %1498 = vmatpush1.xpose.msra.mxu0 0.0
    %1499 = vmatprep.subr.mxu0 0.0
    %1500 = vmatpush1.xpose.msra.mxu0 0.0
    %1501 = vmatprep.subr.mxu0 0.0
    %1502 = vmatpush1.xpose.msra.mxu0 0.0
    %1503 = vmatprep.subr.mxu0 0.0
    %1504 = vmatpush1.xpose.msra.mxu0 0.0
    %1505 = vmatprep.subr.mxu0 0.0
    %1506 = vmatpush1.xpose.msra.mxu0 0.0
    %1507 = vmatprep.subr.mxu0 0.0
    %1508 = vmatpush1.xpose.msra.mxu0 0.0
    %1509 = vmatprep.subr.mxu0 0.0
    %1510 = vmatpush1.xpose.msra.mxu0 0.0
    %1511 = vmatprep.subr.mxu0 0.0
    %1512 = vmatpush1.xpose.msra.mxu0 0.0
    %1513 = vmatprep.subr.mxu0 0.0
    %1514 = vmatpush1.xpose.msra.mxu0 0.0
    %1515 = vmatprep.subr.mxu0 0.0
    %1516 = vmatpush1.xpose.msra.mxu0 0.0
    %1517 = vmatprep.subr.mxu0 0.0
    %1518 = vmatpush1.xpose.msra.mxu0 0.0
    %1519 = vmatprep.subr.mxu0 0.0
    %1520 = vmatpush1.xpose.msra.mxu0 0.0
    %1521 = vmatprep.subr.mxu0 0.0
    %1522 = vmatpush1.xpose.msra.mxu0 0.0
    %1523 = vmatprep.mubr.f32.mxu0 0.0
    %1524 = vmatmul.mubr.f32.gmra.mrb[0].mxu0 %v1454
    %v1525 = vpop.f32.mrb[0].mxu0
    %v1526 = vadd.f32 0.0, %v1525
    %v1527 = vpop.f32.mrb[0].mxu0
    %1528 = vdwg.mxu0
    %v1530 = vsel %vm1300, %v643, 0
    %v1533 = vsel %vm1300, %v935, 0
    %1535 = vmatprep.subr.mxu0 0.0
    %1536 = vmatpush1.xpose.msra.mxu0 %v1533
    %1537 = vmatprep.subr.mxu0 0.0
    %1538 = vmatpush1.xpose.msra.mxu0 0.0
    %1539 = vmatprep.subr.mxu0 0.0
    %1540 = vmatpush1.xpose.msra.mxu0 0.0
    %1541 = vmatprep.subr.mxu0 0.0
    %1542 = vmatpush1.xpose.msra.mxu0 0.0
    %1543 = vmatprep.subr.mxu0 0.0
    %1544 = vmatpush1.xpose.msra.mxu0 0.0
    %1545 = vmatprep.subr.mxu0 0.0
    %1546 = vmatpush1.xpose.msra.mxu0 0.0
    %1547 = vmatprep.subr.mxu0 0.0
    %1548 = vmatpush1.xpose.msra.mxu0 0.0
    %1549 = vmatprep.subr.mxu0 0.0
    %1550 = vmatpush1.xpose.msra.mxu0 0.0
    %1551 = vmatprep.subr.mxu0 0.0
    %1552 = vmatpush1.xpose.msra.mxu0 0.0
    %1553 = vmatprep.subr.mxu0 0.0
    %1554 = vmatpush1.xpose.msra.mxu0 0.0
    %1555 = vmatprep.subr.mxu0 0.0
    %1556 = vmatpush1.xpose.msra.mxu0 0.0
    %1557 = vmatprep.subr.mxu0 0.0
    %1558 = vmatpush1.xpose.msra.mxu0 0.0
    %1559 = vmatprep.subr.mxu0 0.0
    %1560 = vmatpush1.xpose.msra.mxu0 0.0
    %1561 = vmatprep.subr.mxu0 0.0
    %1562 = vmatpush1.xpose.msra.mxu0 0.0
    %1563 = vmatprep.subr.mxu0 0.0
    %1564 = vmatpush1.xpose.msra.mxu0 0.0
    %1565 = vmatprep.subr.mxu0 0.0
    %1566 = vmatpush1.xpose.msra.mxu0 0.0
    %1567 = vmatprep.subr.mxu0 0.0
    %1568 = vmatpush1.xpose.msra.mxu0 0.0
    %1569 = vmatprep.subr.mxu0 0.0
    %1570 = vmatpush1.xpose.msra.mxu0 0.0
    %1571 = vmatprep.subr.mxu0 0.0
    %1572 = vmatpush1.xpose.msra.mxu0 0.0
    %1573 = vmatprep.subr.mxu0 0.0
    %1574 = vmatpush1.xpose.msra.mxu0 0.0
    %1575 = vmatprep.subr.mxu0 0.0
    %1576 = vmatpush1.xpose.msra.mxu0 0.0
    %1577 = vmatprep.subr.mxu0 0.0
    %1578 = vmatpush1.xpose.msra.mxu0 0.0
    %1579 = vmatprep.subr.mxu0 0.0
    %1580 = vmatpush1.xpose.msra.mxu0 0.0
    %1581 = vmatprep.subr.mxu0 0.0
    %1582 = vmatpush1.xpose.msra.mxu0 0.0
    %1583 = vmatprep.subr.mxu0 0.0
    %1584 = vmatpush1.xpose.msra.mxu0 0.0
    %1585 = vmatprep.subr.mxu0 0.0
    %1586 = vmatpush1.xpose.msra.mxu0 0.0
    %1587 = vmatprep.subr.mxu0 0.0
    %1588 = vmatpush1.xpose.msra.mxu0 0.0
    %1589 = vmatprep.subr.mxu0 0.0
    %1590 = vmatpush1.xpose.msra.mxu0 0.0
    %1591 = vmatprep.subr.mxu0 0.0
    %1592 = vmatpush1.xpose.msra.mxu0 0.0
    %1593 = vmatprep.subr.mxu0 0.0
    %1594 = vmatpush1.xpose.msra.mxu0 0.0
    %1595 = vmatprep.subr.mxu0 0.0
    %1596 = vmatpush1.xpose.msra.mxu0 0.0
    %1597 = vmatprep.subr.mxu0 0.0
    %1598 = vmatpush1.xpose.msra.mxu0 0.0
    %1599 = vmatprep.mubr.f32.mxu0 0.0
    %1600 = vmatmul.mubr.f32.gmra.mrb[0].mxu0 %v1530
    %v1601 = vpop.f32.mrb[0].mxu0
    %v1602 = vadd.f32 0.0, %v1601
    %v1603 = vpop.f32.mrb[0].mxu0
    %1604 = vdwg.mxu0
    %v1606 = vsel %vm1300, %v708, 0
    %v1609 = vsel %vm1300, %v1000, 0
    %1611 = vmatprep.subr.mxu0 0.0
    %1612 = vmatpush1.xpose.msra.mxu0 %v1609
    %1613 = vmatprep.subr.mxu0 0.0
    %1614 = vmatpush1.xpose.msra.mxu0 0.0
    %1615 = vmatprep.subr.mxu0 0.0
    %1616 = vmatpush1.xpose.msra.mxu0 0.0
    %1617 = vmatprep.subr.mxu0 0.0
    %1618 = vmatpush1.xpose.msra.mxu0 0.0
    %1619 = vmatprep.subr.mxu0 0.0
    %1620 = vmatpush1.xpose.msra.mxu0 0.0
    %1621 = vmatprep.subr.mxu0 0.0
    %1622 = vmatpush1.xpose.msra.mxu0 0.0
    %1623 = vmatprep.subr.mxu0 0.0
    %1624 = vmatpush1.xpose.msra.mxu0 0.0
    %1625 = vmatprep.subr.mxu0 0.0
    %1626 = vmatpush1.xpose.msra.mxu0 0.0
    %1627 = vmatprep.subr.mxu0 0.0
    %1628 = vmatpush1.xpose.msra.mxu0 0.0
    %1629 = vmatprep.subr.mxu0 0.0
    %1630 = vmatpush1.xpose.msra.mxu0 0.0
    %1631 = vmatprep.subr.mxu0 0.0
    %1632 = vmatpush1.xpose.msra.mxu0 0.0
    %1633 = vmatprep.subr.mxu0 0.0
    %1634 = vmatpush1.xpose.msra.mxu0 0.0
    %1635 = vmatprep.subr.mxu0 0.0
    %1636 = vmatpush1.xpose.msra.mxu0 0.0
    %1637 = vmatprep.subr.mxu0 0.0
    %1638 = vmatpush1.xpose.msra.mxu0 0.0
    %1639 = vmatprep.subr.mxu0 0.0
    %1640 = vmatpush1.xpose.msra.mxu0 0.0
    %1641 = vmatprep.subr.mxu0 0.0
    %1642 = vmatpush1.xpose.msra.mxu0 0.0
    %1643 = vmatprep.subr.mxu0 0.0
    %1644 = vmatpush1.xpose.msra.mxu0 0.0
    %1645 = vmatprep.subr.mxu0 0.0
    %1646 = vmatpush1.xpose.msra.mxu0 0.0
    %1647 = vmatprep.subr.mxu0 0.0
    %1648 = vmatpush1.xpose.msra.mxu0 0.0
    %1649 = vmatprep.subr.mxu0 0.0
    %1650 = vmatpush1.xpose.msra.mxu0 0.0
    %1651 = vmatprep.subr.mxu0 0.0
    %1652 = vmatpush1.xpose.msra.mxu0 0.0
    %1653 = vmatprep.subr.mxu0 0.0
    %1654 = vmatpush1.xpose.msra.mxu0 0.0
    %1655 = vmatprep.subr.mxu0 0.0
    %1656 = vmatpush1.xpose.msra.mxu0 0.0
    %1657 = vmatprep.subr.mxu0 0.0
    %1658 = vmatpush1.xpose.msra.mxu0 0.0
    %1659 = vmatprep.subr.mxu0 0.0
    %1660 = vmatpush1.xpose.msra.mxu0 0.0
    %1661 = vmatprep.subr.mxu0 0.0
    %1662 = vmatpush1.xpose.msra.mxu0 0.0
    %1663 = vmatprep.subr.mxu0 0.0
    %1664 = vmatpush1.xpose.msra.mxu0 0.0
    %1665 = vmatprep.subr.mxu0 0.0
    %1666 = vmatpush1.xpose.msra.mxu0 0.0
    %1667 = vmatprep.subr.mxu0 0.0
    %1668 = vmatpush1.xpose.msra.mxu0 0.0
    %1669 = vmatprep.subr.mxu0 0.0
    %1670 = vmatpush1.xpose.msra.mxu0 0.0
    %1671 = vmatprep.subr.mxu0 0.0
    %1672 = vmatpush1.xpose.msra.mxu0 0.0
    %1673 = vmatprep.subr.mxu0 0.0
    %1674 = vmatpush1.xpose.msra.mxu0 0.0
    %1675 = vmatprep.mubr.f32.mxu0 0.0
    %1676 = vmatmul.mubr.f32.gmra.mrb[0].mxu0 %v1606
    %v1677 = vpop.f32.mrb[0].mxu0
    %v1678 = vadd.f32 0.0, %v1677
    %v1679 = vpop.f32.mrb[0].mxu0
    %1680 = vdwg.mxu0
    %v1682 = vsel %vm1300, %v709, 0
    %v1685 = vsel %vm1300, %v1001, 0
    %1687 = vmatprep.subr.mxu0 0.0
    %1688 = vmatpush1.xpose.msra.mxu0 %v1685
    %1689 = vmatprep.subr.mxu0 0.0
    %1690 = vmatpush1.xpose.msra.mxu0 0.0
    %1691 = vmatprep.subr.mxu0 0.0
    %1692 = vmatpush1.xpose.msra.mxu0 0.0
    %1693 = vmatprep.subr.mxu0 0.0
    %1694 = vmatpush1.xpose.msra.mxu0 0.0
    %1695 = vmatprep.subr.mxu0 0.0
    %1696 = vmatpush1.xpose.msra.mxu0 0.0
    %1697 = vmatprep.subr.mxu0 0.0
    %1698 = vmatpush1.xpose.msra.mxu0 0.0
    %1699 = vmatprep.subr.mxu0 0.0
    %1700 = vmatpush1.xpose.msra.mxu0 0.0
    %1701 = vmatprep.subr.mxu0 0.0
    %1702 = vmatpush1.xpose.msra.mxu0 0.0
    %1703 = vmatprep.subr.mxu0 0.0
    %1704 = vmatpush1.xpose.msra.mxu0 0.0
    %1705 = vmatprep.subr.mxu0 0.0
    %1706 = vmatpush1.xpose.msra.mxu0 0.0
    %1707 = vmatprep.subr.mxu0 0.0
    %1708 = vmatpush1.xpose.msra.mxu0 0.0
    %1709 = vmatprep.subr.mxu0 0.0
    %1710 = vmatpush1.xpose.msra.mxu0 0.0
    %1711 = vmatprep.subr.mxu0 0.0
    %1712 = vmatpush1.xpose.msra.mxu0 0.0
    %1713 = vmatprep.subr.mxu0 0.0
    %1714 = vmatpush1.xpose.msra.mxu0 0.0
    %1715 = vmatprep.subr.mxu0 0.0
    %1716 = vmatpush1.xpose.msra.mxu0 0.0
    %1717 = vmatprep.subr.mxu0 0.0
    %1718 = vmatpush1.xpose.msra.mxu0 0.0
    %1719 = vmatprep.subr.mxu0 0.0
    %1720 = vmatpush1.xpose.msra.mxu0 0.0
    %1721 = vmatprep.subr.mxu0 0.0
    %1722 = vmatpush1.xpose.msra.mxu0 0.0
    %1723 = vmatprep.subr.mxu0 0.0
    %1724 = vmatpush1.xpose.msra.mxu0 0.0
    %1725 = vmatprep.subr.mxu0 0.0
    %1726 = vmatpush1.xpose.msra.mxu0 0.0
    %1727 = vmatprep.subr.mxu0 0.0
    %1728 = vmatpush1.xpose.msra.mxu0 0.0
    %1729 = vmatprep.subr.mxu0 0.0
    %1730 = vmatpush1.xpose.msra.mxu0 0.0
    %1731 = vmatprep.subr.mxu0 0.0
    %1732 = vmatpush1.xpose.msra.mxu0 0.0
    %1733 = vmatprep.subr.mxu0 0.0
    %1734 = vmatpush1.xpose.msra.mxu0 0.0
    %1735 = vmatprep.subr.mxu0 0.0
    %1736 = vmatpush1.xpose.msra.mxu0 0.0
    %1737 = vmatprep.subr.mxu0 0.0
    %1738 = vmatpush1.xpose.msra.mxu0 0.0
    %1739 = vmatprep.subr.mxu0 0.0
    %1740 = vmatpush1.xpose.msra.mxu0 0.0
    %1741 = vmatprep.subr.mxu0 0.0
    %1742 = vmatpush1.xpose.msra.mxu0 0.0
    %1743 = vmatprep.subr.mxu0 0.0
    %1744 = vmatpush1.xpose.msra.mxu0 0.0
    %1745 = vmatprep.subr.mxu0 0.0
    %1746 = vmatpush1.xpose.msra.mxu0 0.0
    %1747 = vmatprep.subr.mxu0 0.0
    %1748 = vmatpush1.xpose.msra.mxu0 0.0
    %1749 = vmatprep.subr.mxu0 0.0
    %1750 = vmatpush1.xpose.msra.mxu0 0.0
    %1751 = vmatprep.mubr.f32.mxu0 0.0
    %1752 = vmatmul.mubr.f32.gmra.mrb[0].mxu0 %v1682
    %v1753 = vpop.f32.mrb[0].mxu0
    %v1754 = vadd.f32 0.0, %v1753
    %v1755 = vpop.f32.mrb[0].mxu0
    %1756 = vdwg.mxu0
    %v1758 = vsel %vm1300, %v710, 0
    %v1761 = vsel %vm1300, %v1002, 0
    %1763 = vmatprep.subr.mxu0 0.0
    %1764 = vmatpush1.xpose.msra.mxu0 %v1761
    %1765 = vmatprep.subr.mxu0 0.0
    %1766 = vmatpush1.xpose.msra.mxu0 0.0
    %1767 = vmatprep.subr.mxu0 0.0
    %1768 = vmatpush1.xpose.msra.mxu0 0.0
    %1769 = vmatprep.subr.mxu0 0.0
    %1770 = vmatpush1.xpose.msra.mxu0 0.0
    %1771 = vmatprep.subr.mxu0 0.0
    %1772 = vmatpush1.xpose.msra.mxu0 0.0
    %1773 = vmatprep.subr.mxu0 0.0
    %1774 = vmatpush1.xpose.msra.mxu0 0.0
    %1775 = vmatprep.subr.mxu0 0.0
    %1776 = vmatpush1.xpose.msra.mxu0 0.0
    %1777 = vmatprep.subr.mxu0 0.0
    %1778 = vmatpush1.xpose.msra.mxu0 0.0
    %1779 = vmatprep.subr.mxu0 0.0
    %1780 = vmatpush1.xpose.msra.mxu0 0.0
    %1781 = vmatprep.subr.mxu0 0.0
    %1782 = vmatpush1.xpose.msra.mxu0 0.0
    %1783 = vmatprep.subr.mxu0 0.0
    %1784 = vmatpush1.xpose.msra.mxu0 0.0
    %1785 = vmatprep.subr.mxu0 0.0
    %1786 = vmatpush1.xpose.msra.mxu0 0.0
    %1787 = vmatprep.subr.mxu0 0.0
    %1788 = vmatpush1.xpose.msra.mxu0 0.0
    %1789 = vmatprep.subr.mxu0 0.0
    %1790 = vmatpush1.xpose.msra.mxu0 0.0
    %1791 = vmatprep.subr.mxu0 0.0
    %1792 = vmatpush1.xpose.msra.mxu0 0.0
    %1793 = vmatprep.subr.mxu0 0.0
    %1794 = vmatpush1.xpose.msra.mxu0 0.0
    %1795 = vmatprep.subr.mxu0 0.0
    %1796 = vmatpush1.xpose.msra.mxu0 0.0
    %1797 = vmatprep.subr.mxu0 0.0
    %1798 = vmatpush1.xpose.msra.mxu0 0.0
    %1799 = vmatprep.subr.mxu0 0.0
    %1800 = vmatpush1.xpose.msra.mxu0 0.0
    %1801 = vmatprep.subr.mxu0 0.0
    %1802 = vmatpush1.xpose.msra.mxu0 0.0
    %1803 = vmatprep.subr.mxu0 0.0
    %1804 = vmatpush1.xpose.msra.mxu0 0.0
    %1805 = vmatprep.subr.mxu0 0.0
    %1806 = vmatpush1.xpose.msra.mxu0 0.0
    %1807 = vmatprep.subr.mxu0 0.0
    %1808 = vmatpush1.xpose.msra.mxu0 0.0
    %1809 = vmatprep.subr.mxu0 0.0
    %1810 = vmatpush1.xpose.msra.mxu0 0.0
    %1811 = vmatprep.subr.mxu0 0.0
    %1812 = vmatpush1.xpose.msra.mxu0 0.0
    %1813 = vmatprep.subr.mxu0 0.0
    %1814 = vmatpush1.xpose.msra.mxu0 0.0
    %1815 = vmatprep.subr.mxu0 0.0
    %1816 = vmatpush1.xpose.msra.mxu0 0.0
    %1817 = vmatprep.subr.mxu0 0.0
    %1818 = vmatpush1.xpose.msra.mxu0 0.0
    %1819 = vmatprep.subr.mxu0 0.0
    %1820 = vmatpush1.xpose.msra.mxu0 0.0
    %1821 = vmatprep.subr.mxu0 0.0
    %1822 = vmatpush1.xpose.msra.mxu0 0.0
    %1823 = vmatprep.subr.mxu0 0.0
    %1824 = vmatpush1.xpose.msra.mxu0 0.0
    %1825 = vmatprep.subr.mxu0 0.0
    %1826 = vmatpush1.xpose.msra.mxu0 0.0
    %1827 = vmatprep.mubr.f32.mxu0 0.0
    %1828 = vmatmul.mubr.f32.gmra.mrb[0].mxu0 %v1758
    %v1829 = vpop.f32.mrb[0].mxu0
    %v1830 = vadd.f32 0.0, %v1829
    %v1831 = vpop.f32.mrb[0].mxu0
    %1832 = vdwg.mxu0
    %v1834 = vsel %vm1300, %v711, 0
    %v1837 = vsel %vm1300, %v1003, 0
    %1839 = vmatprep.subr.mxu0 0.0
    %1840 = vmatpush1.xpose.msra.mxu0 %v1837
    %1841 = vmatprep.subr.mxu0 0.0
    %1842 = vmatpush1.xpose.msra.mxu0 0.0
    %1843 = vmatprep.subr.mxu0 0.0
    %1844 = vmatpush1.xpose.msra.mxu0 0.0
    %1845 = vmatprep.subr.mxu0 0.0
    %1846 = vmatpush1.xpose.msra.mxu0 0.0
    %1847 = vmatprep.subr.mxu0 0.0
    %1848 = vmatpush1.xpose.msra.mxu0 0.0
    %1849 = vmatprep.subr.mxu0 0.0
    %1850 = vmatpush1.xpose.msra.mxu0 0.0
    %1851 = vmatprep.subr.mxu0 0.0
    %1852 = vmatpush1.xpose.msra.mxu0 0.0
    %1853 = vmatprep.subr.mxu0 0.0
    %1854 = vmatpush1.xpose.msra.mxu0 0.0
    %1855 = vmatprep.subr.mxu0 0.0
    %1856 = vmatpush1.xpose.msra.mxu0 0.0
    %1857 = vmatprep.subr.mxu0 0.0
    %1858 = vmatpush1.xpose.msra.mxu0 0.0
    %1859 = vmatprep.subr.mxu0 0.0
    %1860 = vmatpush1.xpose.msra.mxu0 0.0
    %1861 = vmatprep.subr.mxu0 0.0
    %1862 = vmatpush1.xpose.msra.mxu0 0.0
    %1863 = vmatprep.subr.mxu0 0.0
    %1864 = vmatpush1.xpose.msra.mxu0 0.0
    %1865 = vmatprep.subr.mxu0 0.0
    %1866 = vmatpush1.xpose.msra.mxu0 0.0
    %1867 = vmatprep.subr.mxu0 0.0
    %1868 = vmatpush1.xpose.msra.mxu0 0.0
    %1869 = vmatprep.subr.mxu0 0.0
    %1870 = vmatpush1.xpose.msra.mxu0 0.0
    %1871 = vmatprep.subr.mxu0 0.0
    %1872 = vmatpush1.xpose.msra.mxu0 0.0
    %1873 = vmatprep.subr.mxu0 0.0
    %1874 = vmatpush1.xpose.msra.mxu0 0.0
    %1875 = vmatprep.subr.mxu0 0.0
    %1876 = vmatpush1.xpose.msra.mxu0 0.0
    %1877 = vmatprep.subr.mxu0 0.0
    %1878 = vmatpush1.xpose.msra.mxu0 0.0
    %1879 = vmatprep.subr.mxu0 0.0
    %1880 = vmatpush1.xpose.msra.mxu0 0.0
    %1881 = vmatprep.subr.mxu0 0.0
    %1882 = vmatpush1.xpose.msra.mxu0 0.0
    %1883 = vmatprep.subr.mxu0 0.0
    %1884 = vmatpush1.xpose.msra.mxu0 0.0
    %1885 = vmatprep.subr.mxu0 0.0
    %1886 = vmatpush1.xpose.msra.mxu0 0.0
    %1887 = vmatprep.subr.mxu0 0.0
    %1888 = vmatpush1.xpose.msra.mxu0 0.0
    %1889 = vmatprep.subr.mxu0 0.0
    %1890 = vmatpush1.xpose.msra.mxu0 0.0
    %1891 = vmatprep.subr.mxu0 0.0
    %1892 = vmatpush1.xpose.msra.mxu0 0.0
    %1893 = vmatprep.subr.mxu0 0.0
    %1894 = vmatpush1.xpose.msra.mxu0 0.0
    %1895 = vmatprep.subr.mxu0 0.0
    %1896 = vmatpush1.xpose.msra.mxu0 0.0
    %1897 = vmatprep.subr.mxu0 0.0
    %1898 = vmatpush1.xpose.msra.mxu0 0.0
    %1899 = vmatprep.subr.mxu0 0.0
    %1900 = vmatpush1.xpose.msra.mxu0 0.0
    %1901 = vmatprep.subr.mxu0 0.0
    %1902 = vmatpush1.xpose.msra.mxu0 0.0
    %1903 = vmatprep.mubr.f32.mxu0 0.0
    %1904 = vmatmul.mubr.f32.gmra.mrb[0].mxu0 %v1834
    %v1905 = vpop.f32.mrb[0].mxu0
    %v1906 = vadd.f32 0.0, %v1905
    %v1907 = vpop.f32.mrb[0].mxu0
    %1908 = vdwg.mxu0
    %v1909 = vmul.f32 %v1374, 0.35355338
    %v1910 = vmul.f32 %v1450, 0.35355338
    %v1911 = vmul.f32 %v1526, 0.35355338
    %v1912 = vmul.f32 %v1602, 0.35355338
    %v1913 = vmul.f32 %v1678, 0.35355338
    %v1914 = vmul.f32 %v1754, 0.35355338
    %v1915 = vmul.f32 %v1830, 0.35355338
    %v1916 = vmul.f32 %v1906, 0.35355338
    %v1917 = vsel %vm1300, %v1909, -inf
    %1918 = vmax.xlane.f32.xlu0 %v1917
    %v1919 = vpop.xlane.xlu0 %1918
    %v1920 = vsel %vm1300, %v1910, -inf
    %1921 = vmax.xlane.f32.xlu0 %v1920
    %v1922 = vpop.xlane.xlu0 %1921
    %v1923 = vsel %vm1300, %v1911, -inf
    %1924 = vmax.xlane.f32.xlu0 %v1923
    %v1925 = vpop.xlane.xlu0 %1924
    %v1926 = vsel %vm1300, %v1912, -inf
    %1927 = vmax.xlane.f32.xlu0 %v1926
    %v1928 = vpop.xlane.xlu0 %1927
    %v1929 = vsel %vm1300, %v1913, -inf
    %1930 = vmax.xlane.f32.xlu0 %v1929
    %v1931 = vpop.xlane.xlu0 %1930
    %v1932 = vsel %vm1300, %v1914, -inf
    %1933 = vmax.xlane.f32.xlu0 %v1932
    %v1934 = vpop.xlane.xlu0 %1933
    %v1935 = vsel %vm1300, %v1915, -inf
    %1936 = vmax.xlane.f32.xlu0 %v1935
    %v1937 = vpop.xlane.xlu0 %1936
    %v1938 = vsel %vm1300, %v1916, -inf
    %1939 = vmax.xlane.f32.xlu0 %v1938
    %v1940 = vpop.xlane.xlu0 %1939
    %v1941 = vsub.f32 %v1909, %v1919
    %v1942 = vsub.f32 %v1910, %v1922
    %v1943 = vsub.f32 %v1911, %v1925
    %v1944 = vsub.f32 %v1912, %v1928
    %v1945 = vsub.f32 %v1913, %v1931
    %v1946 = vsub.f32 %v1914, %v1934
    %v1947 = vsub.f32 %v1915, %v1937
    %v1948 = vsub.f32 %v1916, %v1940
    %v1949 = vmul.f32 %v1941, 1.442695
    %v1950 = vpow.pop %v1949
    %v1951 = vmul.f32 %v1942, 1.442695
    %v1952 = vpow.pop %v1951
    %v1953 = vmul.f32 %v1943, 1.442695
    %v1954 = vpow.pop %v1953
    %v1955 = vmul.f32 %v1944, 1.442695
    %v1956 = vpow.pop %v1955
    %v1957 = vmul.f32 %v1945, 1.442695
    %v1958 = vpow.pop %v1957
    %v1959 = vmul.f32 %v1946, 1.442695
    %v1960 = vpow.pop %v1959
    %v1961 = vmul.f32 %v1947, 1.442695
    %v1962 = vpow.pop %v1961
    %v1963 = vmul.f32 %v1948, 1.442695
    %v1964 = vpow.pop %v1963
    %v1965 = vsel %vm1300, %v1950, 0.0
    %1966 = vadd.xlane.f32.xlu0 %v1965
    %v1967 = vpop.xlane.xlu0 %1966
    %v1968 = vsel %vm1300, %v1952, 0.0
    %1969 = vadd.xlane.f32.xlu0 %v1968
    %v1970 = vpop.xlane.xlu0 %1969
    %v1971 = vsel %vm1300, %v1954, 0.0
    %1972 = vadd.xlane.f32.xlu0 %v1971
    %v1973 = vpop.xlane.xlu0 %1972
    %v1974 = vsel %vm1300, %v1956, 0.0
    %1975 = vadd.xlane.f32.xlu0 %v1974
    %v1976 = vpop.xlane.xlu0 %1975
    %v1977 = vsel %vm1300, %v1958, 0.0
    %1978 = vadd.xlane.f32.xlu0 %v1977
    %v1979 = vpop.xlane.xlu0 %1978
    %v1980 = vsel %vm1300, %v1960, 0.0
    %1981 = vadd.xlane.f32.xlu0 %v1980
    %v1982 = vpop.xlane.xlu0 %1981
    %v1983 = vsel %vm1300, %v1962, 0.0
    %1984 = vadd.xlane.f32.xlu0 %v1983
    %v1985 = vpop.xlane.xlu0 %1984
    %v1986 = vsel %vm1300, %v1964, 0.0
    %1987 = vadd.xlane.f32.xlu0 %v1986
    %v1988 = vpop.xlane.xlu0 %1987
    %v1989 = vrcp.pop %v1967
    %v1990 = vrcp.pop %v1970
    %v1991 = vrcp.pop %v1973
    %v1992 = vrcp.pop %v1976
    %v1993 = vrcp.pop %v1979
    %v1994 = vrcp.pop %v1982
    %v1995 = vrcp.pop %v1985
    %v1996 = vrcp.pop %v1988
    %v1997 = vmul.f32 %v1950, %v1989
    %v1998 = vmul.f32 %v1952, %v1990
    %v1999 = vmul.f32 %v1954, %v1991
    %v2000 = vmul.f32 %v1956, %v1992
    %v2001 = vmul.f32 %v1958, %v1993
    %v2002 = vmul.f32 %v1960, %v1994
    %v2003 = vmul.f32 %v1962, %v1995
    %v2004 = vmul.f32 %v1964, %v1996
    %v2006 = vsel %vm1300, %v1997, 0
    %2008 = vmatprep.subr.mxu0 0.0
    %2009 = vmatpush1.msra.mxu0 %v1228
    %2010 = vmatprep.subr.mxu0 0.0
    %2011 = vmatpush1.msra.mxu0 0.0
    %2012 = vmatprep.subr.mxu0 0.0
    %2013 = vmatpush1.msra.mxu0 0.0
    %2014 = vmatprep.subr.mxu0 0.0
    %2015 = vmatpush1.msra.mxu0 0.0
    %2016 = vmatprep.subr.mxu0 0.0
    %2017 = vmatpush1.msra.mxu0 0.0
    %2018 = vmatprep.subr.mxu0 0.0
    %2019 = vmatpush1.msra.mxu0 0.0
    %2020 = vmatprep.subr.mxu0 0.0
    %2021 = vmatpush1.msra.mxu0 0.0
    %2022 = vmatprep.subr.mxu0 0.0
    %2023 = vmatpush1.msra.mxu0 0.0
    %2024 = vmatprep.subr.mxu0 0.0
    %2025 = vmatpush1.msra.mxu0 0.0
    %2026 = vmatprep.subr.mxu0 0.0
    %2027 = vmatpush1.msra.mxu0 0.0
    %2028 = vmatprep.subr.mxu0 0.0
    %2029 = vmatpush1.msra.mxu0 0.0
    %2030 = vmatprep.subr.mxu0 0.0
    %2031 = vmatpush1.msra.mxu0 0.0
    %2032 = vmatprep.subr.mxu0 0.0
    %2033 = vmatpush1.msra.mxu0 0.0
    %2034 = vmatprep.subr.mxu0 0.0
    %2035 = vmatpush1.msra.mxu0 0.0
    %2036 = vmatprep.subr.mxu0 0.0
    %2037 = vmatpush1.msra.mxu0 0.0
    %2038 = vmatprep.subr.mxu0 0.0
    %2039 = vmatpush1.msra.mxu0 0.0
    %2040 = vmatprep.subr.mxu0 0.0
    %2041 = vmatpush1.msra.mxu0 0.0
    %2042 = vmatprep.subr.mxu0 0.0
    %2043 = vmatpush1.msra.mxu0 0.0
    %2044 = vmatprep.subr.mxu0 0.0
    %2045 = vmatpush1.msra.mxu0 0.0
    %2046 = vmatprep.subr.mxu0 0.0
    %2047 = vmatpush1.msra.mxu0 0.0
    %2048 = vmatprep.subr.mxu0 0.0
    %2049 = vmatpush1.msra.mxu0 0.0
    %2050 = vmatprep.subr.mxu0 0.0
    %2051 = vmatpush1.msra.mxu0 0.0
    %2052 = vmatprep.subr.mxu0 0.0
    %2053 = vmatpush1.msra.mxu0 0.0
    %2054 = vmatprep.subr.mxu0 0.0
    %2055 = vmatpush1.msra.mxu0 0.0
    %2056 = vmatprep.subr.mxu0 0.0
    %2057 = vmatpush1.msra.mxu0 0.0
    %2058 = vmatprep.subr.mxu0 0.0
    %2059 = vmatpush1.msra.mxu0 0.0
    %2060 = vmatprep.subr.mxu0 0.0
    %2061 = vmatpush1.msra.mxu0 0.0
    %2062 = vmatprep.subr.mxu0 0.0
    %2063 = vmatpush1.msra.mxu0 0.0
    %2064 = vmatprep.subr.mxu0 0.0
    %2065 = vmatpush1.msra.mxu0 0.0
    %2066 = vmatprep.subr.mxu0 0.0
    %2067 = vmatpush1.msra.mxu0 0.0
    %2068 = vmatprep.subr.mxu0 0.0
    %2069 = vmatpush1.msra.mxu0 0.0
    %2070 = vmatprep.subr.mxu0 0.0
    %2071 = vmatpush1.msra.mxu0 0.0
    %2072 = vmatprep.mubr.f32.mxu0 0.0
    %2073 = vmatmul.mubr.f32.gmra.mrb[0].mxu0 %v2006
    %v2074 = vpop.f32.mrb[0].mxu0
    %v2075 = vadd.f32 0.0, %v2074
    %v2076 = vpop.f32.mrb[0].mxu0
    %2077 = vdwg.mxu0
    %v2079 = vsel %vm1300, %v1998, 0
    %2081 = vmatprep.subr.mxu0 0.0
    %2082 = vmatpush1.msra.mxu0 %v1229
    %2083 = vmatprep.subr.mxu0 0.0
    %2084 = vmatpush1.msra.mxu0 0.0
    %2085 = vmatprep.subr.mxu0 0.0
    %2086 = vmatpush1.msra.mxu0 0.0
    %2087 = vmatprep.subr.mxu0 0.0
    %2088 = vmatpush1.msra.mxu0 0.0
    %2089 = vmatprep.subr.mxu0 0.0
    %2090 = vmatpush1.msra.mxu0 0.0
    %2091 = vmatprep.subr.mxu0 0.0
    %2092 = vmatpush1.msra.mxu0 0.0
    %2093 = vmatprep.subr.mxu0 0.0
    %2094 = vmatpush1.msra.mxu0 0.0
    %2095 = vmatprep.subr.mxu0 0.0
    %2096 = vmatpush1.msra.mxu0 0.0
    %2097 = vmatprep.subr.mxu0 0.0
    %2098 = vmatpush1.msra.mxu0 0.0
    %2099 = vmatprep.subr.mxu0 0.0
    %2100 = vmatpush1.msra.mxu0 0.0
    %2101 = vmatprep.subr.mxu0 0.0
    %2102 = vmatpush1.msra.mxu0 0.0
    %2103 = vmatprep.subr.mxu0 0.0
    %2104 = vmatpush1.msra.mxu0 0.0
    %2105 = vmatprep.subr.mxu0 0.0
    %2106 = vmatpush1.msra.mxu0 0.0
    %2107 = vmatprep.subr.mxu0 0.0
    %2108 = vmatpush1.msra.mxu0 0.0
    %2109 = vmatprep.subr.mxu0 0.0
    %2110 = vmatpush1.msra.mxu0 0.0
    %2111 = vmatprep.subr.mxu0 0.0
    %2112 = vmatpush1.msra.mxu0 0.0
    %2113 = vmatprep.subr.mxu0 0.0
    %2114 = vmatpush1.msra.mxu0 0.0
    %2115 = vmatprep.subr.mxu0 0.0
    %2116 = vmatpush1.msra.mxu0 0.0
    %2117 = vmatprep.subr.mxu0 0.0
    %2118 = vmatpush1.msra.mxu0 0.0
    %2119 = vmatprep.subr.mxu0 0.0
    %2120 = vmatpush1.msra.mxu0 0.0
    %2121 = vmatprep.subr.mxu0 0.0
    %2122 = vmatpush1.msra.mxu0 0.0
    %2123 = vmatprep.subr.mxu0 0.0
    %2124 = vmatpush1.msra.mxu0 0.0
    %2125 = vmatprep.subr.mxu0 0.0
    %2126 = vmatpush1.msra.mxu0 0.0
    %2127 = vmatprep.subr.mxu0 0.0
    %2128 = vmatpush1.msra.mxu0 0.0
    %2129 = vmatprep.subr.mxu0 0.0
    %2130 = vmatpush1.msra.mxu0 0.0
    %2131 = vmatprep.subr.mxu0 0.0
    %2132 = vmatpush1.msra.mxu0 0.0
    %2133 = vmatprep.subr.mxu0 0.0
    %2134 = vmatpush1.msra.mxu0 0.0
    %2135 = vmatprep.subr.mxu0 0.0
    %2136 = vmatpush1.msra.mxu0 0.0
    %2137 = vmatprep.subr.mxu0 0.0
    %2138 = vmatpush1.msra.mxu0 0.0
    %2139 = vmatprep.subr.mxu0 0.0
    %2140 = vmatpush1.msra.mxu0 0.0
    %2141 = vmatprep.subr.mxu0 0.0
    %2142 = vmatpush1.msra.mxu0 0.0
    %2143 = vmatprep.subr.mxu0 0.0
    %2144 = vmatpush1.msra.mxu0 0.0
    %2145 = vmatprep.mubr.f32.mxu0 0.0
    %2146 = vmatmul.mubr.f32.gmra.mrb[0].mxu0 %v2079
    %v2147 = vpop.f32.mrb[0].mxu0
    %v2148 = vadd.f32 0.0, %v2147
    %v2149 = vpop.f32.mrb[0].mxu0
    %2150 = vdwg.mxu0
    %v2152 = vsel %vm1300, %v1999, 0
    %2154 = vmatprep.subr.mxu0 0.0
    %2155 = vmatpush1.msra.mxu0 %v1230
    %2156 = vmatprep.subr.mxu0 0.0
    %2157 = vmatpush1.msra.mxu0 0.0
    %2158 = vmatprep.subr.mxu0 0.0
    %2159 = vmatpush1.msra.mxu0 0.0
    %2160 = vmatprep.subr.mxu0 0.0
    %2161 = vmatpush1.msra.mxu0 0.0
    %2162 = vmatprep.subr.mxu0 0.0
    %2163 = vmatpush1.msra.mxu0 0.0
    %2164 = vmatprep.subr.mxu0 0.0
    %2165 = vmatpush1.msra.mxu0 0.0
    %2166 = vmatprep.subr.mxu0 0.0
    %2167 = vmatpush1.msra.mxu0 0.0
    %2168 = vmatprep.subr.mxu0 0.0
    %2169 = vmatpush1.msra.mxu0 0.0
    %2170 = vmatprep.subr.mxu0 0.0
    %2171 = vmatpush1.msra.mxu0 0.0
    %2172 = vmatprep.subr.mxu0 0.0
    %2173 = vmatpush1.msra.mxu0 0.0
    %2174 = vmatprep.subr.mxu0 0.0
    %2175 = vmatpush1.msra.mxu0 0.0
    %2176 = vmatprep.subr.mxu0 0.0
    %2177 = vmatpush1.msra.mxu0 0.0
    %2178 = vmatprep.subr.mxu0 0.0
    %2179 = vmatpush1.msra.mxu0 0.0
    %2180 = vmatprep.subr.mxu0 0.0
    %2181 = vmatpush1.msra.mxu0 0.0
    %2182 = vmatprep.subr.mxu0 0.0
    %2183 = vmatpush1.msra.mxu0 0.0
    %2184 = vmatprep.subr.mxu0 0.0
    %2185 = vmatpush1.msra.mxu0 0.0
    %2186 = vmatprep.subr.mxu0 0.0
    %2187 = vmatpush1.msra.mxu0 0.0
    %2188 = vmatprep.subr.mxu0 0.0
    %2189 = vmatpush1.msra.mxu0 0.0
    %2190 = vmatprep.subr.mxu0 0.0
    %2191 = vmatpush1.msra.mxu0 0.0
    %2192 = vmatprep.subr.mxu0 0.0
    %2193 = vmatpush1.msra.mxu0 0.0
    %2194 = vmatprep.subr.mxu0 0.0
    %2195 = vmatpush1.msra.mxu0 0.0
    %2196 = vmatprep.subr.mxu0 0.0
    %2197 = vmatpush1.msra.mxu0 0.0
    %2198 = vmatprep.subr.mxu0 0.0
    %2199 = vmatpush1.msra.mxu0 0.0
    %2200 = vmatprep.subr.mxu0 0.0
    %2201 = vmatpush1.msra.mxu0 0.0
    %2202 = vmatprep.subr.mxu0 0.0
    %2203 = vmatpush1.msra.mxu0 0.0
    %2204 = vmatprep.subr.mxu0 0.0
    %2205 = vmatpush1.msra.mxu0 0.0
    %2206 = vmatprep.subr.mxu0 0.0
    %2207 = vmatpush1.msra.mxu0 0.0
    %2208 = vmatprep.subr.mxu0 0.0
    %2209 = vmatpush1.msra.mxu0 0.0
    %2210 = vmatprep.subr.mxu0 0.0
    %2211 = vmatpush1.msra.mxu0 0.0
    %2212 = vmatprep.subr.mxu0 0.0
    %2213 = vmatpush1.msra.mxu0 0.0
    %2214 = vmatprep.subr.mxu0 0.0
    %2215 = vmatpush1.msra.mxu0 0.0
    %2216 = vmatprep.subr.mxu0 0.0
    %2217 = vmatpush1.msra.mxu0 0.0
    %2218 = vmatprep.mubr.f32.mxu0 0.0
    %2219 = vmatmul.mubr.f32.gmra.mrb[0].mxu0 %v2152
    %v2220 = vpop.f32.mrb[0].mxu0
    %v2221 = vadd.f32 0.0, %v2220
    %v2222 = vpop.f32.mrb[0].mxu0
    %2223 = vdwg.mxu0
    %v2225 = vsel %vm1300, %v2000, 0
    %2227 = vmatprep.subr.mxu0 0.0
    %2228 = vmatpush1.msra.mxu0 %v1231
    %2229 = vmatprep.subr.mxu0 0.0
    %2230 = vmatpush1.msra.mxu0 0.0
    %2231 = vmatprep.subr.mxu0 0.0
    %2232 = vmatpush1.msra.mxu0 0.0
    %2233 = vmatprep.subr.mxu0 0.0
    %2234 = vmatpush1.msra.mxu0 0.0
    %2235 = vmatprep.subr.mxu0 0.0
    %2236 = vmatpush1.msra.mxu0 0.0
    %2237 = vmatprep.subr.mxu0 0.0
    %2238 = vmatpush1.msra.mxu0 0.0
    %2239 = vmatprep.subr.mxu0 0.0
    %2240 = vmatpush1.msra.mxu0 0.0
    %2241 = vmatprep.subr.mxu0 0.0
    %2242 = vmatpush1.msra.mxu0 0.0
    %2243 = vmatprep.subr.mxu0 0.0
    %2244 = vmatpush1.msra.mxu0 0.0
    %2245 = vmatprep.subr.mxu0 0.0
    %2246 = vmatpush1.msra.mxu0 0.0
    %2247 = vmatprep.subr.mxu0 0.0
    %2248 = vmatpush1.msra.mxu0 0.0
    %2249 = vmatprep.subr.mxu0 0.0
    %2250 = vmatpush1.msra.mxu0 0.0
    %2251 = vmatprep.subr.mxu0 0.0
    %2252 = vmatpush1.msra.mxu0 0.0
    %2253 = vmatprep.subr.mxu0 0.0
    %2254 = vmatpush1.msra.mxu0 0.0
    %2255 = vmatprep.subr.mxu0 0.0
    %2256 = vmatpush1.msra.mxu0 0.0
    %2257 = vmatprep.subr.mxu0 0.0
    %2258 = vmatpush1.msra.mxu0 0.0
    %2259 = vmatprep.subr.mxu0 0.0
    %2260 = vmatpush1.msra.mxu0 0.0
    %2261 = vmatprep.subr.mxu0 0.0
    %2262 = vmatpush1.msra.mxu0 0.0
    %2263 = vmatprep.subr.mxu0 0.0
    %2264 = vmatpush1.msra.mxu0 0.0
    %2265 = vmatprep.subr.mxu0 0.0
    %2266 = vmatpush1.msra.mxu0 0.0
    %2267 = vmatprep.subr.mxu0 0.0
    %2268 = vmatpush1.msra.mxu0 0.0
    %2269 = vmatprep.subr.mxu0 0.0
    %2270 = vmatpush1.msra.mxu0 0.0
    %2271 = vmatprep.subr.mxu0 0.0
    %2272 = vmatpush1.msra.mxu0 0.0
    %2273 = vmatprep.subr.mxu0 0.0
    %2274 = vmatpush1.msra.mxu0 0.0
    %2275 = vmatprep.subr.mxu0 0.0
    %2276 = vmatpush1.msra.mxu0 0.0
    %2277 = vmatprep.subr.mxu0 0.0
    %2278 = vmatpush1.msra.mxu0 0.0
    %2279 = vmatprep.subr.mxu0 0.0
    %2280 = vmatpush1.msra.mxu0 0.0
    %2281 = vmatprep.subr.mxu0 0.0
    %2282 = vmatpush1.msra.mxu0 0.0
    %2283 = vmatprep.subr.mxu0 0.0
    %2284 = vmatpush1.msra.mxu0 0.0
    %2285 = vmatprep.subr.mxu0 0.0
    %2286 = vmatpush1.msra.mxu0 0.0
    %2287 = vmatprep.subr.mxu0 0.0
    %2288 = vmatpush1.msra.mxu0 0.0
    %2289 = vmatprep.subr.mxu0 0.0
    %2290 = vmatpush1.msra.mxu0 0.0
    %2291 = vmatprep.mubr.f32.mxu0 0.0
    %2292 = vmatmul.mubr.f32.gmra.mrb[0].mxu0 %v2225
    %v2293 = vpop.f32.mrb[0].mxu0
    %v2294 = vadd.f32 0.0, %v2293
    %v2295 = vpop.f32.mrb[0].mxu0
    %2296 = vdwg.mxu0
    %v2298 = vsel %vm1300, %v2001, 0
    %2300 = vmatprep.subr.mxu0 0.0
    %2301 = vmatpush1.msra.mxu0 %v1296
    %2302 = vmatprep.subr.mxu0 0.0
    %2303 = vmatpush1.msra.mxu0 0.0
    %2304 = vmatprep.subr.mxu0 0.0
    %2305 = vmatpush1.msra.mxu0 0.0
    %2306 = vmatprep.subr.mxu0 0.0
    %2307 = vmatpush1.msra.mxu0 0.0
    %2308 = vmatprep.subr.mxu0 0.0
    %2309 = vmatpush1.msra.mxu0 0.0
    %2310 = vmatprep.subr.mxu0 0.0
    %2311 = vmatpush1.msra.mxu0 0.0
    %2312 = vmatprep.subr.mxu0 0.0
    %2313 = vmatpush1.msra.mxu0 0.0
    %2314 = vmatprep.subr.mxu0 0.0
    %2315 = vmatpush1.msra.mxu0 0.0
    %2316 = vmatprep.subr.mxu0 0.0
    %2317 = vmatpush1.msra.mxu0 0.0
    %2318 = vmatprep.subr.mxu0 0.0
    %2319 = vmatpush1.msra.mxu0 0.0
    %2320 = vmatprep.subr.mxu0 0.0
    %2321 = vmatpush1.msra.mxu0 0.0
    %2322 = vmatprep.subr.mxu0 0.0
    %2323 = vmatpush1.msra.mxu0 0.0
    %2324 = vmatprep.subr.mxu0 0.0
    %2325 = vmatpush1.msra.mxu0 0.0
    %2326 = vmatprep.subr.mxu0 0.0
    %2327 = vmatpush1.msra.mxu0 0.0
    %2328 = vmatprep.subr.mxu0 0.0
    %2329 = vmatpush1.msra.mxu0 0.0
    %2330 = vmatprep.subr.mxu0 0.0
    %2331 = vmatpush1.msra.mxu0 0.0
    %2332 = vmatprep.subr.mxu0 0.0
    %2333 = vmatpush1.msra.mxu0 0.0
    %2334 = vmatprep.subr.mxu0 0.0
    %2335 = vmatpush1.msra.mxu0 0.0
    %2336 = vmatprep.subr.mxu0 0.0
    %2337 = vmatpush1.msra.mxu0 0.0
    %2338 = vmatprep.subr.mxu0 0.0
    %2339 = vmatpush1.msra.mxu0 0.0
    %2340 = vmatprep.subr.mxu0 0.0
    %2341 = vmatpush1.msra.mxu0 0.0
    %2342 = vmatprep.subr.mxu0 0.0
    %2343 = vmatpush1.msra.mxu0 0.0
    %2344 = vmatprep.subr.mxu0 0.0
    %2345 = vmatpush1.msra.mxu0 0.0
    %2346 = vmatprep.subr.mxu0 0.0
    %2347 = vmatpush1.msra.mxu0 0.0
    %2348 = vmatprep.subr.mxu0 0.0
    %2349 = vmatpush1.msra.mxu0 0.0
    %2350 = vmatprep.subr.mxu0 0.0
    %2351 = vmatpush1.msra.mxu0 0.0
    %2352 = vmatprep.subr.mxu0 0.0
    %2353 = vmatpush1.msra.mxu0 0.0
    %2354 = vmatprep.subr.mxu0 0.0
    %2355 = vmatpush1.msra.mxu0 0.0
    %2356 = vmatprep.subr.mxu0 0.0
    %2357 = vmatpush1.msra.mxu0 0.0
    %2358 = vmatprep.subr.mxu0 0.0
    %2359 = vmatpush1.msra.mxu0 0.0
    %2360 = vmatprep.subr.mxu0 0.0
    %2361 = vmatpush1.msra.mxu0 0.0
    %2362 = vmatprep.subr.mxu0 0.0
    %2363 = vmatpush1.msra.mxu0 0.0
    %2364 = vmatprep.mubr.f32.mxu0 0.0
    %2365 = vmatmul.mubr.f32.gmra.mrb[0].mxu0 %v2298
    %v2366 = vpop.f32.mrb[0].mxu0
    %v2367 = vadd.f32 0.0, %v2366
    %v2368 = vpop.f32.mrb[0].mxu0
    %2369 = vdwg.mxu0
    %v2371 = vsel %vm1300, %v2002, 0
    %2373 = vmatprep.subr.mxu0 0.0
    %2374 = vmatpush1.msra.mxu0 %v1297
    %2375 = vmatprep.subr.mxu0 0.0
    %2376 = vmatpush1.msra.mxu0 0.0
    %2377 = vmatprep.subr.mxu0 0.0
    %2378 = vmatpush1.msra.mxu0 0.0
    %2379 = vmatprep.subr.mxu0 0.0
    %2380 = vmatpush1.msra.mxu0 0.0
    %2381 = vmatprep.subr.mxu0 0.0
    %2382 = vmatpush1.msra.mxu0 0.0
    %2383 = vmatprep.subr.mxu0 0.0
    %2384 = vmatpush1.msra.mxu0 0.0
    %2385 = vmatprep.subr.mxu0 0.0
    %2386 = vmatpush1.msra.mxu0 0.0
    %2387 = vmatprep.subr.mxu0 0.0
    %2388 = vmatpush1.msra.mxu0 0.0
    %2389 = vmatprep.subr.mxu0 0.0
    %2390 = vmatpush1.msra.mxu0 0.0
    %2391 = vmatprep.subr.mxu0 0.0
    %2392 = vmatpush1.msra.mxu0 0.0
    %2393 = vmatprep.subr.mxu0 0.0
    %2394 = vmatpush1.msra.mxu0 0.0
    %2395 = vmatprep.subr.mxu0 0.0
    %2396 = vmatpush1.msra.mxu0 0.0
    %2397 = vmatprep.subr.mxu0 0.0
    %2398 = vmatpush1.msra.mxu0 0.0
    %2399 = vmatprep.subr.mxu0 0.0
    %2400 = vmatpush1.msra.mxu0 0.0
    %2401 = vmatprep.subr.mxu0 0.0
    %2402 = vmatpush1.msra.mxu0 0.0
    %2403 = vmatprep.subr.mxu0 0.0
    %2404 = vmatpush1.msra.mxu0 0.0
    %2405 = vmatprep.subr.mxu0 0.0
    %2406 = vmatpush1.msra.mxu0 0.0
    %2407 = vmatprep.subr.mxu0 0.0
    %2408 = vmatpush1.msra.mxu0 0.0
    %2409 = vmatprep.subr.mxu0 0.0
    %2410 = vmatpush1.msra.mxu0 0.0
    %2411 = vmatprep.subr.mxu0 0.0
    %2412 = vmatpush1.msra.mxu0 0.0
    %2413 = vmatprep.subr.mxu0 0.0
    %2414 = vmatpush1.msra.mxu0 0.0
    %2415 = vmatprep.subr.mxu0 0.0
    %2416 = vmatpush1.msra.mxu0 0.0
    %2417 = vmatprep.subr.mxu0 0.0
    %2418 = vmatpush1.msra.mxu0 0.0
    %2419 = vmatprep.subr.mxu0 0.0
    %2420 = vmatpush1.msra.mxu0 0.0
    %2421 = vmatprep.subr.mxu0 0.0
    %2422 = vmatpush1.msra.mxu0 0.0
    %2423 = vmatprep.subr.mxu0 0.0
    %2424 = vmatpush1.msra.mxu0 0.0
    %2425 = vmatprep.subr.mxu0 0.0
    %2426 = vmatpush1.msra.mxu0 0.0
    %2427 = vmatprep.subr.mxu0 0.0
    %2428 = vmatpush1.msra.mxu0 0.0
    %2429 = vmatprep.subr.mxu0 0.0
    %2430 = vmatpush1.msra.mxu0 0.0
    %2431 = vmatprep.subr.mxu0 0.0
    %2432 = vmatpush1.msra.mxu0 0.0
    %2433 = vmatprep.subr.mxu0 0.0
    %2434 = vmatpush1.msra.mxu0 0.0
    %2435 = vmatprep.subr.mxu0 0.0
    %2436 = vmatpush1.msra.mxu0 0.0
    %2437 = vmatprep.mubr.f32.mxu0 0.0
    %2438 = vmatmul.mubr.f32.gmra.mrb[0].mxu0 %v2371
    %v2439 = vpop.f32.mrb[0].mxu0
    %v2440 = vadd.f32 0.0, %v2439
    %v2441 = vpop.f32.mrb[0].mxu0
    %2442 = vdwg.mxu0
    %v2444 = vsel %vm1300, %v2003, 0
    %2446 = vmatprep.subr.mxu0 0.0
    %2447 = vmatpush1.msra.mxu0 %v1298
    %2448 = vmatprep.subr.mxu0 0.0
    %2449 = vmatpush1.msra.mxu0 0.0
    %2450 = vmatprep.subr.mxu0 0.0
    %2451 = vmatpush1.msra.mxu0 0.0
    %2452 = vmatprep.subr.mxu0 0.0
    %2453 = vmatpush1.msra.mxu0 0.0
    %2454 = vmatprep.subr.mxu0 0.0
    %2455 = vmatpush1.msra.mxu0 0.0
    %2456 = vmatprep.subr.mxu0 0.0
    %2457 = vmatpush1.msra.mxu0 0.0
    %2458 = vmatprep.subr.mxu0 0.0
    %2459 = vmatpush1.msra.mxu0 0.0
    %2460 = vmatprep.subr.mxu0 0.0
    %2461 = vmatpush1.msra.mxu0 0.0
    %2462 = vmatprep.subr.mxu0 0.0
    %2463 = vmatpush1.msra.mxu0 0.0
    %2464 = vmatprep.subr.mxu0 0.0
    %2465 = vmatpush1.msra.mxu0 0.0
    %2466 = vmatprep.subr.mxu0 0.0
    %2467 = vmatpush1.msra.mxu0 0.0
    %2468 = vmatprep.subr.mxu0 0.0
    %2469 = vmatpush1.msra.mxu0 0.0
    %2470 = vmatprep.subr.mxu0 0.0
    %2471 = vmatpush1.msra.mxu0 0.0
    %2472 = vmatprep.subr.mxu0 0.0
    %2473 = vmatpush1.msra.mxu0 0.0
    %2474 = vmatprep.subr.mxu0 0.0
    %2475 = vmatpush1.msra.mxu0 0.0
    %2476 = vmatprep.subr.mxu0 0.0
    %2477 = vmatpush1.msra.mxu0 0.0
    %2478 = vmatprep.subr.mxu0 0.0
    %2479 = vmatpush1.msra.mxu0 0.0
    %2480 = vmatprep.subr.mxu0 0.0
    %2481 = vmatpush1.msra.mxu0 0.0
    %2482 = vmatprep.subr.mxu0 0.0
    %2483 = vmatpush1.msra.mxu0 0.0
    %2484 = vmatprep.subr.mxu0 0.0
    %2485 = vmatpush1.msra.mxu0 0.0
    %2486 = vmatprep.subr.mxu0 0.0
    %2487 = vmatpush1.msra.mxu0 0.0
    %2488 = vmatprep.subr.mxu0 0.0
    %2489 = vmatpush1.msra.mxu0 0.0
    %2490 = vmatprep.subr.mxu0 0.0
    %2491 = vmatpush1.msra.mxu0 0.0
    %2492 = vmatprep.subr.mxu0 0.0
    %2493 = vmatpush1.msra.mxu0 0.0
    %2494 = vmatprep.subr.mxu0 0.0
    %2495 = vmatpush1.msra.mxu0 0.0
    %2496 = vmatprep.subr.mxu0 0.0
    %2497 = vmatpush1.msra.mxu0 0.0
    %2498 = vmatprep.subr.mxu0 0.0
    %2499 = vmatpush1.msra.mxu0 0.0
    %2500 = vmatprep.subr.mxu0 0.0
    %2501 = vmatpush1.msra.mxu0 0.0
    %2502 = vmatprep.subr.mxu0 0.0
    %2503 = vmatpush1.msra.mxu0 0.0
    %2504 = vmatprep.subr.mxu0 0.0
    %2505 = vmatpush1.msra.mxu0 0.0
    %2506 = vmatprep.subr.mxu0 0.0
    %2507 = vmatpush1.msra.mxu0 0.0
    %2508 = vmatprep.subr.mxu0 0.0
    %2509 = vmatpush1.msra.mxu0 0.0
    %2510 = vmatprep.mubr.f32.mxu0 0.0
    %2511 = vmatmul.mubr.f32.gmra.mrb[0].mxu0 %v2444
    %v2512 = vpop.f32.mrb[0].mxu0
    %v2513 = vadd.f32 0.0, %v2512
    %v2514 = vpop.f32.mrb[0].mxu0
    %2515 = vdwg.mxu0
    %v2517 = vsel %vm1300, %v2004, 0
    %2519 = vmatprep.subr.mxu0 0.0
    %2520 = vmatpush1.msra.mxu0 %v1299
    %2521 = vmatprep.subr.mxu0 0.0
    %2522 = vmatpush1.msra.mxu0 0.0
    %2523 = vmatprep.subr.mxu0 0.0
    %2524 = vmatpush1.msra.mxu0 0.0
    %2525 = vmatprep.subr.mxu0 0.0
    %2526 = vmatpush1.msra.mxu0 0.0
    %2527 = vmatprep.subr.mxu0 0.0
    %2528 = vmatpush1.msra.mxu0 0.0
    %2529 = vmatprep.subr.mxu0 0.0
    %2530 = vmatpush1.msra.mxu0 0.0
    %2531 = vmatprep.subr.mxu0 0.0
    %2532 = vmatpush1.msra.mxu0 0.0
    %2533 = vmatprep.subr.mxu0 0.0
    %2534 = vmatpush1.msra.mxu0 0.0
    %2535 = vmatprep.subr.mxu0 0.0
    %2536 = vmatpush1.msra.mxu0 0.0
    %2537 = vmatprep.subr.mxu0 0.0
    %2538 = vmatpush1.msra.mxu0 0.0
    %2539 = vmatprep.subr.mxu0 0.0
    %2540 = vmatpush1.msra.mxu0 0.0
    %2541 = vmatprep.subr.mxu0 0.0
    %2542 = vmatpush1.msra.mxu0 0.0
    %2543 = vmatprep.subr.mxu0 0.0
    %2544 = vmatpush1.msra.mxu0 0.0
    %2545 = vmatprep.subr.mxu0 0.0
    %2546 = vmatpush1.msra.mxu0 0.0
    %2547 = vmatprep.subr.mxu0 0.0
    %2548 = vmatpush1.msra.mxu0 0.0
    %2549 = vmatprep.subr.mxu0 0.0
    %2550 = vmatpush1.msra.mxu0 0.0
    %2551 = vmatprep.subr.mxu0 0.0
    %2552 = vmatpush1.msra.mxu0 0.0
    %2553 = vmatprep.subr.mxu0 0.0
    %2554 = vmatpush1.msra.mxu0 0.0
    %2555 = vmatprep.subr.mxu0 0.0
    %2556 = vmatpush1.msra.mxu0 0.0
    %2557 = vmatprep.subr.mxu0 0.0
    %2558 = vmatpush1.msra.mxu0 0.0
    %2559 = vmatprep.subr.mxu0 0.0
    %2560 = vmatpush1.msra.mxu0 0.0
    %2561 = vmatprep.subr.mxu0 0.0
    %2562 = vmatpush1.msra.mxu0 0.0
    %2563 = vmatprep.subr.mxu0 0.0
    %2564 = vmatpush1.msra.mxu0 0.0
    %2565 = vmatprep.subr.mxu0 0.0
    %2566 = vmatpush1.msra.mxu0 0.0
    %2567 = vmatprep.subr.mxu0 0.0
    %2568 = vmatpush1.msra.mxu0 0.0
    %2569 = vmatprep.subr.mxu0 0.0
    %2570 = vmatpush1.msra.mxu0 0.0
    %2571 = vmatprep.subr.mxu0 0.0
    %2572 = vmatpush1.msra.mxu0 0.0
    %2573 = vmatprep.subr.mxu0 0.0
    %2574 = vmatpush1.msra.mxu0 0.0
    %2575 = vmatprep.subr.mxu0 0.0
    %2576 = vmatpush1.msra.mxu0 0.0
    %2577 = vmatprep.subr.mxu0 0.0
    %2578 = vmatpush1.msra.mxu0 0.0
    %2579 = vmatprep.subr.mxu0 0.0
    %2580 = vmatpush1.msra.mxu0 0.0
    %2581 = vmatprep.subr.mxu0 0.0
    %2582 = vmatpush1.msra.mxu0 0.0
    %2583 = vmatprep.mubr.f32.mxu0 0.0
    %2584 = vmatmul.mubr.f32.gmra.mrb[0].mxu0 %v2517
    %v2585 = vpop.f32.mrb[0].mxu0
    %v2586 = vadd.f32 0.0, %v2585
    %v2587 = vpop.f32.mrb[0].mxu0
    %2588 = vdwg.mxu0
    %v2589 = vcombine.low %v2075, %v2221
    %v2590 = vcombine.high %v2075, %v2221
    %v2592 = vunpack.c.l.s4 1983009808
    %v2593 = vunpack.c.0.s8 %v2592
    %v2594 = vlaneseq
    %v2595 = vshrl.u32 %v2594, 7
    %v2596 = vsub.s32 %v2593, %v2595
    %v2597 = vrot.slane %v2589, %v2596
    %v2599 = vunpack.c.l.s4 1983009808
    %v2600 = vunpack.c.0.s8 %v2599
    %v2601 = vlaneseq
    %v2602 = vshrl.u32 %v2601, 7
    %v2603 = vsub.s32 %v2600, %v2602
    %v2604 = vrot.slane %v2590, %v2603
    %v2605 = vcombine.low %v2148, %v2294
    %v2606 = vcombine.high %v2148, %v2294
    %v2608 = vunpack.c.l.s4 1983009808
    %v2609 = vunpack.c.0.s8 %v2608
    %v2610 = vlaneseq
    %v2611 = vshrl.u32 %v2610, 7
    %v2612 = vsub.s32 %v2609, %v2611
    %v2613 = vrot.slane %v2605, %v2612
    %v2615 = vunpack.c.l.s4 1983009808
    %v2616 = vunpack.c.0.s8 %v2615
    %v2617 = vlaneseq
    %v2618 = vshrl.u32 %v2617, 7
    %v2619 = vsub.s32 %v2616, %v2618
    %v2620 = vrot.slane %v2606, %v2619
    %v2621 = vcombine.low %v2597, %v2613
    %v2622 = vcombine.high %v2597, %v2613
    %v2624 = vunpack.c.l.s4 1934713408
    %v2625 = vunpack.c.0.s8 %v2624
    %v2626 = vlaneseq
    %v2627 = vshrl.u32 %v2626, 7
    %v2628 = vsub.s32 %v2625, %v2627
    %v2629 = vrot.slane %v2621, %v2628
    %v2631 = vunpack.c.l.s4 1934713408
    %v2632 = vunpack.c.0.s8 %v2631
    %v2633 = vlaneseq
    %v2634 = vshrl.u32 %v2633, 7
    %v2635 = vsub.s32 %v2632, %v2634
    %v2636 = vrot.slane %v2622, %v2635
    %v2637 = vcombine.low %v2604, %v2620
    %v2638 = vcombine.high %v2604, %v2620
    %v2640 = vunpack.c.l.s4 1934713408
    %v2641 = vunpack.c.0.s8 %v2640
    %v2642 = vlaneseq
    %v2643 = vshrl.u32 %v2642, 7
    %v2644 = vsub.s32 %v2641, %v2643
    %v2645 = vrot.slane %v2637, %v2644
    %v2647 = vunpack.c.l.s4 1934713408
    %v2648 = vunpack.c.0.s8 %v2647
    %v2649 = vlaneseq
    %v2650 = vshrl.u32 %v2649, 7
    %v2651 = vsub.s32 %v2648, %v2650
    %v2652 = vrot.slane %v2638, %v2651
    %v2653 = vcombine.high %v2629, 0.0
    %v2654 = vcombine.high %v2636, 0.0
    %v2655 = vcombine.high %v2645, 0.0
    %v2656 = vcombine.high %v2652, 0.0
    %v2657 = vcombine.low %v2367, %v2513
    %v2658 = vcombine.high %v2367, %v2513
    %v2660 = vunpack.c.l.s4 1983009808
    %v2661 = vunpack.c.0.s8 %v2660
    %v2662 = vlaneseq
    %v2663 = vshrl.u32 %v2662, 7
    %v2664 = vsub.s32 %v2661, %v2663
    %v2665 = vrot.slane %v2657, %v2664
    %v2667 = vunpack.c.l.s4 1983009808
    %v2668 = vunpack.c.0.s8 %v2667
    %v2669 = vlaneseq
    %v2670 = vshrl.u32 %v2669, 7
    %v2671 = vsub.s32 %v2668, %v2670
    %v2672 = vrot.slane %v2658, %v2671
    %v2673 = vcombine.low %v2440, %v2586
    %v2674 = vcombine.high %v2440, %v2586
    %v2676 = vunpack.c.l.s4 1983009808
    %v2677 = vunpack.c.0.s8 %v2676
    %v2678 = vlaneseq
    %v2679 = vshrl.u32 %v2678, 7
    %v2680 = vsub.s32 %v2677, %v2679
    %v2681 = vrot.slane %v2673, %v2680
    %v2683 = vunpack.c.l.s4 1983009808
    %v2684 = vunpack.c.0.s8 %v2683
    %v2685 = vlaneseq
    %v2686 = vshrl.u32 %v2685, 7
    %v2687 = vsub.s32 %v2684, %v2686
    %v2688 = vrot.slane %v2674, %v2687
    %v2689 = vcombine.low %v2665, %v2681
    %v2690 = vcombine.high %v2665, %v2681
    %v2692 = vunpack.c.l.s4 1934713408
    %v2693 = vunpack.c.0.s8 %v2692
    %v2694 = vlaneseq
    %v2695 = vshrl.u32 %v2694, 7
    %v2696 = vsub.s32 %v2693, %v2695
    %v2697 = vrot.slane %v2689, %v2696
    %v2699 = vunpack.c.l.s4 1934713408
    %v2700 = vunpack.c.0.s8 %v2699
    %v2701 = vlaneseq
    %v2702 = vshrl.u32 %v2701, 7
    %v2703 = vsub.s32 %v2700, %v2702
    %v2704 = vrot.slane %v2690, %v2703
    %v2705 = vcombine.low %v2672, %v2688
    %v2706 = vcombine.high %v2672, %v2688
    %v2708 = vunpack.c.l.s4 1934713408
    %v2709 = vunpack.c.0.s8 %v2708
    %v2710 = vlaneseq
    %v2711 = vshrl.u32 %v2710, 7
    %v2712 = vsub.s32 %v2709, %v2711
    %v2713 = vrot.slane %v2705, %v2712
    %v2715 = vunpack.c.l.s4 1934713408
    %v2716 = vunpack.c.0.s8 %v2715
    %v2717 = vlaneseq
    %v2718 = vshrl.u32 %v2717, 7
    %v2719 = vsub.s32 %v2716, %v2718
    %v2720 = vrot.slane %v2706, %v2719
    %v2721 = vcombine.high %v2697, 0.0
    %v2722 = vcombine.high %v2704, 0.0
    %v2723 = vcombine.high %v2713, 0.0
    %v2724 = vcombine.high %v2720, 0.0
    %v2725 = vcombine.low %v2629, %v2636
    %v2727 = vunpack.c.l.s4 1983009808
    %v2728 = vunpack.c.0.s8 %v2727
    %v2729 = vlaneseq
    %v2730 = vshrl.u32 %v2729, 7
    %v2731 = vsub.s32 %v2728, %v2730
    %v2732 = vrot.slane %v2725, %v2731
    %v2733 = vcombine.low %v2653, %v2654
    %v2735 = vunpack.c.l.s4 1983009808
    %v2736 = vunpack.c.0.s8 %v2735
    %v2737 = vlaneseq
    %v2738 = vshrl.u32 %v2737, 7
    %v2739 = vsub.s32 %v2736, %v2738
    %v2740 = vrot.slane %v2733, %v2739
    %v2741 = vcombine.low %v2645, %v2652
    %v2743 = vunpack.c.l.s4 1983009808
    %v2744 = vunpack.c.0.s8 %v2743
    %v2745 = vlaneseq
    %v2746 = vshrl.u32 %v2745, 7
    %v2747 = vsub.s32 %v2744, %v2746
    %v2748 = vrot.slane %v2741, %v2747
    %v2749 = vcombine.low %v2655, %v2656
    %v2751 = vunpack.c.l.s4 1983009808
    %v2752 = vunpack.c.0.s8 %v2751
    %v2753 = vlaneseq
    %v2754 = vshrl.u32 %v2753, 7
    %v2755 = vsub.s32 %v2752, %v2754
    %v2756 = vrot.slane %v2749, %v2755
    %v2757 = vcombine.low %v2732, %v2740
    %v2758 = vcombine.high %v2732, %v2740
    %v2760 = vunpack.c.l.s4 1934713408
    %v2761 = vunpack.c.0.s8 %v2760
    %v2762 = vlaneseq
    %v2763 = vshrl.u32 %v2762, 7
    %v2764 = vsub.s32 %v2761, %v2763
    %v2765 = vrot.slane %v2757, %v2764
    %v2767 = vunpack.c.l.s4 1934713408
    %v2768 = vunpack.c.0.s8 %v2767
    %v2769 = vlaneseq
    %v2770 = vshrl.u32 %v2769, 7
    %v2771 = vsub.s32 %v2768, %v2770
    %v2772 = vrot.slane %v2758, %v2771
    %v2773 = vcombine.low %v2748, %v2756
    %v2774 = vcombine.high %v2748, %v2756
    %v2776 = vunpack.c.l.s4 1934713408
    %v2777 = vunpack.c.0.s8 %v2776
    %v2778 = vlaneseq
    %v2779 = vshrl.u32 %v2778, 7
    %v2780 = vsub.s32 %v2777, %v2779
    %v2781 = vrot.slane %v2773, %v2780
    %v2783 = vunpack.c.l.s4 1934713408
    %v2784 = vunpack.c.0.s8 %v2783
    %v2785 = vlaneseq
    %v2786 = vshrl.u32 %v2785, 7
    %v2787 = vsub.s32 %v2784, %v2786
    %v2788 = vrot.slane %v2774, %v2787
    %v2789 = vcombine.low %v2765, %v2781
    %v2790 = vcombine.high %v2765, %v2781
    %v2791 = vcombine.low %v2772, %v2788
    %v2792 = vcombine.high %v2772, %v2788
    %v2793 = vcombine.low %v2697, %v2704
    %v2795 = vunpack.c.l.s4 1983009808
    %v2796 = vunpack.c.0.s8 %v2795
    %v2797 = vlaneseq
    %v2798 = vshrl.u32 %v2797, 7
    %v2799 = vsub.s32 %v2796, %v2798
    %v2800 = vrot.slane %v2793, %v2799
    %v2801 = vcombine.low %v2721, %v2722
    %v2803 = vunpack.c.l.s4 1983009808
    %v2804 = vunpack.c.0.s8 %v2803
    %v2805 = vlaneseq
    %v2806 = vshrl.u32 %v2805, 7
    %v2807 = vsub.s32 %v2804, %v2806
    %v2808 = vrot.slane %v2801, %v2807
    %v2809 = vcombine.low %v2713, %v2720
    %v2811 = vunpack.c.l.s4 1983009808
    %v2812 = vunpack.c.0.s8 %v2811
    %v2813 = vlaneseq
    %v2814 = vshrl.u32 %v2813, 7
    %v2815 = vsub.s32 %v2812, %v2814
    %v2816 = vrot.slane %v2809, %v2815
    %v2817 = vcombine.low %v2723, %v2724
    %v2819 = vunpack.c.l.s4 1983009808
    %v2820 = vunpack.c.0.s8 %v2819
    %v2821 = vlaneseq
    %v2822 = vshrl.u32 %v2821, 7
    %v2823 = vsub.s32 %v2820, %v2822
    %v2824 = vrot.slane %v2817, %v2823
    %v2825 = vcombine.low %v2800, %v2808
    %v2826 = vcombine.high %v2800, %v2808
    %v2828 = vunpack.c.l.s4 1934713408
    %v2829 = vunpack.c.0.s8 %v2828
    %v2830 = vlaneseq
    %v2831 = vshrl.u32 %v2830, 7
    %v2832 = vsub.s32 %v2829, %v2831
    %v2833 = vrot.slane %v2825, %v2832
    %v2835 = vunpack.c.l.s4 1934713408
    %v2836 = vunpack.c.0.s8 %v2835
    %v2837 = vlaneseq
    %v2838 = vshrl.u32 %v2837, 7
    %v2839 = vsub.s32 %v2836, %v2838
    %v2840 = vrot.slane %v2826, %v2839
    %v2841 = vcombine.low %v2816, %v2824
    %v2842 = vcombine.high %v2816, %v2824
    %v2844 = vunpack.c.l.s4 1934713408
    %v2845 = vunpack.c.0.s8 %v2844
    %v2846 = vlaneseq
    %v2847 = vshrl.u32 %v2846, 7
    %v2848 = vsub.s32 %v2845, %v2847
    %v2849 = vrot.slane %v2841, %v2848
    %v2851 = vunpack.c.l.s4 1934713408
    %v2852 = vunpack.c.0.s8 %v2851
    %v2853 = vlaneseq
    %v2854 = vshrl.u32 %v2853, 7
    %v2855 = vsub.s32 %v2852, %v2854
    %v2856 = vrot.slane %v2842, %v2855
    %v2857 = vcombine.low %v2833, %v2849
    %v2858 = vcombine.high %v2833, %v2849
    %v2859 = vcombine.low %v2840, %v2856
    %v2860 = vcombine.high %v2840, %v2856
    %2863 = vrot.lane.b32.xlu0 %v2790, 8
    %v2864 = vpop.permute.xlu0 %2863
    %2865 = vrot.lane.b32.xlu0 %v2858, 8
    %v2866 = vpop.permute.xlu0 %2865
    %2871 = vrot.lane.b32.xlu0 %v2791, 16
    %v2872 = vpop.permute.xlu0 %2871
    %2873 = vrot.lane.b32.xlu0 %v2859, 16
    %v2874 = vpop.permute.xlu0 %2873
    %2879 = vrot.lane.b32.xlu0 %v2792, 24
    %v2880 = vpop.permute.xlu0 %2879
    %2881 = vrot.lane.b32.xlu0 %v2860, 24
    %v2882 = vpop.permute.xlu0 %2881
    %v2885 = vsel %vm1300, %v2789, %v2864
    %v2886 = vsel %vm1300, %v2857, %v2866
    %vm2887 = vcmask 130048
    %v2888 = vsel %vm2887, %v2885, %v2872
    %v2889 = vsel %vm2887, %v2886, %v2874
    %vm2890 = vcmask 195584
    %v2891 = vsel %vm2890, %v2888, %v2880
    %v2892 = vsel %vm2890, %v2889, %v2882
    %s2893 = scalar_lea.vmem %s2, 64
    %v2894 = vld [vmem:[%s2893] sm:$0xff]
    %v2895 = vld [vmem:[%s2893 + $0x8] sm:$0xff]
    %v2896 = vld [vmem:[%s2893 + $0x10] sm:$0xff]
    %v2897 = vld [vmem:[%s2893 + $0x18] sm:$0xff]
    %v2898 = vlaneseq
    %v2899 = vshrl.u32 %v2898, 7
    %v2900 = vsub.s32 2, %v2899
    %v2901 = vrot.slane %v105, %v2900
    %v2903 = vsel %vm115, %v2891, 0
    %v2906 = vsel %vm115, %v2892, 0
    %2908 = vmatprep.subr.mxu0 0.0
    %2909 = vmatpush1.msra.mxu0 %v2894
    %2910 = vmatprep.subr.mxu0 0.0
    %2911 = vmatpush1.msra.mxu0 %v2895
    %2912 = vmatprep.subr.mxu0 0.0
    %2913 = vmatpush1.msra.mxu0 %v2896
    %2914 = vmatprep.subr.mxu0 0.0
    %2915 = vmatpush1.msra.mxu0 %v2897
    %2916 = vmatprep.subr.mxu0 0.0
    %2917 = vmatpush1.msra.mxu0 0.0
    %2918 = vmatprep.subr.mxu0 0.0
    %2919 = vmatpush1.msra.mxu0 0.0
    %2920 = vmatprep.subr.mxu0 0.0
    %2921 = vmatpush1.msra.mxu0 0.0
    %2922 = vmatprep.subr.mxu0 0.0
    %2923 = vmatpush1.msra.mxu0 0.0
    %2924 = vmatprep.subr.mxu0 0.0
    %2925 = vmatpush1.msra.mxu0 0.0
    %2926 = vmatprep.subr.mxu0 0.0
    %2927 = vmatpush1.msra.mxu0 0.0
    %2928 = vmatprep.subr.mxu0 0.0
    %2929 = vmatpush1.msra.mxu0 0.0
    %2930 = vmatprep.subr.mxu0 0.0
    %2931 = vmatpush1.msra.mxu0 0.0
    %2932 = vmatprep.subr.mxu0 0.0
    %2933 = vmatpush1.msra.mxu0 0.0
    %2934 = vmatprep.subr.mxu0 0.0
    %2935 = vmatpush1.msra.mxu0 0.0
    %2936 = vmatprep.subr.mxu0 0.0
    %2937 = vmatpush1.msra.mxu0 0.0
    %2938 = vmatprep.subr.mxu0 0.0
    %2939 = vmatpush1.msra.mxu0 0.0
    %2940 = vmatprep.subr.mxu0 0.0
    %2941 = vmatpush1.msra.mxu0 0.0
    %2942 = vmatprep.subr.mxu0 0.0
    %2943 = vmatpush1.msra.mxu0 0.0
    %2944 = vmatprep.subr.mxu0 0.0
    %2945 = vmatpush1.msra.mxu0 0.0
    %2946 = vmatprep.subr.mxu0 0.0
    %2947 = vmatpush1.msra.mxu0 0.0
    %2948 = vmatprep.subr.mxu0 0.0
    %2949 = vmatpush1.msra.mxu0 0.0
    %2950 = vmatprep.subr.mxu0 0.0
    %2951 = vmatpush1.msra.mxu0 0.0
    %2952 = vmatprep.subr.mxu0 0.0
    %2953 = vmatpush1.msra.mxu0 0.0
    %2954 = vmatprep.subr.mxu0 0.0
    %2955 = vmatpush1.msra.mxu0 0.0
    %2956 = vmatprep.subr.mxu0 0.0
    %2957 = vmatpush1.msra.mxu0 0.0
    %2958 = vmatprep.subr.mxu0 0.0
    %2959 = vmatpush1.msra.mxu0 0.0
    %2960 = vmatprep.subr.mxu0 0.0
    %2961 = vmatpush1.msra.mxu0 0.0
    %2962 = vmatprep.subr.mxu0 0.0
    %2963 = vmatpush1.msra.mxu0 0.0
    %2964 = vmatprep.subr.mxu0 0.0
    %2965 = vmatpush1.msra.mxu0 0.0
    %2966 = vmatprep.subr.mxu0 0.0
    %2967 = vmatpush1.msra.mxu0 0.0
    %2968 = vmatprep.subr.mxu0 0.0
    %2969 = vmatpush1.msra.mxu0 0.0
    %2970 = vmatprep.subr.mxu0 0.0
    %2971 = vmatpush1.msra.mxu0 0.0
    %2972 = vmatprep.mubr.f32.mxu0 0.0
    %2973 = vmatmul.mubr.f32.gmra.mrb[0].mxu0 %v2903
    %v2974 = vpop.f32.mrb[0].mxu0
    %v2975 = vadd.f32 %v2901, %v2974
    %v2976 = vpop.f32.mrb[0].mxu0
    %2977 = vmatprep.mubr.f32.mxu0 0.0
    %2978 = vmatmul.mubr.f32.gmra.mrb[0].mxu0 %v2906
    %v2979 = vpop.f32.mrb[0].mxu0
    %v2980 = vadd.f32 %v2901, %v2979
    %v2981 = vpop.f32.mrb[0].mxu0
    %2982 = vdwg.mxu0
    %v2983 = vadd.f32 %v236, %v2975
    %v2984 = vadd.f32 %v237, %v2980
    %v2985 = vsel %vm115, %v2983, 0.0
    %2986 = vadd.xlane.f32.xlu0 %v2985
    %v2987 = vpop.xlane.xlu0 %2986
    %v2988 = vsel %vm115, %v2984, 0.0
    %2989 = vadd.xlane.f32.xlu0 %v2988
    %v2990 = vpop.xlane.xlu0 %2989
    %v2991 = vmul.f32 %v2987, %v205
    %v2992 = vmul.f32 %v2990, %v205
    %v2993 = vsub.f32 %v2983, %v2991
    %v2994 = vsub.f32 %v2984, %v2992
    %v2995 = vmul.f32 %v2993, %v2993
    %v2996 = vmul.f32 %v2994, %v2994
    %v2997 = vsel %vm115, %v2995, 0.0
    %2998 = vadd.xlane.f32.xlu0 %v2997
    %v2999 = vpop.xlane.xlu0 %2998
    %v3000 = vsel %vm115, %v2996, 0.0
    %3001 = vadd.xlane.f32.xlu0 %v3000
    %v3002 = vpop.xlane.xlu0 %3001
    %v3003 = vmul.f32 %v2999, %v205
    %v3004 = vmul.f32 %v3002, %v205
    %v3005 = vadd.f32 %v3003, 1e-05
    %v3006 = vadd.f32 %v3004, 1e-05
    %v3007 = vrsqrt.pop %v3005
    %v3008 = vrsqrt.pop %v3006
    %v3009 = vmul.f32 %v2993, %v3007
    %v3010 = vmul.f32 %v2994, %v3008
    %v3011 = vlaneseq
    %v3012 = vshrl.u32 %v3011, 7
    %v3013 = vsub.s32 5, %v3012
    %v3014 = vrot.slane %v105, %v3013
    %v3015 = vmul.f32 %v3009, %v3014
    %v3016 = vmul.f32 %v3010, %v3014
    %v3017 = vlaneseq
    %v3018 = vshrl.u32 %v3017, 7
    %v3019 = vsub.s32 6, %v3018
    %v3020 = vrot.slane %v105, %v3019
    %v3021 = vadd.f32 %v3015, %v3020
    %v3022 = vadd.f32 %v3016, %v3020
    %v3023 = vld [vmem:[#allocation10] sm:$0xff]
    %v3024 = vld [vmem:[#allocation10 + $0x8] sm:$0xff]
    %v3025 = vld [vmem:[#allocation10 + $0x10] sm:$0xff]
    %v3026 = vld [vmem:[#allocation10 + $0x18] sm:$0xff]
    %v3027 = vld [vmem:[%s7] sm:$0x1]
    %v3029 = vlaneseq
    %v3030 = vshrl.u32 %v3029, 7
    %v3031 = vsub.s32 0, %v3030
    %v3032 = vrot.slane %v3027, %v3031
    %v3035 = vsel %vm115, %v3021, 0
    %v3038 = vsel %vm115, %v3022, 0
    %3040 = vmatprep.subr.mxu0 0.0
    %3041 = vmatpush1.msra.mxu0 %v3023
    %3042 = vmatprep.subr.mxu0 0.0
    %3043 = vmatpush1.msra.mxu0 %v3024
    %3044 = vmatprep.subr.mxu0 0.0
    %3045 = vmatpush1.msra.mxu0 %v3025
    %3046 = vmatprep.subr.mxu0 0.0
    %3047 = vmatpush1.msra.mxu0 %v3026
    %3048 = vmatprep.subr.mxu0 0.0
    %3049 = vmatpush1.msra.mxu0 0.0
    %3050 = vmatprep.subr.mxu0 0.0
    %3051 = vmatpush1.msra.mxu0 0.0
    %3052 = vmatprep.subr.mxu0 0.0
    %3053 = vmatpush1.msra.mxu0 0.0
    %3054 = vmatprep.subr.mxu0 0.0
    %3055 = vmatpush1.msra.mxu0 0.0
    %3056 = vmatprep.subr.mxu0 0.0
    %3057 = vmatpush1.msra.mxu0 0.0
    %3058 = vmatprep.subr.mxu0 0.0
    %3059 = vmatpush1.msra.mxu0 0.0
    %3060 = vmatprep.subr.mxu0 0.0
    %3061 = vmatpush1.msra.mxu0 0.0
    %3062 = vmatprep.subr.mxu0 0.0
    %3063 = vmatpush1.msra.mxu0 0.0
    %3064 = vmatprep.subr.mxu0 0.0
    %3065 = vmatpush1.msra.mxu0 0.0
    %3066 = vmatprep.subr.mxu0 0.0
    %3067 = vmatpush1.msra.mxu0 0.0
    %3068 = vmatprep.subr.mxu0 0.0
    %3069 = vmatpush1.msra.mxu0 0.0
    %3070 = vmatprep.subr.mxu0 0.0
    %3071 = vmatpush1.msra.mxu0 0.0
    %3072 = vmatprep.subr.mxu0 0.0
    %3073 = vmatpush1.msra.mxu0 0.0
    %3074 = vmatprep.subr.mxu0 0.0
    %3075 = vmatpush1.msra.mxu0 0.0
    %3076 = vmatprep.subr.mxu0 0.0
    %3077 = vmatpush1.msra.mxu0 0.0
    %3078 = vmatprep.subr.mxu0 0.0
    %3079 = vmatpush1.msra.mxu0 0.0
    %3080 = vmatprep.subr.mxu0 0.0
    %3081 = vmatpush1.msra.mxu0 0.0
    %3082 = vmatprep.subr.mxu0 0.0
    %3083 = vmatpush1.msra.mxu0 0.0
    %3084 = vmatprep.subr.mxu0 0.0
    %3085 = vmatpush1.msra.mxu0 0.0
    %3086 = vmatprep.subr.mxu0 0.0
    %3087 = vmatpush1.msra.mxu0 0.0
    %3088 = vmatprep.subr.mxu0 0.0
    %3089 = vmatpush1.msra.mxu0 0.0
    %3090 = vmatprep.subr.mxu0 0.0
    %3091 = vmatpush1.msra.mxu0 0.0
    %3092 = vmatprep.subr.mxu0 0.0
    %3093 = vmatpush1.msra.mxu0 0.0
    %3094 = vmatprep.subr.mxu0 0.0
    %3095 = vmatpush1.msra.mxu0 0.0
    %3096 = vmatprep.subr.mxu0 0.0
    %3097 = vmatpush1.msra.mxu0 0.0
    %3098 = vmatprep.subr.mxu0 0.0
    %3099 = vmatpush1.msra.mxu0 0.0
    %3100 = vmatprep.subr.mxu0 0.0
    %3101 = vmatpush1.msra.mxu0 0.0
    %3102 = vmatprep.subr.mxu0 0.0
    %3103 = vmatpush1.msra.mxu0 0.0
    %3104 = vmatprep.mubr.f32.mxu0 0.0
    %3105 = vmatmul.mubr.f32.gmra.mrb[0].mxu0 %v3035
    %v3106 = vpop.f32.mrb[0].mxu0
    %v3107 = vadd.f32 %v3032, %v3106
    %v3108 = vpop.f32.mrb[0].mxu0
    %3109 = vmatprep.mubr.f32.mxu0 0.0
    %3110 = vmatmul.mubr.f32.gmra.mrb[0].mxu0 %v3038
    %v3111 = vpop.f32.mrb[0].mxu0
    %v3112 = vadd.f32 %v3032, %v3111
    %v3113 = vpop.f32.mrb[0].mxu0
    %3114 = vdwg.mxu0
    %v3115 = vmax.f32 %v3107, 0.0
    %v3116 = vmax.f32 %v3112, 0.0
    %v3117 = vld [vmem:[%s8] sm:$0xff]
    %v3118 = vld [vmem:[%s8 + $0x8] sm:$0xff]
    %v3119 = vld [vmem:[%s8 + $0x10] sm:$0xff]
    %v3120 = vld [vmem:[%s8 + $0x18] sm:$0xff]
    %v3121 = vld [vmem:[%s8 + $0x20] sm:$0xff]
    %v3122 = vld [vmem:[%s8 + $0x28] sm:$0xff]
    %v3123 = vld [vmem:[%s8 + $0x30] sm:$0xff]
    %v3124 = vld [vmem:[%s8 + $0x38] sm:$0xff]
    %v3125 = vlaneseq
    %v3126 = vshrl.u32 %v3125, 7
    %v3127 = vsub.s32 1, %v3126
    %v3128 = vrot.slane %v106, %v3127
    %vm3129 = vcmask 523264
    %v3131 = vsel %vm3129, %v3115, 0
    %v3134 = vsel %vm3129, %v3116, 0
    %3136 = vmatprep.subr.mxu0 0.0
    %3137 = vmatpush1.msra.mxu0 %v3117
    %3138 = vmatprep.subr.mxu0 0.0
    %3139 = vmatpush1.msra.mxu0 %v3118
    %3140 = vmatprep.subr.mxu0 0.0
    %3141 = vmatpush1.msra.mxu0 %v3119
    %3142 = vmatprep.subr.mxu0 0.0
    %3143 = vmatpush1.msra.mxu0 %v3120
    %3144 = vmatprep.subr.mxu0 0.0
    %3145 = vmatpush1.msra.mxu0 %v3121
    %3146 = vmatprep.subr.mxu0 0.0
    %3147 = vmatpush1.msra.mxu0 %v3122
    %3148 = vmatprep.subr.mxu0 0.0
    %3149 = vmatpush1.msra.mxu0 %v3123
    %3150 = vmatprep.subr.mxu0 0.0
    %3151 = vmatpush1.msra.mxu0 %v3124
    %3152 = vmatprep.subr.mxu0 0.0
    %3153 = vmatpush1.msra.mxu0 0.0
    %3154 = vmatprep.subr.mxu0 0.0
    %3155 = vmatpush1.msra.mxu0 0.0
    %3156 = vmatprep.subr.mxu0 0.0
    %3157 = vmatpush1.msra.mxu0 0.0
    %3158 = vmatprep.subr.mxu0 0.0
    %3159 = vmatpush1.msra.mxu0 0.0
    %3160 = vmatprep.subr.mxu0 0.0
    %3161 = vmatpush1.msra.mxu0 0.0
    %3162 = vmatprep.subr.mxu0 0.0
    %3163 = vmatpush1.msra.mxu0 0.0
    %3164 = vmatprep.subr.mxu0 0.0
    %3165 = vmatpush1.msra.mxu0 0.0
    %3166 = vmatprep.subr.mxu0 0.0
    %3167 = vmatpush1.msra.mxu0 0.0
    %3168 = vmatprep.subr.mxu0 0.0
    %3169 = vmatpush1.msra.mxu0 0.0
    %3170 = vmatprep.subr.mxu0 0.0
    %3171 = vmatpush1.msra.mxu0 0.0
    %3172 = vmatprep.subr.mxu0 0.0
    %3173 = vmatpush1.msra.mxu0 0.0
    %3174 = vmatprep.subr.mxu0 0.0
    %3175 = vmatpush1.msra.mxu0 0.0
    %3176 = vmatprep.subr.mxu0 0.0
    %3177 = vmatpush1.msra.mxu0 0.0
    %3178 = vmatprep.subr.mxu0 0.0
    %3179 = vmatpush1.msra.mxu0 0.0
    %3180 = vmatprep.subr.mxu0 0.0
    %3181 = vmatpush1.msra.mxu0 0.0
    %3182 = vmatprep.subr.mxu0 0.0
    %3183 = vmatpush1.msra.mxu0 0.0
    %3184 = vmatprep.subr.mxu0 0.0
    %3185 = vmatpush1.msra.mxu0 0.0
    %3186 = vmatprep.subr.mxu0 0.0
    %3187 = vmatpush1.msra.mxu0 0.0
    %3188 = vmatprep.subr.mxu0 0.0
    %3189 = vmatpush1.msra.mxu0 0.0
    %3190 = vmatprep.subr.mxu0 0.0
    %3191 = vmatpush1.msra.mxu0 0.0
    %3192 = vmatprep.subr.mxu0 0.0
    %3193 = vmatpush1.msra.mxu0 0.0
    %3194 = vmatprep.subr.mxu0 0.0
    %3195 = vmatpush1.msra.mxu0 0.0
    %3196 = vmatprep.subr.mxu0 0.0
    %3197 = vmatpush1.msra.mxu0 0.0
    %3198 = vmatprep.subr.mxu0 0.0
    %3199 = vmatpush1.msra.mxu0 0.0
    %3200 = vmatprep.mubr.f32.mxu0 0.0
    %3201 = vmatmul.mubr.f32.gmra.mrb[0].mxu0 %v3131
    %v3202 = vpop.f32.mrb[0].mxu0
    %v3203 = vadd.f32 %v3128, %v3202
    %v3204 = vpop.f32.mrb[0].mxu0
    %3205 = vmatprep.mubr.f32.mxu0 0.0
    %3206 = vmatmul.mubr.f32.gmra.mrb[0].mxu0 %v3134
    %v3207 = vpop.f32.mrb[0].mxu0
    %v3208 = vadd.f32 %v3128, %v3207
    %v3209 = vpop.f32.mrb[0].mxu0
    %3210 = vdwg.mxu0
    %v3211 = vadd.f32 %v3021, %v3203
    %v3212 = vadd.f32 %v3022, %v3208
    %v3213 = vsel %vm115, %v3211, 0.0
    %3214 = vadd.xlane.f32.xlu0 %v3213
    %v3215 = vpop.xlane.xlu0 %3214
    %v3216 = vsel %vm115, %v3212, 0.0
    %3217 = vadd.xlane.f32.xlu0 %v3216
    %v3218 = vpop.xlane.xlu0 %3217
    %v3219 = vmul.f32 %v3215, %v205
    %v3220 = vmul.f32 %v3218, %v205
    %v3221 = vsub.f32 %v3211, %v3219
    %v3222 = vsub.f32 %v3212, %v3220
    %v3223 = vmul.f32 %v3221, %v3221
    %v3224 = vmul.f32 %v3222, %v3222
    %v3225 = vsel %vm115, %v3223, 0.0
    %3226 = vadd.xlane.f32.xlu0 %v3225
    %v3227 = vpop.xlane.xlu0 %3226
    %v3228 = vsel %vm115, %v3224, 0.0
    %3229 = vadd.xlane.f32.xlu0 %v3228
    %v3230 = vpop.xlane.xlu0 %3229
    %v3231 = vmul.f32 %v3227, %v205
    %v3232 = vmul.f32 %v3230, %v205
    %v3233 = vadd.f32 %v3231, 1e-05
    %v3234 = vadd.f32 %v3232, 1e-05
    %v3235 = vrsqrt.pop %v3233
    %v3236 = vrsqrt.pop %v3234
    %v3237 = vmul.f32 %v3221, %v3235
    %v3238 = vmul.f32 %v3222, %v3236
    %v3239 = vlaneseq
    %v3240 = vshrl.u32 %v3239, 7
    %v3241 = vsub.s32 7, %v3240
    %v3242 = vrot.slane %v105, %v3241
    %v3243 = vmul.f32 %v3237, %v3242
    %v3244 = vmul.f32 %v3238, %v3242
    %v3245 = vlaneseq
    %v3246 = vshrl.u32 %v3245, 7
    %v3247 = vsub.s32 0, %v3246
    %v3248 = vrot.slane %v106, %v3247
    %v3249 = vadd.f32 %v3243, %v3248
    %v3250 = vadd.f32 %v3244, %v3248
    %3251 = vst.msk [vmem:[#allocation11] sm:$0xff] %vm115, %v3249
    %3252 = vst.msk [vmem:[#allocation11 + $0x8] sm:$0xff] %vm115, %v3250
    // Predicated region
    $region58: #{tpu_custom_call.1} parent=1 // pred_check
      _
    $region59: #{tpu_custom_call.1} parent=1 // pred_check_branch
      %3254 = sbr.rel (0) target = $region61
    $region60: #{tpu_custom_call.1} parent=1 // pred_region
      %s3256 = ssub.s32 256, 256
      %3257 = vsyncadd [#allocation4], %s3256
      %s3258 = sshll.u32 [#allocation11], 4
      %s3259 = int_to_ptr.vmem [resolvable:$true] %s3258
      %3264 = dma.vmem_to_hbm [thread:$0]  %s3259, 256, %s9, [#allocation4], 128, 128, 8
    $region61: #{tpu_custom_call.1} parent=1 // pred_fallthru
      _
    // Predicated region
    $region62: #{tpu_custom_call.1} parent=1 // pred_check
      _
    $region63: #{tpu_custom_call.1} parent=1 // pred_check_branch
      %3266 = sbr.rel (0) target = $region65
    $region64: #{tpu_custom_call.1} parent=1 // pred_region
      %3267 = dma.done [#allocation4], 256
    $region65: #{tpu_custom_call.1} parent=1 // pred_fallthru
      _
    %3268 = vsyncpa [#allocation3], 1
    %3269 = vsyncpa [#allocation6], 1
    %3270 = vsyncpa [#allocation9], 1
    %3271 = vsyncpa [#allocation4], 1

</llo_original>
